<compile_context>
chip_gen: v7x
topology: tpu7x:2x2x1
jax: 0.10.0
libtpu: 0.0.40
codegen_flags: <defaults>
</compile_context>

<pallas_src>
import math
import jax
import jax.numpy as jnp
from jax.experimental import pallas as pl
from jax.experimental.pallas import tpu as pltpu

# ---- model hyper-parameters (scaled down from CLFormer.py, structure identical) ----
BATCH_SIZE  = 2     # original: 32
N_SEQUENCE  = 8     # original: 256
D_MODEL     = 16    # original: 16
D_K = D_V   = 16    # original: 64
N_HEADS     = 4     # original: 5
D_FF        = 32    # original: 2048
N_LAYERS    = 2     # original: 3
HEAD_HIDDEN = 32    # original: 256  (linear1: n_sequence*d_model -> HEAD_HIDDEN)
NUM_CLASS   = 2
LN_EPS      = 1e-5  # torch nn.LayerNorm default

HK   = N_HEADS * D_K            # fused head width per projection
MISC = 6 * D_MODEL + D_FF       # packed bias/LN row width (== 128 here)
BF16 = jnp.bfloat16


# --------------------------- shared math (kernel + reference) ---------------------------

def _layer_norm(x, gamma, beta):
    mu = jnp.mean(x, axis=-1, keepdims=True)
    var = jnp.mean((x - mu) ** 2, axis=-1, keepdims=True)     # biased var (torch default)
    return (x - mu) * jax.lax.rsqrt(var + LN_EPS) * gamma + beta


def _unpack_misc(m):
    """m: (1, 6*D + D_FF) packed [b_o | ln1g | ln1b | ff1b | ff2b | ln2g | ln2b]."""
    D, F = D_MODEL, D_FF
    bo   = m[:, 0 * D:1 * D]
    ln1g = m[:, 1 * D:2 * D]
    ln1b = m[:, 2 * D:3 * D]
    ff1b = m[:, 3 * D:3 * D + F]
    ff2b = m[:, 3 * D + F:4 * D + F]
    ln2g = m[:, 4 * D + F:5 * D + F]
    ln2b = m[:, 5 * D + F:6 * D + F]
    return bo, ln1g, ln1b, ff1b, ff2b, ln2g, ln2b


def _forward(x3, convw, addpe, wqkv, bqkv, wo, ff1w, ff2w, misc, w1, w2, b2,
             *, approx_recip):
    """Full forward on (B, S, D) input.  Weight args may be Refs or arrays
    (only indexed with [...] / [static int]) so the same code serves as the
    in-kernel body and the plain-XLA numerical reference.  All matmul operands
    are bf16 (MXU single-pass), all accumulation / elementwise math is f32."""
    B, S, D, H = BATCH_SIZE, N_SEQUENCE, D_MODEL, N_HEADS
    inv_sqrt_dk = 1.0 / math.sqrt(D_K)

    x3 = x3.astype(jnp.float32)
    # Encoder.conv1d (k=1 over the seq/"channel" axis) as a batched (S,S)@(S,D)
    # matmul; Conv1d bias + positional encoding folded into one additive term.
    x3 = jnp.einsum('bst,btd->bsd', convw[...], x3.astype(BF16),
                    preferred_element_type=jnp.float32) + addpe[...]
    x = x3.reshape(B * S, D)                                  # free leading-dim merge

    # ---- encoder layer stack (static unroll over N_LAYERS) ----
    for li in range(N_LAYERS):
        bo, ln1g, ln1b, ff1b, ff2b, ln2g, ln2b = _unpack_misc(misc[li])

        # fused Q|K|V projection: one (B*S, D) @ (D, 3*H*dk) bf16 matmul
        qkv = jnp.dot(x.astype(BF16), wqkv[li],
                      preferred_element_type=jnp.float32) + bqkv[li]
        qkv3 = qkv.reshape(B, S, 3 * HK)                      # leading-dim split (free)

        # merge all heads into one batched attention: build (H*B, S, dk)
        # operands by stacking the per-head lane slices along the major axis
        # (cheap), then run ONE score einsum + ONE softmax + ONE attn@V einsum.
        q_m = jnp.concatenate(
            [qkv3[:, :, h * D_K:(h + 1) * D_K] for h in range(H)], axis=0)
        k_m = jnp.concatenate(
            [qkv3[:, :, HK + h * D_K:HK + (h + 1) * D_K] for h in range(H)], axis=0)
        v_m = jnp.concatenate(
            [qkv3[:, :, 2 * HK + h * D_V:2 * HK + (h + 1) * D_V] for h in range(H)], axis=0)

        sc = jnp.einsum('xsd,xtd->xst', q_m.astype(BF16), k_m.astype(BF16),
                        preferred_element_type=jnp.float32) * inv_sqrt_dk
        sc = sc - jnp.max(sc, axis=-1, keepdims=True)
        p = jnp.exp(sc)
        denom = jnp.sum(p, axis=-1, keepdims=True)
        if approx_recip:
            # EUP reciprocal: ~1e-3 relative error in attention weights (inference OK)
            attn = p * pl.reciprocal(denom, approx=True)
        else:
            attn = p / denom
        ctx_m = jnp.einsum('xst,xtd->xsd', attn.astype(BF16), v_m.astype(BF16),
                           preferred_element_type=jnp.float32)        # (H*B, S, dv)
        # back to (B*S, H*dv): lane index = h*dv + d (matches torch context layout)
        ctx = jnp.concatenate([ctx_m[h * B:(h + 1) * B] for h in range(H)],
                              axis=-1).reshape(B * S, H * D_V)

        mha = jnp.dot(ctx.astype(BF16), wo[li],
                      preferred_element_type=jnp.float32) + bo
        y = _layer_norm(mha + x, ln1g, ln1b)                  # residual + LayerNorm (f32)

        # position-wise feed-forward (Conv1d k=1 == per-token matmul over d_model)
        h1 = jnp.maximum(jnp.dot(y.astype(BF16), ff1w[li],
                                 preferred_element_type=jnp.float32) + ff1b, 0.0)
        z = jnp.dot(h1.astype(BF16), ff2w[li],
                    preferred_element_type=jnp.float32) + ff2b
        x = _layer_norm(z + y, ln2g, ln2b)

    # ---- classification head: reshape(B, S*D) -> linear1 -> ReLU -> linear2 ----
    # Flatten to (B, S*D) with S sublane-row slices + one lane concat (proven ops),
    # then a single (B, S*D) @ (S*D, HID) matmul replaces the per-position loop.
    xh = x.reshape(B, S, D)
    xflat = jnp.concatenate([xh[:, s, :] for s in range(S)], axis=-1)  # col = s*D + d
    hdn = jnp.maximum(jnp.dot(xflat.astype(BF16), w1[...],
                              preferred_element_type=jnp.float32), 0.0)
    return jnp.dot(hdn.astype(BF16), w2[...],
                   preferred_element_type=jnp.float32) + b2[...]


# --------------------------- Pallas kernel & wrapper ---------------------------

def transformer_kernel(x_ref, convw_ref, addpe_ref, wqkv_ref, bqkv_ref, wo_ref,
                       ff1w_ref, ff2w_ref, misc_ref, w1_ref, w2_ref, b2_ref, o_ref):
    out = _forward(x_ref[...], convw_ref, addpe_ref, wqkv_ref, bqkv_ref, wo_ref,
                   ff1w_ref, ff2w_ref, misc_ref, w1_ref, w2_ref, b2_ref,
                   approx_recip=True)
    o_ref[...] = out.astype(o_ref.dtype)


def _kernel_cost():
    B, S, D, H, F = BATCH_SIZE, N_SEQUENCE, D_MODEL, N_HEADS, D_FF
    BS = B * S
    flops = 2 * B * S * S * D                                # conv1d-as-matmul
    per_layer = (2 * BS * D * (3 * HK)                       # fused QKV projection
                 + 2 * (B * H) * S * S * D_K * 2             # scores + attn@V
                 + 2 * BS * HK * D                           # output projection
                 + 2 * BS * D * F * 2)                       # FFN conv1 + conv2
    flops += N_LAYERS * per_layer
    flops += 2 * B * (S * D) * HEAD_HIDDEN + 2 * B * HEAD_HIDDEN * NUM_CLASS
    transcend = N_LAYERS * (B * H * S * S + 2 * BS)          # exp + rsqrt per layer
    return int(flops), int(transcend)


def transformer_forward(enc_inputs, p):
    args = (enc_inputs, p["convw"], p["addpe"], p["wqkv"], p["bqkv"], p["wo"],
            p["ff1w"], p["ff2w"], p["misc"], p["w1"], p["w2"], p["b2"])
    out_shape = jax.ShapeDtypeStruct((BATCH_SIZE, NUM_CLASS), jnp.float32)
    flops, transcend = _kernel_cost()
    bytes_accessed = sum(int(a.size) * a.dtype.itemsize for a in args) \
        + math.prod(out_shape.shape) * 4
    vmem_spec = pl.BlockSpec(memory_space=pltpu.MemorySpace.VMEM)
    # Single gridless invocation: the entire working set (a few KB) is VMEM-resident.
    # TODO(synk): add a "parallel" batch grid axis for v7x's 2nd TensorCore once
    # batch grows beyond toy size (moot at B=2).
    return pl.pallas_call(
        transformer_kernel,
        out_shape=out_shape,
        in_specs=[vmem_spec] * len(args),
        out_specs=vmem_spec,
        cost_estimate=pl.CostEstimate(flops=flops, transcendentals=transcend,
                                      bytes_accessed=bytes_accessed),
    )(*args)


# --------------------------- parameter construction ---------------------------

def make_positional_encoding(S, D):
    d = D + (D % 2)                                     # torch: if d_model odd, pad
    pos = jnp.arange(S, dtype=jnp.float32)[:, None]
    div = jnp.exp(jnp.arange(0, d, 2, dtype=jnp.float32) * (-math.log(10000.0) / d))
    pe = jnp.zeros((S, d), dtype=jnp.float32)
    pe = pe.at[:, 0::2].set(jnp.sin(pos * div))
    pe = pe.at[:, 1::2].set(jnp.cos(pos * div))
    return pe[:, :D]


def init_packed_params(key):
    def nrm(k, shape, scale=0.1):
        return scale * jax.random.normal(k, shape, dtype=jnp.float32)

    keys = jax.random.split(key, 8 + N_LAYERS)
    conv_w = nrm(keys[0], (N_SEQUENCE, N_SEQUENCE))     # Conv1d(S,S,1) weight, squeezed
    conv_b = nrm(keys[1], (N_SEQUENCE, 1))
    pe = make_positional_encoding(N_SEQUENCE, D_MODEL)

    wqkv, bqkv, wo, ff1w, ff2w, misc = [], [], [], [], [], []
    for li in range(N_LAYERS):
        lk = jax.random.split(keys[2 + li], 12)
        wq = nrm(lk[0], (D_MODEL, HK)); bq = nrm(lk[1], (1, HK))
        wk = nrm(lk[2], (D_MODEL, HK)); bk = nrm(lk[3], (1, HK))
        wv = nrm(lk[4], (D_MODEL, HK)); bv = nrm(lk[5], (1, HK))
        w_o = nrm(lk[6], (HK, D_MODEL)); b_o = nrm(lk[7], (1, D_MODEL))
        ln1g = jnp.ones((1, D_MODEL), jnp.float32); ln1b = jnp.zeros((1, D_MODEL), jnp.float32)
        f1w = nrm(lk[8], (D_MODEL, D_FF)); f1b = nrm(lk[9], (1, D_FF))
        f2w = nrm(lk[10], (D_FF, D_MODEL)); f2b = nrm(lk[11], (1, D_MODEL))
        ln2g = jnp.ones((1, D_MODEL), jnp.float32); ln2b = jnp.zeros((1, D_MODEL), jnp.float32)

        wqkv.append(jnp.concatenate([wq, wk, wv], axis=1))          # (D, 3*H*dk)
        bqkv.append(jnp.concatenate([bq, bk, bv], axis=1))          # (1, 3*H*dk)
        wo.append(w_o)
        ff1w.append(f1w)
        ff2w.append(f2w)
        misc.append(jnp.concatenate([b_o, ln1g, ln1b, f1b, f2b, ln2g, ln2b], axis=1))  # (1, 128)

    packed = {
        # batched (per-batch-replicated) k=1 conv weight: 'bst,btd->bsd' scales as
        # O(B*S^2*D) instead of the old block-diagonal O((B*S)^2) matmul.
        "convw": jnp.tile(conv_w[None, :, :], (BATCH_SIZE, 1, 1)).astype(BF16),
        # Conv1d bias (broadcast over d_model) + positional encoding, per batch row.
        "addpe": jnp.tile((conv_b + pe)[None, :, :], (BATCH_SIZE, 1, 1)),
        # matmul weights stored bf16 (single-pass MXU); biases / LN params stay f32
        "wqkv": jnp.stack(wqkv).astype(BF16),   # (L, D, 3*H*dk)
        "bqkv": jnp.stack(bqkv),                # (L, 1, 3*H*dk) f32
        "wo":   jnp.stack(wo).astype(BF16),     # (L, H*dv, D)
        "ff1w": jnp.stack(ff1w).astype(BF16),   # (L, D, d_ff)
        "ff2w": jnp.stack(ff2w).astype(BF16),   # (L, d_ff, D)
        "misc": jnp.stack(misc),                # (L, 1, 128) f32
        # linear1 (no bias), flat (S*D, HID): row index = s*D + d (torch reshape order)
        "w1": nrm(keys[2 + N_LAYERS], (N_SEQUENCE * D_MODEL, HEAD_HIDDEN)).astype(BF16),
        "w2": nrm(keys[3 + N_LAYERS], (HEAD_HIDDEN, NUM_CLASS)).astype(BF16),
        "b2": nrm(keys[4 + N_LAYERS], (1, NUM_CLASS)),
    }
    return packed


# --------------------------- main ---------------------------

if __name__ == "__main__":
    key = jax.random.PRNGKey(0)
    k_in, k_par = jax.random.split(key)
    enc_inputs = jax.random.normal(k_in, (BATCH_SIZE, N_SEQUENCE, D_MODEL), dtype=jnp.float32)
    packed = init_packed_params(k_par)

    out = transformer_forward(enc_inputs, packed)
    out = jax.block_until_ready(out)
    assert out.shape == (BATCH_SIZE, NUM_CLASS)
    assert bool(jnp.all(jnp.isfinite(out)))

    # cross-check against the identical math in plain XLA (exact softmax divide)
    ref = _forward(enc_inputs,
                   packed["convw"], packed["addpe"], packed["wqkv"], packed["bqkv"],
                   packed["wo"], packed["ff1w"], packed["ff2w"], packed["misc"],
                   packed["w1"], packed["w2"], packed["b2"], approx_recip=False)
    ref = jax.block_until_ready(ref)
    assert bool(jnp.allclose(out, ref, atol=1e-2, rtol=1e-2))

    print("KERNEL_OK")
</pallas_src>

<mosaic_0001>
module attributes {stable_mosaic.version = 11 : i64} {
  func.func @transformer_kernel(%arg0: memref<2x8x16xf32, #tpu.memory_space<vmem>>, %arg1: memref<2x8x8xbf16, #tpu.memory_space<vmem>>, %arg2: memref<2x8x16xf32, #tpu.memory_space<vmem>>, %arg3: memref<2x16x192xbf16, #tpu.memory_space<vmem>>, %arg4: memref<2x1x192xf32, #tpu.memory_space<vmem>>, %arg5: memref<2x64x16xbf16, #tpu.memory_space<vmem>>, %arg6: memref<2x16x32xbf16, #tpu.memory_space<vmem>>, %arg7: memref<2x32x16xbf16, #tpu.memory_space<vmem>>, %arg8: memref<2x1x128xf32, #tpu.memory_space<vmem>>, %arg9: memref<128x32xbf16, #tpu.memory_space<vmem>>, %arg10: memref<32x2xbf16, #tpu.memory_space<vmem>>, %arg11: memref<1x2xf32, #tpu.memory_space<vmem>>, %arg12: memref<2x2xf32, #tpu.memory_space<vmem>>) attributes {dimension_semantics = [], scalar_prefetch = 0 : i64, scratch_operands = 0 : i64, tpu.core_type = #tpu.core_type<tc>} {
    %c0 = arith.constant 0 : index
    %c0_0 = arith.constant 0 : index
    %c0_1 = arith.constant 0 : index
    %0 = vector.load %arg0[%c0, %c0_0, %c0_1] : memref<2x8x16xf32, #tpu.memory_space<vmem>>, vector<2x8x16xf32>
    %c0_2 = arith.constant 0 : index
    %c0_3 = arith.constant 0 : index
    %c0_4 = arith.constant 0 : index
    %1 = vector.load %arg1[%c0_2, %c0_3, %c0_4] : memref<2x8x8xbf16, #tpu.memory_space<vmem>>, vector<2x8x8xbf16>
    %2 = arith.truncf %0 : vector<2x8x16xf32> to vector<2x8x16xbf16>
    "tpu.trace_start"() <{level = 10 : i32, message = "bst,btd->bsd"}> : () -> ()
    %cst = arith.constant dense<0.000000e+00> : vector<2x8x16xf32>
    %3 = tpu.matmul %1, %2, %cst {dimension_numbers = #tpu.dot_dimension_numbers<[2], [1], [1], [2], [0, 0, 0, 1, 1, 2], [0], [0]>} : vector<2x8x8xbf16>, vector<2x8x16xbf16>, vector<2x8x16xf32> -> vector<2x8x16xf32>
    "tpu.trace_stop"() : () -> ()
    %c0_5 = arith.constant 0 : index
    %c0_6 = arith.constant 0 : index
    %c0_7 = arith.constant 0 : index
    %4 = vector.load %arg2[%c0_5, %c0_6, %c0_7] : memref<2x8x16xf32, #tpu.memory_space<vmem>>, vector<2x8x16xf32>
    %5 = arith.addf %3, %4 : vector<2x8x16xf32>
    %6 = vector.shape_cast %5 : vector<2x8x16xf32> to vector<16x16xf32>
    %c0_8 = arith.constant 0 : index
    %c0_9 = arith.constant 0 : index
    %c0_10 = arith.constant 0 : index
    %7 = vector.load %arg8[%c0_8, %c0_9, %c0_10] : memref<2x1x128xf32, #tpu.memory_space<vmem>>, vector<1x1x128xf32>
    %8 = vector.shape_cast %7 : vector<1x1x128xf32> to vector<1x128xf32>
    %9 = vector.extract_strided_slice %8 {offsets = [0, 0], sizes = [1, 16], strides = [1, 1]} : vector<1x128xf32> to vector<1x16xf32>
    %10 = vector.extract_strided_slice %8 {offsets = [0, 16], sizes = [1, 16], strides = [1, 1]} : vector<1x128xf32> to vector<1x16xf32>
    %11 = vector.extract_strided_slice %8 {offsets = [0, 32], sizes = [1, 16], strides = [1, 1]} : vector<1x128xf32> to vector<1x16xf32>
    %12 = vector.extract_strided_slice %8 {offsets = [0, 48], sizes = [1, 32], strides = [1, 1]} : vector<1x128xf32> to vector<1x32xf32>
    %13 = vector.extract_strided_slice %8 {offsets = [0, 80], sizes = [1, 16], strides = [1, 1]} : vector<1x128xf32> to vector<1x16xf32>
    %14 = vector.extract_strided_slice %8 {offsets = [0, 96], sizes = [1, 16], strides = [1, 1]} : vector<1x128xf32> to vector<1x16xf32>
    %15 = vector.extract_strided_slice %8 {offsets = [0, 112], sizes = [1, 16], strides = [1, 1]} : vector<1x128xf32> to vector<1x16xf32>
    %16 = arith.truncf %6 : vector<16x16xf32> to vector<16x16xbf16>
    %c0_11 = arith.constant 0 : index
    %c0_12 = arith.constant 0 : index
    %c0_13 = arith.constant 0 : index
    %17 = vector.load %arg3[%c0_11, %c0_12, %c0_13] : memref<2x16x192xbf16, #tpu.memory_space<vmem>>, vector<1x16x192xbf16>
    %18 = vector.shape_cast %17 : vector<1x16x192xbf16> to vector<16x192xbf16>
    %cst_14 = arith.constant dense<0.000000e+00> : vector<16x192xf32>
    %19 = tpu.matmul %16, %18, %cst_14 {dimension_numbers = #tpu.dot_dimension_numbers<[1], [0], [0], [1], [0, 0, 1, 1], [], []>} : vector<16x16xbf16>, vector<16x192xbf16>, vector<16x192xf32> -> vector<16x192xf32>
    %c0_15 = arith.constant 0 : index
    %c0_16 = arith.constant 0 : index
    %c0_17 = arith.constant 0 : index
    %20 = vector.load %arg4[%c0_15, %c0_16, %c0_17] : memref<2x1x192xf32, #tpu.memory_space<vmem>>, vector<1x1x192xf32>
    %21 = vector.shape_cast %20 : vector<1x1x192xf32> to vector<1x192xf32>
    %22 = vector.broadcast %21 : vector<1x192xf32> to vector<16x192xf32>
    %23 = arith.addf %19, %22 : vector<16x192xf32>
    %24 = vector.shape_cast %23 : vector<16x192xf32> to vector<2x8x192xf32>
    %25 = vector.extract_strided_slice %24 {offsets = [0, 0, 0], sizes = [2, 8, 16], strides = [1, 1, 1]} : vector<2x8x192xf32> to vector<2x8x16xf32>
    %26 = vector.extract_strided_slice %24 {offsets = [0, 0, 16], sizes = [2, 8, 16], strides = [1, 1, 1]} : vector<2x8x192xf32> to vector<2x8x16xf32>
    %27 = vector.extract_strided_slice %24 {offsets = [0, 0, 32], sizes = [2, 8, 16], strides = [1, 1, 1]} : vector<2x8x192xf32> to vector<2x8x16xf32>
    %28 = vector.extract_strided_slice %24 {offsets = [0, 0, 48], sizes = [2, 8, 16], strides = [1, 1, 1]} : vector<2x8x192xf32> to vector<2x8x16xf32>
    %29 = tpu.concatenate %25, %26, %27, %28 in 0 : vector<2x8x16xf32>, vector<2x8x16xf32>, vector<2x8x16xf32>, vector<2x8x16xf32> -> vector<8x8x16xf32>
    %30 = vector.extract_strided_slice %24 {offsets = [0, 0, 64], sizes = [2, 8, 16], strides = [1, 1, 1]} : vector<2x8x192xf32> to vector<2x8x16xf32>
    %31 = vector.extract_strided_slice %24 {offsets = [0, 0, 80], sizes = [2, 8, 16], strides = [1, 1, 1]} : vector<2x8x192xf32> to vector<2x8x16xf32>
    %32 = vector.extract_strided_slice %24 {offsets = [0, 0, 96], sizes = [2, 8, 16], strides = [1, 1, 1]} : vector<2x8x192xf32> to vector<2x8x16xf32>
    %33 = vector.extract_strided_slice %24 {offsets = [0, 0, 112], sizes = [2, 8, 16], strides = [1, 1, 1]} : vector<2x8x192xf32> to vector<2x8x16xf32>
    %34 = tpu.concatenate %30, %31, %32, %33 in 0 : vector<2x8x16xf32>, vector<2x8x16xf32>, vector<2x8x16xf32>, vector<2x8x16xf32> -> vector<8x8x16xf32>
    %35 = vector.extract_strided_slice %24 {offsets = [0, 0, 128], sizes = [2, 8, 16], strides = [1, 1, 1]} : vector<2x8x192xf32> to vector<2x8x16xf32>
    %36 = vector.extract_strided_slice %24 {offsets = [0, 0, 144], sizes = [2, 8, 16], strides = [1, 1, 1]} : vector<2x8x192xf32> to vector<2x8x16xf32>
    %37 = vector.extract_strided_slice %24 {offsets = [0, 0, 160], sizes = [2, 8, 16], strides = [1, 1, 1]} : vector<2x8x192xf32> to vector<2x8x16xf32>
    %38 = vector.extract_strided_slice %24 {offsets = [0, 0, 176], sizes = [2, 8, 16], strides = [1, 1, 1]} : vector<2x8x192xf32> to vector<2x8x16xf32>
    %39 = tpu.concatenate %35, %36, %37, %38 in 0 : vector<2x8x16xf32>, vector<2x8x16xf32>, vector<2x8x16xf32>, vector<2x8x16xf32> -> vector<8x8x16xf32>
    %40 = arith.truncf %29 : vector<8x8x16xf32> to vector<8x8x16xbf16>
    %41 = arith.truncf %34 : vector<8x8x16xf32> to vector<8x8x16xbf16>
    "tpu.trace_start"() <{level = 10 : i32, message = "xsd,xtd->xst"}> : () -> ()
    %cst_18 = arith.constant dense<0.000000e+00> : vector<8x8x8xf32>
    %42 = tpu.matmul %40, %41, %cst_18 {dimension_numbers = #tpu.dot_dimension_numbers<[2], [2], [1], [1], [0, 0, 0, 1, 1, 1], [0], [0]>} : vector<8x8x16xbf16>, vector<8x8x16xbf16>, vector<8x8x8xf32> -> vector<8x8x8xf32>
    "tpu.trace_stop"() : () -> ()
    %cst_19 = arith.constant 2.500000e-01 : f32
    %43 = vector.broadcast %cst_19 : f32 to vector<8x8x8xf32>
    %44 = arith.mulf %42, %43 : vector<8x8x8xf32>
    %cst_20 = arith.constant dense<0xFF800000> : vector<8x8xf32>
    %45 = vector.multi_reduction <maximumf>, %44, %cst_20 [2] : vector<8x8x8xf32> to vector<8x8xf32>
    %46 = vector.shape_cast %45 : vector<8x8xf32> to vector<8x8x1xf32>
    %47 = vector.broadcast %46 : vector<8x8x1xf32> to vector<8x8x8xf32>
    %48 = arith.subf %44, %47 : vector<8x8x8xf32>
    %49 = math.exp %48 : vector<8x8x8xf32>
    %cst_21 = arith.constant dense<0.000000e+00> : vector<8x8xf32>
    %50 = vector.multi_reduction <add>, %49, %cst_21 [2] : vector<8x8x8xf32> to vector<8x8xf32>
    %51 = vector.shape_cast %50 : vector<8x8xf32> to vector<8x8x1xf32>
    %52 = tpu.reciprocal %51 {approx = true} : vector<8x8x1xf32> -> vector<8x8x1xf32>
    %53 = vector.broadcast %52 : vector<8x8x1xf32> to vector<8x8x8xf32>
    %54 = arith.mulf %49, %53 : vector<8x8x8xf32>
    %55 = arith.truncf %54 : vector<8x8x8xf32> to vector<8x8x8xbf16>
    %56 = arith.truncf %39 : vector<8x8x16xf32> to vector<8x8x16xbf16>
    "tpu.trace_start"() <{level = 10 : i32, message = "xst,xtd->xsd"}> : () -> ()
    %cst_22 = arith.constant dense<0.000000e+00> : vector<8x8x16xf32>
    %57 = tpu.matmul %55, %56, %cst_22 {dimension_numbers = #tpu.dot_dimension_numbers<[2], [1], [1], [2], [0, 0, 0, 1, 1, 2], [0], [0]>} : vector<8x8x8xbf16>, vector<8x8x16xbf16>, vector<8x8x16xf32> -> vector<8x8x16xf32>
    "tpu.trace_stop"() : () -> ()
    %58 = vector.extract_strided_slice %57 {offsets = [0, 0, 0], sizes = [2, 8, 16], strides = [1, 1, 1]} : vector<8x8x16xf32> to vector<2x8x16xf32>
    %59 = vector.extract_strided_slice %57 {offsets = [2, 0, 0], sizes = [2, 8, 16], strides = [1, 1, 1]} : vector<8x8x16xf32> to vector<2x8x16xf32>
    %60 = vector.extract_strided_slice %57 {offsets = [4, 0, 0], sizes = [2, 8, 16], strides = [1, 1, 1]} : vector<8x8x16xf32> to vector<2x8x16xf32>
    %61 = vector.extract_strided_slice %57 {offsets = [6, 0, 0], sizes = [2, 8, 16], strides = [1, 1, 1]} : vector<8x8x16xf32> to vector<2x8x16xf32>
    %62 = tpu.concatenate %58, %59, %60, %61 in 2 : vector<2x8x16xf32>, vector<2x8x16xf32>, vector<2x8x16xf32>, vector<2x8x16xf32> -> vector<2x8x64xf32>
    %63 = vector.shape_cast %62 : vector<2x8x64xf32> to vector<16x64xf32>
    %64 = arith.truncf %63 : vector<16x64xf32> to vector<16x64xbf16>
    %c0_23 = arith.constant 0 : index
    %c0_24 = arith.constant 0 : index
    %c0_25 = arith.constant 0 : index
    %65 = vector.load %arg5[%c0_23, %c0_24, %c0_25] : memref<2x64x16xbf16, #tpu.memory_space<vmem>>, vector<1x64x16xbf16>
    %66 = vector.shape_cast %65 : vector<1x64x16xbf16> to vector<64x16xbf16>
    %cst_26 = arith.constant dense<0.000000e+00> : vector<16x16xf32>
    %67 = tpu.matmul %64, %66, %cst_26 {dimension_numbers = #tpu.dot_dimension_numbers<[1], [0], [0], [1], [0, 0, 1, 1], [], []>} : vector<16x64xbf16>, vector<64x16xbf16>, vector<16x16xf32> -> vector<16x16xf32>
    %68 = vector.broadcast %9 : vector<1x16xf32> to vector<16x16xf32>
    %69 = arith.addf %67, %68 : vector<16x16xf32>
    %70 = arith.addf %69, %6 : vector<16x16xf32>
    %cst_27 = arith.constant dense<0.000000e+00> : vector<16xf32>
    %71 = vector.multi_reduction <add>, %70, %cst_27 [1] : vector<16x16xf32> to vector<16xf32>
    %72 = vector.shape_cast %71 : vector<16xf32> to vector<16x1xf32>
    %cst_28 = arith.constant 1.600000e+01 : f32
    %73 = vector.broadcast %cst_28 : f32 to vector<16x1xf32>
    %74 = arith.divf %72, %73 : vector<16x1xf32>
    %75 = vector.broadcast %74 : vector<16x1xf32> to vector<16x16xf32>
    %76 = arith.subf %70, %75 : vector<16x16xf32>
    %77 = arith.mulf %76, %76 : vector<16x16xf32>
    %cst_29 = arith.constant dense<0.000000e+00> : vector<16xf32>
    %78 = vector.multi_reduction <add>, %77, %cst_29 [1] : vector<16x16xf32> to vector<16xf32>
    %79 = vector.shape_cast %78 : vector<16xf32> to vector<16x1xf32>
    %cst_30 = arith.constant 1.600000e+01 : f32
    %80 = vector.broadcast %cst_30 : f32 to vector<16x1xf32>
    %81 = arith.divf %79, %80 : vector<16x1xf32>
    %82 = vector.broadcast %74 : vector<16x1xf32> to vector<16x16xf32>
    %83 = arith.subf %70, %82 : vector<16x16xf32>
    %cst_31 = arith.constant 9.99999974E-6 : f32
    %84 = vector.broadcast %cst_31 : f32 to vector<16x1xf32>
    %85 = arith.addf %81, %84 : vector<16x1xf32>
    %86 = math.rsqrt %85 : vector<16x1xf32>
    %87 = vector.broadcast %86 : vector<16x1xf32> to vector<16x16xf32>
    %88 = arith.mulf %83, %87 : vector<16x16xf32>
    %89 = vector.broadcast %10 : vector<1x16xf32> to vector<16x16xf32>
    %90 = arith.mulf %88, %89 : vector<16x16xf32>
    %91 = vector.broadcast %11 : vector<1x16xf32> to vector<16x16xf32>
    %92 = arith.addf %90, %91 : vector<16x16xf32>
    %93 = arith.truncf %92 : vector<16x16xf32> to vector<16x16xbf16>
    %c0_32 = arith.constant 0 : index
    %c0_33 = arith.constant 0 : index
    %c0_34 = arith.constant 0 : index
    %94 = vector.load %arg6[%c0_32, %c0_33, %c0_34] : memref<2x16x32xbf16, #tpu.memory_space<vmem>>, vector<1x16x32xbf16>
    %95 = vector.shape_cast %94 : vector<1x16x32xbf16> to vector<16x32xbf16>
    %cst_35 = arith.constant dense<0.000000e+00> : vector<16x32xf32>
    %96 = tpu.matmul %93, %95, %cst_35 {dimension_numbers = #tpu.dot_dimension_numbers<[1], [0], [0], [1], [0, 0, 1, 1], [], []>} : vector<16x16xbf16>, vector<16x32xbf16>, vector<16x32xf32> -> vector<16x32xf32>
    %97 = vector.broadcast %12 : vector<1x32xf32> to vector<16x32xf32>
    %98 = arith.addf %96, %97 : vector<16x32xf32>
    %cst_36 = arith.constant 0.000000e+00 : f32
    %99 = vector.broadcast %cst_36 : f32 to vector<16x32xf32>
    %100 = arith.maximumf %98, %99 : vector<16x32xf32>
    %101 = arith.truncf %100 : vector<16x32xf32> to vector<16x32xbf16>
    %c0_37 = arith.constant 0 : index
    %c0_38 = arith.constant 0 : index
    %c0_39 = arith.constant 0 : index
    %102 = vector.load %arg7[%c0_37, %c0_38, %c0_39] : memref<2x32x16xbf16, #tpu.memory_space<vmem>>, vector<1x32x16xbf16>
    %103 = vector.shape_cast %102 : vector<1x32x16xbf16> to vector<32x16xbf16>
    %cst_40 = arith.constant dense<0.000000e+00> : vector<16x16xf32>
    %104 = tpu.matmul %101, %103, %cst_40 {dimension_numbers = #tpu.dot_dimension_numbers<[1], [0], [0], [1], [0, 0, 1, 1], [], []>} : vector<16x32xbf16>, vector<32x16xbf16>, vector<16x16xf32> -> vector<16x16xf32>
    %105 = vector.broadcast %13 : vector<1x16xf32> to vector<16x16xf32>
    %106 = arith.addf %104, %105 : vector<16x16xf32>
    %107 = arith.addf %106, %92 : vector<16x16xf32>
    %cst_41 = arith.constant dense<0.000000e+00> : vector<16xf32>
    %108 = vector.multi_reduction <add>, %107, %cst_41 [1] : vector<16x16xf32> to vector<16xf32>
    %109 = vector.shape_cast %108 : vector<16xf32> to vector<16x1xf32>
    %cst_42 = arith.constant 1.600000e+01 : f32
    %110 = vector.broadcast %cst_42 : f32 to vector<16x1xf32>
    %111 = arith.divf %109, %110 : vector<16x1xf32>
    %112 = vector.broadcast %111 : vector<16x1xf32> to vector<16x16xf32>
    %113 = arith.subf %107, %112 : vector<16x16xf32>
    %114 = arith.mulf %113, %113 : vector<16x16xf32>
    %cst_43 = arith.constant dense<0.000000e+00> : vector<16xf32>
    %115 = vector.multi_reduction <add>, %114, %cst_43 [1] : vector<16x16xf32> to vector<16xf32>
    %116 = vector.shape_cast %115 : vector<16xf32> to vector<16x1xf32>
    %cst_44 = arith.constant 1.600000e+01 : f32
    %117 = vector.broadcast %cst_44 : f32 to vector<16x1xf32>
    %118 = arith.divf %116, %117 : vector<16x1xf32>
    %119 = vector.broadcast %111 : vector<16x1xf32> to vector<16x16xf32>
    %120 = arith.subf %107, %119 : vector<16x16xf32>
    %cst_45 = arith.constant 9.99999974E-6 : f32
    %121 = vector.broadcast %cst_45 : f32 to vector<16x1xf32>
    %122 = arith.addf %118, %121 : vector<16x1xf32>
    %123 = math.rsqrt %122 : vector<16x1xf32>
    %124 = vector.broadcast %123 : vector<16x1xf32> to vector<16x16xf32>
    %125 = arith.mulf %120, %124 : vector<16x16xf32>
    %126 = vector.broadcast %14 : vector<1x16xf32> to vector<16x16xf32>
    %127 = arith.mulf %125, %126 : vector<16x16xf32>
    %128 = vector.broadcast %15 : vector<1x16xf32> to vector<16x16xf32>
    %129 = arith.addf %127, %128 : vector<16x16xf32>
    %c1 = arith.constant 1 : index
    %c0_46 = arith.constant 0 : index
    %c0_47 = arith.constant 0 : index
    %130 = vector.load %arg8[%c1, %c0_46, %c0_47] : memref<2x1x128xf32, #tpu.memory_space<vmem>>, vector<1x1x128xf32>
    %131 = vector.shape_cast %130 : vector<1x1x128xf32> to vector<1x128xf32>
    %132 = vector.extract_strided_slice %131 {offsets = [0, 0], sizes = [1, 16], strides = [1, 1]} : vector<1x128xf32> to vector<1x16xf32>
    %133 = vector.extract_strided_slice %131 {offsets = [0, 16], sizes = [1, 16], strides = [1, 1]} : vector<1x128xf32> to vector<1x16xf32>
    %134 = vector.extract_strided_slice %131 {offsets = [0, 32], sizes = [1, 16], strides = [1, 1]} : vector<1x128xf32> to vector<1x16xf32>
    %135 = vector.extract_strided_slice %131 {offsets = [0, 48], sizes = [1, 32], strides = [1, 1]} : vector<1x128xf32> to vector<1x32xf32>
    %136 = vector.extract_strided_slice %131 {offsets = [0, 80], sizes = [1, 16], strides = [1, 1]} : vector<1x128xf32> to vector<1x16xf32>
    %137 = vector.extract_strided_slice %131 {offsets = [0, 96], sizes = [1, 16], strides = [1, 1]} : vector<1x128xf32> to vector<1x16xf32>
    %138 = vector.extract_strided_slice %131 {offsets = [0, 112], sizes = [1, 16], strides = [1, 1]} : vector<1x128xf32> to vector<1x16xf32>
    %139 = arith.truncf %129 : vector<16x16xf32> to vector<16x16xbf16>
    %c1_48 = arith.constant 1 : index
    %c0_49 = arith.constant 0 : index
    %c0_50 = arith.constant 0 : index
    %140 = vector.load %arg3[%c1_48, %c0_49, %c0_50] : memref<2x16x192xbf16, #tpu.memory_space<vmem>>, vector<1x16x192xbf16>
    %141 = vector.shape_cast %140 : vector<1x16x192xbf16> to vector<16x192xbf16>
    %cst_51 = arith.constant dense<0.000000e+00> : vector<16x192xf32>
    %142 = tpu.matmul %139, %141, %cst_51 {dimension_numbers = #tpu.dot_dimension_numbers<[1], [0], [0], [1], [0, 0, 1, 1], [], []>} : vector<16x16xbf16>, vector<16x192xbf16>, vector<16x192xf32> -> vector<16x192xf32>
    %c1_52 = arith.constant 1 : index
    %c0_53 = arith.constant 0 : index
    %c0_54 = arith.constant 0 : index
    %143 = vector.load %arg4[%c1_52, %c0_53, %c0_54] : memref<2x1x192xf32, #tpu.memory_space<vmem>>, vector<1x1x192xf32>
    %144 = vector.shape_cast %143 : vector<1x1x192xf32> to vector<1x192xf32>
    %145 = vector.broadcast %144 : vector<1x192xf32> to vector<16x192xf32>
    %146 = arith.addf %142, %145 : vector<16x192xf32>
    %147 = vector.shape_cast %146 : vector<16x192xf32> to vector<2x8x192xf32>
    %148 = vector.extract_strided_slice %147 {offsets = [0, 0, 0], sizes = [2, 8, 16], strides = [1, 1, 1]} : vector<2x8x192xf32> to vector<2x8x16xf32>
    %149 = vector.extract_strided_slice %147 {offsets = [0, 0, 16], sizes = [2, 8, 16], strides = [1, 1, 1]} : vector<2x8x192xf32> to vector<2x8x16xf32>
    %150 = vector.extract_strided_slice %147 {offsets = [0, 0, 32], sizes = [2, 8, 16], strides = [1, 1, 1]} : vector<2x8x192xf32> to vector<2x8x16xf32>
    %151 = vector.extract_strided_slice %147 {offsets = [0, 0, 48], sizes = [2, 8, 16], strides = [1, 1, 1]} : vector<2x8x192xf32> to vector<2x8x16xf32>
    %152 = tpu.concatenate %148, %149, %150, %151 in 0 : vector<2x8x16xf32>, vector<2x8x16xf32>, vector<2x8x16xf32>, vector<2x8x16xf32> -> vector<8x8x16xf32>
    %153 = vector.extract_strided_slice %147 {offsets = [0, 0, 64], sizes = [2, 8, 16], strides = [1, 1, 1]} : vector<2x8x192xf32> to vector<2x8x16xf32>
    %154 = vector.extract_strided_slice %147 {offsets = [0, 0, 80], sizes = [2, 8, 16], strides = [1, 1, 1]} : vector<2x8x192xf32> to vector<2x8x16xf32>
    %155 = vector.extract_strided_slice %147 {offsets = [0, 0, 96], sizes = [2, 8, 16], strides = [1, 1, 1]} : vector<2x8x192xf32> to vector<2x8x16xf32>
    %156 = vector.extract_strided_slice %147 {offsets = [0, 0, 112], sizes = [2, 8, 16], strides = [1, 1, 1]} : vector<2x8x192xf32> to vector<2x8x16xf32>
    %157 = tpu.concatenate %153, %154, %155, %156 in 0 : vector<2x8x16xf32>, vector<2x8x16xf32>, vector<2x8x16xf32>, vector<2x8x16xf32> -> vector<8x8x16xf32>
    %158 = vector.extract_strided_slice %147 {offsets = [0, 0, 128], sizes = [2, 8, 16], strides = [1, 1, 1]} : vector<2x8x192xf32> to vector<2x8x16xf32>
    %159 = vector.extract_strided_slice %147 {offsets = [0, 0, 144], sizes = [2, 8, 16], strides = [1, 1, 1]} : vector<2x8x192xf32> to vector<2x8x16xf32>
    %160 = vector.extract_strided_slice %147 {offsets = [0, 0, 160], sizes = [2, 8, 16], strides = [1, 1, 1]} : vector<2x8x192xf32> to vector<2x8x16xf32>
    %161 = vector.extract_strided_slice %147 {offsets = [0, 0, 176], sizes = [2, 8, 16], strides = [1, 1, 1]} : vector<2x8x192xf32> to vector<2x8x16xf32>
    %162 = tpu.concatenate %158, %159, %160, %161 in 0 : vector<2x8x16xf32>, vector<2x8x16xf32>, vector<2x8x16xf32>, vector<2x8x16xf32> -> vector<8x8x16xf32>
    %163 = arith.truncf %152 : vector<8x8x16xf32> to vector<8x8x16xbf16>
    %164 = arith.truncf %157 : vector<8x8x16xf32> to vector<8x8x16xbf16>
    "tpu.trace_start"() <{level = 10 : i32, message = "xsd,xtd->xst"}> : () -> ()
    %cst_55 = arith.constant dense<0.000000e+00> : vector<8x8x8xf32>
    %165 = tpu.matmul %163, %164, %cst_55 {dimension_numbers = #tpu.dot_dimension_numbers<[2], [2], [1], [1], [0, 0, 0, 1, 1, 1], [0], [0]>} : vector<8x8x16xbf16>, vector<8x8x16xbf16>, vector<8x8x8xf32> -> vector<8x8x8xf32>
    "tpu.trace_stop"() : () -> ()
    %cst_56 = arith.constant 2.500000e-01 : f32
    %166 = vector.broadcast %cst_56 : f32 to vector<8x8x8xf32>
    %167 = arith.mulf %165, %166 : vector<8x8x8xf32>
    %cst_57 = arith.constant dense<0xFF800000> : vector<8x8xf32>
    %168 = vector.multi_reduction <maximumf>, %167, %cst_57 [2] : vector<8x8x8xf32> to vector<8x8xf32>
    %169 = vector.shape_cast %168 : vector<8x8xf32> to vector<8x8x1xf32>
    %170 = vector.broadcast %169 : vector<8x8x1xf32> to vector<8x8x8xf32>
    %171 = arith.subf %167, %170 : vector<8x8x8xf32>
    %172 = math.exp %171 : vector<8x8x8xf32>
    %cst_58 = arith.constant dense<0.000000e+00> : vector<8x8xf32>
    %173 = vector.multi_reduction <add>, %172, %cst_58 [2] : vector<8x8x8xf32> to vector<8x8xf32>
    %174 = vector.shape_cast %173 : vector<8x8xf32> to vector<8x8x1xf32>
    %175 = tpu.reciprocal %174 {approx = true} : vector<8x8x1xf32> -> vector<8x8x1xf32>
    %176 = vector.broadcast %175 : vector<8x8x1xf32> to vector<8x8x8xf32>
    %177 = arith.mulf %172, %176 : vector<8x8x8xf32>
    %178 = arith.truncf %177 : vector<8x8x8xf32> to vector<8x8x8xbf16>
    %179 = arith.truncf %162 : vector<8x8x16xf32> to vector<8x8x16xbf16>
    "tpu.trace_start"() <{level = 10 : i32, message = "xst,xtd->xsd"}> : () -> ()
    %cst_59 = arith.constant dense<0.000000e+00> : vector<8x8x16xf32>
    %180 = tpu.matmul %178, %179, %cst_59 {dimension_numbers = #tpu.dot_dimension_numbers<[2], [1], [1], [2], [0, 0, 0, 1, 1, 2], [0], [0]>} : vector<8x8x8xbf16>, vector<8x8x16xbf16>, vector<8x8x16xf32> -> vector<8x8x16xf32>
    "tpu.trace_stop"() : () -> ()
    %181 = vector.extract_strided_slice %180 {offsets = [0, 0, 0], sizes = [2, 8, 16], strides = [1, 1, 1]} : vector<8x8x16xf32> to vector<2x8x16xf32>
    %182 = vector.extract_strided_slice %180 {offsets = [2, 0, 0], sizes = [2, 8, 16], strides = [1, 1, 1]} : vector<8x8x16xf32> to vector<2x8x16xf32>
    %183 = vector.extract_strided_slice %180 {offsets = [4, 0, 0], sizes = [2, 8, 16], strides = [1, 1, 1]} : vector<8x8x16xf32> to vector<2x8x16xf32>
    %184 = vector.extract_strided_slice %180 {offsets = [6, 0, 0], sizes = [2, 8, 16], strides = [1, 1, 1]} : vector<8x8x16xf32> to vector<2x8x16xf32>
    %185 = tpu.concatenate %181, %182, %183, %184 in 2 : vector<2x8x16xf32>, vector<2x8x16xf32>, vector<2x8x16xf32>, vector<2x8x16xf32> -> vector<2x8x64xf32>
    %186 = vector.shape_cast %185 : vector<2x8x64xf32> to vector<16x64xf32>
    %187 = arith.truncf %186 : vector<16x64xf32> to vector<16x64xbf16>
    %c1_60 = arith.constant 1 : index
    %c0_61 = arith.constant 0 : index
    %c0_62 = arith.constant 0 : index
    %188 = vector.load %arg5[%c1_60, %c0_61, %c0_62] : memref<2x64x16xbf16, #tpu.memory_space<vmem>>, vector<1x64x16xbf16>
    %189 = vector.shape_cast %188 : vector<1x64x16xbf16> to vector<64x16xbf16>
    %cst_63 = arith.constant dense<0.000000e+00> : vector<16x16xf32>
    %190 = tpu.matmul %187, %189, %cst_63 {dimension_numbers = #tpu.dot_dimension_numbers<[1], [0], [0], [1], [0, 0, 1, 1], [], []>} : vector<16x64xbf16>, vector<64x16xbf16>, vector<16x16xf32> -> vector<16x16xf32>
    %191 = vector.broadcast %132 : vector<1x16xf32> to vector<16x16xf32>
    %192 = arith.addf %190, %191 : vector<16x16xf32>
    %193 = arith.addf %192, %129 : vector<16x16xf32>
    %cst_64 = arith.constant dense<0.000000e+00> : vector<16xf32>
    %194 = vector.multi_reduction <add>, %193, %cst_64 [1] : vector<16x16xf32> to vector<16xf32>
    %195 = vector.shape_cast %194 : vector<16xf32> to vector<16x1xf32>
    %cst_65 = arith.constant 1.600000e+01 : f32
    %196 = vector.broadcast %cst_65 : f32 to vector<16x1xf32>
    %197 = arith.divf %195, %196 : vector<16x1xf32>
    %198 = vector.broadcast %197 : vector<16x1xf32> to vector<16x16xf32>
    %199 = arith.subf %193, %198 : vector<16x16xf32>
    %200 = arith.mulf %199, %199 : vector<16x16xf32>
    %cst_66 = arith.constant dense<0.000000e+00> : vector<16xf32>
    %201 = vector.multi_reduction <add>, %200, %cst_66 [1] : vector<16x16xf32> to vector<16xf32>
    %202 = vector.shape_cast %201 : vector<16xf32> to vector<16x1xf32>
    %cst_67 = arith.constant 1.600000e+01 : f32
    %203 = vector.broadcast %cst_67 : f32 to vector<16x1xf32>
    %204 = arith.divf %202, %203 : vector<16x1xf32>
    %205 = vector.broadcast %197 : vector<16x1xf32> to vector<16x16xf32>
    %206 = arith.subf %193, %205 : vector<16x16xf32>
    %cst_68 = arith.constant 9.99999974E-6 : f32
    %207 = vector.broadcast %cst_68 : f32 to vector<16x1xf32>
    %208 = arith.addf %204, %207 : vector<16x1xf32>
    %209 = math.rsqrt %208 : vector<16x1xf32>
    %210 = vector.broadcast %209 : vector<16x1xf32> to vector<16x16xf32>
    %211 = arith.mulf %206, %210 : vector<16x16xf32>
    %212 = vector.broadcast %133 : vector<1x16xf32> to vector<16x16xf32>
    %213 = arith.mulf %211, %212 : vector<16x16xf32>
    %214 = vector.broadcast %134 : vector<1x16xf32> to vector<16x16xf32>
    %215 = arith.addf %213, %214 : vector<16x16xf32>
    %216 = arith.truncf %215 : vector<16x16xf32> to vector<16x16xbf16>
    %c1_69 = arith.constant 1 : index
    %c0_70 = arith.constant 0 : index
    %c0_71 = arith.constant 0 : index
    %217 = vector.load %arg6[%c1_69, %c0_70, %c0_71] : memref<2x16x32xbf16, #tpu.memory_space<vmem>>, vector<1x16x32xbf16>
    %218 = vector.shape_cast %217 : vector<1x16x32xbf16> to vector<16x32xbf16>
    %cst_72 = arith.constant dense<0.000000e+00> : vector<16x32xf32>
    %219 = tpu.matmul %216, %218, %cst_72 {dimension_numbers = #tpu.dot_dimension_numbers<[1], [0], [0], [1], [0, 0, 1, 1], [], []>} : vector<16x16xbf16>, vector<16x32xbf16>, vector<16x32xf32> -> vector<16x32xf32>
    %220 = vector.broadcast %135 : vector<1x32xf32> to vector<16x32xf32>
    %221 = arith.addf %219, %220 : vector<16x32xf32>
    %cst_73 = arith.constant 0.000000e+00 : f32
    %222 = vector.broadcast %cst_73 : f32 to vector<16x32xf32>
    %223 = arith.maximumf %221, %222 : vector<16x32xf32>
    %224 = arith.truncf %223 : vector<16x32xf32> to vector<16x32xbf16>
    %c1_74 = arith.constant 1 : index
    %c0_75 = arith.constant 0 : index
    %c0_76 = arith.constant 0 : index
    %225 = vector.load %arg7[%c1_74, %c0_75, %c0_76] : memref<2x32x16xbf16, #tpu.memory_space<vmem>>, vector<1x32x16xbf16>
    %226 = vector.shape_cast %225 : vector<1x32x16xbf16> to vector<32x16xbf16>
    %cst_77 = arith.constant dense<0.000000e+00> : vector<16x16xf32>
    %227 = tpu.matmul %224, %226, %cst_77 {dimension_numbers = #tpu.dot_dimension_numbers<[1], [0], [0], [1], [0, 0, 1, 1], [], []>} : vector<16x32xbf16>, vector<32x16xbf16>, vector<16x16xf32> -> vector<16x16xf32>
    %228 = vector.broadcast %136 : vector<1x16xf32> to vector<16x16xf32>
    %229 = arith.addf %227, %228 : vector<16x16xf32>
    %230 = arith.addf %229, %215 : vector<16x16xf32>
    %cst_78 = arith.constant dense<0.000000e+00> : vector<16xf32>
    %231 = vector.multi_reduction <add>, %230, %cst_78 [1] : vector<16x16xf32> to vector<16xf32>
    %232 = vector.shape_cast %231 : vector<16xf32> to vector<16x1xf32>
    %cst_79 = arith.constant 1.600000e+01 : f32
    %233 = vector.broadcast %cst_79 : f32 to vector<16x1xf32>
    %234 = arith.divf %232, %233 : vector<16x1xf32>
    %235 = vector.broadcast %234 : vector<16x1xf32> to vector<16x16xf32>
    %236 = arith.subf %230, %235 : vector<16x16xf32>
    %237 = arith.mulf %236, %236 : vector<16x16xf32>
    %cst_80 = arith.constant dense<0.000000e+00> : vector<16xf32>
    %238 = vector.multi_reduction <add>, %237, %cst_80 [1] : vector<16x16xf32> to vector<16xf32>
    %239 = vector.shape_cast %238 : vector<16xf32> to vector<16x1xf32>
    %cst_81 = arith.constant 1.600000e+01 : f32
    %240 = vector.broadcast %cst_81 : f32 to vector<16x1xf32>
    %241 = arith.divf %239, %240 : vector<16x1xf32>
    %242 = vector.broadcast %234 : vector<16x1xf32> to vector<16x16xf32>
    %243 = arith.subf %230, %242 : vector<16x16xf32>
    %cst_82 = arith.constant 9.99999974E-6 : f32
    %244 = vector.broadcast %cst_82 : f32 to vector<16x1xf32>
    %245 = arith.addf %241, %244 : vector<16x1xf32>
    %246 = math.rsqrt %245 : vector<16x1xf32>
    %247 = vector.broadcast %246 : vector<16x1xf32> to vector<16x16xf32>
    %248 = arith.mulf %243, %247 : vector<16x16xf32>
    %249 = vector.broadcast %137 : vector<1x16xf32> to vector<16x16xf32>
    %250 = arith.mulf %248, %249 : vector<16x16xf32>
    %251 = vector.broadcast %138 : vector<1x16xf32> to vector<16x16xf32>
    %252 = arith.addf %250, %251 : vector<16x16xf32>
    %253 = vector.shape_cast %252 : vector<16x16xf32> to vector<2x8x16xf32>
    %254 = vector.extract_strided_slice %253 {offsets = [0, 0, 0], sizes = [2, 1, 16], strides = [1, 1, 1]} : vector<2x8x16xf32> to vector<2x1x16xf32>
    %255 = vector.shape_cast %254 : vector<2x1x16xf32> to vector<2x16xf32>
    %256 = vector.extract_strided_slice %253 {offsets = [0, 1, 0], sizes = [2, 1, 16], strides = [1, 1, 1]} : vector<2x8x16xf32> to vector<2x1x16xf32>
    %257 = vector.shape_cast %256 : vector<2x1x16xf32> to vector<2x16xf32>
    %258 = vector.extract_strided_slice %253 {offsets = [0, 2, 0], sizes = [2, 1, 16], strides = [1, 1, 1]} : vector<2x8x16xf32> to vector<2x1x16xf32>
    %259 = vector.shape_cast %258 : vector<2x1x16xf32> to vector<2x16xf32>
    %260 = vector.extract_strided_slice %253 {offsets = [0, 3, 0], sizes = [2, 1, 16], strides = [1, 1, 1]} : vector<2x8x16xf32> to vector<2x1x16xf32>
    %261 = vector.shape_cast %260 : vector<2x1x16xf32> to vector<2x16xf32>
    %262 = vector.extract_strided_slice %253 {offsets = [0, 4, 0], sizes = [2, 1, 16], strides = [1, 1, 1]} : vector<2x8x16xf32> to vector<2x1x16xf32>
    %263 = vector.shape_cast %262 : vector<2x1x16xf32> to vector<2x16xf32>
    %264 = vector.extract_strided_slice %253 {offsets = [0, 5, 0], sizes = [2, 1, 16], strides = [1, 1, 1]} : vector<2x8x16xf32> to vector<2x1x16xf32>
    %265 = vector.shape_cast %264 : vector<2x1x16xf32> to vector<2x16xf32>
    %266 = vector.extract_strided_slice %253 {offsets = [0, 6, 0], sizes = [2, 1, 16], strides = [1, 1, 1]} : vector<2x8x16xf32> to vector<2x1x16xf32>
    %267 = vector.shape_cast %266 : vector<2x1x16xf32> to vector<2x16xf32>
    %268 = vector.extract_strided_slice %253 {offsets = [0, 7, 0], sizes = [2, 1, 16], strides = [1, 1, 1]} : vector<2x8x16xf32> to vector<2x1x16xf32>
    %269 = vector.shape_cast %268 : vector<2x1x16xf32> to vector<2x16xf32>
    %270 = tpu.concatenate %255, %257, %259, %261, %263, %265, %267, %269 in 1 : vector<2x16xf32>, vector<2x16xf32>, vector<2x16xf32>, vector<2x16xf32>, vector<2x16xf32>, vector<2x16xf32>, vector<2x16xf32>, vector<2x16xf32> -> vector<2x128xf32>
    %271 = arith.truncf %270 : vector<2x128xf32> to vector<2x128xbf16>
    %c0_83 = arith.constant 0 : index
    %c0_84 = arith.constant 0 : index
    %272 = vector.load %arg9[%c0_83, %c0_84] : memref<128x32xbf16, #tpu.memory_space<vmem>>, vector<128x32xbf16>
    %cst_85 = arith.constant dense<0.000000e+00> : vector<2x32xf32>
    %273 = tpu.matmul %271, %272, %cst_85 {dimension_numbers = #tpu.dot_dimension_numbers<[1], [0], [0], [1], [0, 0, 1, 1], [], []>} : vector<2x128xbf16>, vector<128x32xbf16>, vector<2x32xf32> -> vector<2x32xf32>
    %cst_86 = arith.constant 0.000000e+00 : f32
    %274 = vector.broadcast %cst_86 : f32 to vector<2x32xf32>
    %275 = arith.maximumf %273, %274 : vector<2x32xf32>
    %276 = arith.truncf %275 : vector<2x32xf32> to vector<2x32xbf16>
    %c0_87 = arith.constant 0 : index
    %c0_88 = arith.constant 0 : index
    %277 = vector.load %arg10[%c0_87, %c0_88] : memref<32x2xbf16, #tpu.memory_space<vmem>>, vector<32x2xbf16>
    %cst_89 = arith.constant dense<0.000000e+00> : vector<2x2xf32>
    %278 = tpu.matmul %276, %277, %cst_89 {dimension_numbers = #tpu.dot_dimension_numbers<[1], [0], [0], [1], [0, 0, 1, 1], [], []>} : vector<2x32xbf16>, vector<32x2xbf16>, vector<2x2xf32> -> vector<2x2xf32>
    %c0_90 = arith.constant 0 : index
    %c0_91 = arith.constant 0 : index
    %279 = vector.load %arg11[%c0_90, %c0_91] : memref<1x2xf32, #tpu.memory_space<vmem>>, vector<1x2xf32>
    %280 = vector.broadcast %279 : vector<1x2xf32> to vector<2x2xf32>
    %281 = arith.addf %278, %280 : vector<2x2xf32>
    %c0_92 = arith.constant 0 : index
    %c0_93 = arith.constant 0 : index
    %282 = vector.load %arg12[%c0_92, %c0_93] : memref<2x2xf32, #tpu.memory_space<vmem>>, vector<2x2xf32>
    tpu.vector_store %arg12[%c0_92, %c0_93], %281 {strides = array<i32>} : memref<2x2xf32, #tpu.memory_space<vmem>>, vector<2x2xf32>,
    return
  }
}

</mosaic_0001>

<llo_original>
// kernel: tpu_custom_call.1
$region0: #{tpu_custom_call.1}
  #allocation0 [shape = 'u32[]', space=smem, size = 0x4, offset = 0x4, fixed_abs, tag = 'smem constant byte address 0x4 - core index']
  #allocation1 [shape = 'u32[144,128]{1,0:T(1,128)}', space=vmem, size = 0x12000, scoped, tag = 'internal scratch']
  %s0 = inlined_call_operand.vmem [shape: f32[2,8,16], index: 0, kind: input, shape index: {}]
  %s1 = inlined_call_operand.vmem [shape: bf16[2,8,8], index: 1, kind: input, shape index: {}]
  %s2 = inlined_call_operand.vmem [shape: f32[2,8,16], index: 2, kind: input, shape index: {}]
  %s3 = inlined_call_operand.vmem [shape: bf16[2,16,192], index: 3, kind: input, shape index: {}]
  %s4 = inlined_call_operand.vmem [shape: f32[2,1,192], index: 4, kind: input, shape index: {}]
  %s5 = inlined_call_operand.vmem [shape: bf16[2,64,16], index: 5, kind: input, shape index: {}]
  %s6 = inlined_call_operand.vmem [shape: bf16[2,16,32], index: 6, kind: input, shape index: {}]
  %s7 = inlined_call_operand.vmem [shape: bf16[2,32,16], index: 7, kind: input, shape index: {}]
  %s8 = inlined_call_operand.vmem [shape: f32[2,1,128], index: 8, kind: input, shape index: {}]
  %s9 = inlined_call_operand.vmem [shape: bf16[128,32], index: 9, kind: input, shape index: {}]
  %s10 = inlined_call_operand.vmem [shape: bf16[32,2], index: 10, kind: input, shape index: {}]
  %s11 = inlined_call_operand.vmem [shape: f32[1,2], index: 11, kind: input, shape index: {}]
  %s12 = inlined_call_operand.hbm [shape: f32[2,2], index: 12, kind: output, shape index: {}]
  %s13 = sld [smem:[#allocation0]]
  $region58: #{tpu_custom_call.1} parent=0
    _
  %s15 = ssub.s32 1, %s13
  %s16 = scalar_select 0, %s15, %s13
  $region1: #{tpu_custom_call.1} parent=0
    #allocation2 [shape = 'u8[1024]{0}', space=vmem, size = 0x400, scoped, tag = 'output window, operand 0, single buffered']
    #allocation3 [shape = 's32[1]{0}', space=sflag, size = 0x4, scoped, tag = 'scoped memory for tpu_custom_call.1']
    %17 = vsyncpa [#allocation3], 0
    // Predicated region
    $region2: #{tpu_custom_call.1} parent=1 // pred_check
      _
    $region3: #{tpu_custom_call.1} parent=1 // pred_check_branch
      %19 = sbr.rel (0) target = $region5
    $region4: #{tpu_custom_call.1} parent=1 // pred_region
      _
    $region5: #{tpu_custom_call.1} parent=1 // pred_fallthru
      _
    // Predicated region
    $region6: #{tpu_custom_call.1} parent=1 // pred_check
      _
    $region7: #{tpu_custom_call.1} parent=1 // pred_check_branch
      %21 = sbr.rel (0) target = $region9
    $region8: #{tpu_custom_call.1} parent=1 // pred_region
      _
    $region9: #{tpu_custom_call.1} parent=1 // pred_fallthru
      _
    // Predicated region
    $region10: #{tpu_custom_call.1} parent=1 // pred_check
      _
    $region11: #{tpu_custom_call.1} parent=1 // pred_check_branch
      %23 = sbr.rel (0) target = $region13
    $region12: #{tpu_custom_call.1} parent=1 // pred_region
      _
    $region13: #{tpu_custom_call.1} parent=1 // pred_fallthru
      _
    // Predicated region
    $region14: #{tpu_custom_call.1} parent=1 // pred_check
      _
    $region15: #{tpu_custom_call.1} parent=1 // pred_check_branch
      %25 = sbr.rel (0) target = $region17
    $region16: #{tpu_custom_call.1} parent=1 // pred_region
      _
    $region17: #{tpu_custom_call.1} parent=1 // pred_fallthru
      _
    // Predicated region
    $region18: #{tpu_custom_call.1} parent=1 // pred_check
      _
    $region19: #{tpu_custom_call.1} parent=1 // pred_check_branch
      %27 = sbr.rel (0) target = $region21
    $region20: #{tpu_custom_call.1} parent=1 // pred_region
      _
    $region21: #{tpu_custom_call.1} parent=1 // pred_fallthru
      _
    // Predicated region
    $region22: #{tpu_custom_call.1} parent=1 // pred_check
      _
    $region23: #{tpu_custom_call.1} parent=1 // pred_check_branch
      %29 = sbr.rel (0) target = $region25
    $region24: #{tpu_custom_call.1} parent=1 // pred_region
      _
    $region25: #{tpu_custom_call.1} parent=1 // pred_fallthru
      _
    // Predicated region
    $region26: #{tpu_custom_call.1} parent=1 // pred_check
      _
    $region27: #{tpu_custom_call.1} parent=1 // pred_check_branch
      %31 = sbr.rel (0) target = $region29
    $region28: #{tpu_custom_call.1} parent=1 // pred_region
      _
    $region29: #{tpu_custom_call.1} parent=1 // pred_fallthru
      _
    // Predicated region
    $region30: #{tpu_custom_call.1} parent=1 // pred_check
      _
    $region31: #{tpu_custom_call.1} parent=1 // pred_check_branch
      %33 = sbr.rel (0) target = $region33
    $region32: #{tpu_custom_call.1} parent=1 // pred_region
      _
    $region33: #{tpu_custom_call.1} parent=1 // pred_fallthru
      _
    // Predicated region
    $region34: #{tpu_custom_call.1} parent=1 // pred_check
      _
    $region35: #{tpu_custom_call.1} parent=1 // pred_check_branch
      %35 = sbr.rel (0) target = $region37
    $region36: #{tpu_custom_call.1} parent=1 // pred_region
      _
    $region37: #{tpu_custom_call.1} parent=1 // pred_fallthru
      _
    // Predicated region
    $region38: #{tpu_custom_call.1} parent=1 // pred_check
      _
    $region39: #{tpu_custom_call.1} parent=1 // pred_check_branch
      %37 = sbr.rel (0) target = $region41
    $region40: #{tpu_custom_call.1} parent=1 // pred_region
      _
    $region41: #{tpu_custom_call.1} parent=1 // pred_fallthru
      _
    // Predicated region
    $region42: #{tpu_custom_call.1} parent=1 // pred_check
      _
    $region43: #{tpu_custom_call.1} parent=1 // pred_check_branch
      %39 = sbr.rel (0) target = $region45
    $region44: #{tpu_custom_call.1} parent=1 // pred_region
      _
    $region45: #{tpu_custom_call.1} parent=1 // pred_fallthru
      _
    // Predicated region
    $region46: #{tpu_custom_call.1} parent=1 // pred_check
      _
    $region47: #{tpu_custom_call.1} parent=1 // pred_check_branch
      %41 = sbr.rel (0) target = $region49
    $region48: #{tpu_custom_call.1} parent=1 // pred_region
      _
    $region49: #{tpu_custom_call.1} parent=1 // pred_fallthru
      _
    %v43 = vld [vmem:[%s0] sm:$0xff]
    %v44 = vld [vmem:[%s0 + $0x8] sm:$0xff]
    %v45 = vld [vmem:[%s1] sm:$0xf]
    %v46 = vld [vmem:[%s1 + $0x4] sm:$0xf]
    %v47 = vpack.c.bf16 %v43, %v43
    %v48 = vpack.c.bf16 %v44, %v44
    %v49 = vld [vmem:[%s2] sm:$0xff]
    %v50 = vld [vmem:[%s2 + $0x8] sm:$0xff]
    %vm51 = vcmask 64512
    %v53 = vsel %vm51, %v45, 0
    %vm55 = vcmask 1043456
    %v57 = vsel %vm55, %v47, 0
    %59 = vmatprep.subr.bf16.mxu0 0
    %60 = vmatpush1.bf16.msra.mxu0 %v57
    %61 = vmatprep.subr.bf16.mxu0 0
    %62 = vmatpush1.bf16.msra.mxu0 0
    %63 = vmatprep.subr.bf16.mxu0 0
    %64 = vmatpush1.bf16.msra.mxu0 0
    %65 = vmatprep.subr.bf16.mxu0 0
    %66 = vmatpush1.bf16.msra.mxu0 0
    %67 = vmatprep.subr.bf16.mxu0 0
    %68 = vmatpush1.bf16.msra.mxu0 0
    %69 = vmatprep.subr.bf16.mxu0 0
    %70 = vmatpush1.bf16.msra.mxu0 0
    %71 = vmatprep.subr.bf16.mxu0 0
    %72 = vmatpush1.bf16.msra.mxu0 0
    %73 = vmatprep.subr.bf16.mxu0 0
    %74 = vmatpush1.bf16.msra.mxu0 0
    %75 = vmatprep.subr.bf16.mxu0 0
    %76 = vmatpush1.bf16.msra.mxu0 0
    %77 = vmatprep.subr.bf16.mxu0 0
    %78 = vmatpush1.bf16.msra.mxu0 0
    %79 = vmatprep.subr.bf16.mxu0 0
    %80 = vmatpush1.bf16.msra.mxu0 0
    %81 = vmatprep.subr.bf16.mxu0 0
    %82 = vmatpush1.bf16.msra.mxu0 0
    %83 = vmatprep.subr.bf16.mxu0 0
    %84 = vmatpush1.bf16.msra.mxu0 0
    %85 = vmatprep.subr.bf16.mxu0 0
    %86 = vmatpush1.bf16.msra.mxu0 0
    %87 = vmatprep.subr.bf16.mxu0 0
    %88 = vmatpush1.bf16.msra.mxu0 0
    %89 = vmatprep.subr.bf16.mxu0 0
    %90 = vmatpush1.bf16.msra.mxu0 0
    %91 = vmatprep.mubr.bf16.mxu0 0
    %92 = vmatmul.mubr.bf16.gmra.mrb[0].mxu0 %v53
    %v93 = vpop.f32.mrb[0].mxu0
    %v94 = vadd.f32 %v49, %v93
    %v95 = vpop.f32.mrb[0].mxu0
    %v96 = vpop.f32.mrb[0].mxu0
    %v97 = vpop.f32.mrb[0].mxu0
    %98 = vdwg.mxu0
    %v100 = vsel %vm51, %v46, 0
    %v103 = vsel %vm55, %v48, 0
    %105 = vmatprep.subr.bf16.mxu0 0
    %106 = vmatpush1.bf16.msra.mxu0 %v103
    %107 = vmatprep.subr.bf16.mxu0 0
    %108 = vmatpush1.bf16.msra.mxu0 0
    %109 = vmatprep.subr.bf16.mxu0 0
    %110 = vmatpush1.bf16.msra.mxu0 0
    %111 = vmatprep.subr.bf16.mxu0 0
    %112 = vmatpush1.bf16.msra.mxu0 0
    %113 = vmatprep.subr.bf16.mxu0 0
    %114 = vmatpush1.bf16.msra.mxu0 0
    %115 = vmatprep.subr.bf16.mxu0 0
    %116 = vmatpush1.bf16.msra.mxu0 0
    %117 = vmatprep.subr.bf16.mxu0 0
    %118 = vmatpush1.bf16.msra.mxu0 0
    %119 = vmatprep.subr.bf16.mxu0 0
    %120 = vmatpush1.bf16.msra.mxu0 0
    %121 = vmatprep.subr.bf16.mxu0 0
    %122 = vmatpush1.bf16.msra.mxu0 0
    %123 = vmatprep.subr.bf16.mxu0 0
    %124 = vmatpush1.bf16.msra.mxu0 0
    %125 = vmatprep.subr.bf16.mxu0 0
    %126 = vmatpush1.bf16.msra.mxu0 0
    %127 = vmatprep.subr.bf16.mxu0 0
    %128 = vmatpush1.bf16.msra.mxu0 0
    %129 = vmatprep.subr.bf16.mxu0 0
    %130 = vmatpush1.bf16.msra.mxu0 0
    %131 = vmatprep.subr.bf16.mxu0 0
    %132 = vmatpush1.bf16.msra.mxu0 0
    %133 = vmatprep.subr.bf16.mxu0 0
    %134 = vmatpush1.bf16.msra.mxu0 0
    %135 = vmatprep.subr.bf16.mxu0 0
    %136 = vmatpush1.bf16.msra.mxu0 0
    %137 = vmatprep.mubr.bf16.mxu0 0
    %138 = vmatmul.mubr.bf16.gmra.mrb[0].mxu0 %v100
    %v139 = vpop.f32.mrb[0].mxu0
    %v140 = vadd.f32 %v50, %v139
    %v141 = vpop.f32.mrb[0].mxu0
    %v142 = vpop.f32.mrb[0].mxu0
    %v143 = vpop.f32.mrb[0].mxu0
    %144 = vdwg.mxu0
    %v145 = vld [vmem:[%s8] sm:$0x1]
    %v146 = vpack.c.bf16 %v140, %v94
    %v147 = vld [vmem:[%s3] sm:$0xff]
    %v148 = vld [vmem:[%s3 + $0x8] sm:$0xff]
    %v149 = vld [vmem:[%s4] sm:$0x3]
    %v151 = vlaneseq
    %v152 = vshrl.u32 %v151, 7
    %v153 = vsub.s32 0, %v152
    %v154 = vrot.slane %v149, %v153
    %v155 = vlaneseq
    %v156 = vshrl.u32 %v155, 7
    %v157 = vsub.s32 1, %v156
    %v158 = vrot.slane %v149, %v157
    %v163 = vunpack.c.l.b16 %v147
    %v164 = vunpack.c.h.b16 %v147
    %v165 = vunpack.c.l.b16 %v148
    %v166 = vunpack.c.h.b16 %v148
    %v167 = vpack.c.b16 %v165, %v163
    %v168 = vpack.c.b16 %v166, %v164
    %vm171 = vcmask 130048
    %v173 = vsel %vm171, %v146, 0
    %175 = vmatprep.subr.bf16.mxu0 %v168
    %176 = vmatpush1.bf16.msra.mxu0 %v167
    %177 = vmatprep.subr.bf16.mxu0 0
    %178 = vmatpush1.bf16.msra.mxu0 0
    %179 = vmatprep.subr.bf16.mxu0 0
    %180 = vmatpush1.bf16.msra.mxu0 0
    %181 = vmatprep.subr.bf16.mxu0 0
    %182 = vmatpush1.bf16.msra.mxu0 0
    %183 = vmatprep.subr.bf16.mxu0 0
    %184 = vmatpush1.bf16.msra.mxu0 0
    %185 = vmatprep.subr.bf16.mxu0 0
    %186 = vmatpush1.bf16.msra.mxu0 0
    %187 = vmatprep.subr.bf16.mxu0 0
    %188 = vmatpush1.bf16.msra.mxu0 0
    %189 = vmatprep.subr.bf16.mxu0 0
    %190 = vmatpush1.bf16.msra.mxu0 0
    %191 = vmatprep.subr.bf16.mxu0 0
    %192 = vmatpush1.bf16.msra.mxu0 0
    %193 = vmatprep.subr.bf16.mxu0 0
    %194 = vmatpush1.bf16.msra.mxu0 0
    %195 = vmatprep.subr.bf16.mxu0 0
    %196 = vmatpush1.bf16.msra.mxu0 0
    %197 = vmatprep.subr.bf16.mxu0 0
    %198 = vmatpush1.bf16.msra.mxu0 0
    %199 = vmatprep.subr.bf16.mxu0 0
    %200 = vmatpush1.bf16.msra.mxu0 0
    %201 = vmatprep.subr.bf16.mxu0 0
    %202 = vmatpush1.bf16.msra.mxu0 0
    %203 = vmatprep.subr.bf16.mxu0 0
    %204 = vmatpush1.bf16.msra.mxu0 0
    %205 = vmatprep.subr.bf16.mxu0 0
    %206 = vmatpush1.bf16.msra.mxu0 0
    %207 = vmatprep.mubr.bf16.mxu0 0
    %208 = vmatmul.mubr.bf16.gmra.mrb[0].mxu0 %v173
    %v209 = vpop.f32.mrb[0].mxu0
    %v210 = vadd.f32 %v154, %v209
    %v211 = vpop.f32.mrb[0].mxu0
    %v212 = vadd.f32 %v158, %v211
    %v213 = vpop.f32.mrb[0].mxu0
    %v214 = vadd.f32 %v154, %v213
    %v215 = vpop.f32.mrb[0].mxu0
    %v216 = vadd.f32 %v158, %v215
    %217 = vdwg.mxu0
    %220 = vrot.lane.b32.xlu0 %v210, 112
    %v221 = vpop.permute.xlu0 %220
    %222 = vrot.lane.b32.xlu0 %v214, 112
    %v223 = vpop.permute.xlu0 %222
    %226 = vrot.lane.b32.xlu0 %v210, 96
    %v227 = vpop.permute.xlu0 %226
    %228 = vrot.lane.b32.xlu0 %v214, 96
    %v229 = vpop.permute.xlu0 %228
    %232 = vrot.lane.b32.xlu0 %v210, 80
    %v233 = vpop.permute.xlu0 %232
    %234 = vrot.lane.b32.xlu0 %v214, 80
    %v235 = vpop.permute.xlu0 %234
    %240 = vrot.lane.b32.xlu0 %v212, 112
    %v241 = vpop.permute.xlu0 %240
    %242 = vrot.lane.b32.xlu0 %v216, 112
    %v243 = vpop.permute.xlu0 %242
    %246 = vrot.lane.b32.xlu0 %v212, 96
    %v247 = vpop.permute.xlu0 %246
    %248 = vrot.lane.b32.xlu0 %v216, 96
    %v249 = vpop.permute.xlu0 %248
    %252 = vrot.lane.b32.xlu0 %v212, 80
    %v253 = vpop.permute.xlu0 %252
    %254 = vrot.lane.b32.xlu0 %v216, 80
    %v255 = vpop.permute.xlu0 %254
    %v258 = vpack.c.bf16 %v210, %v210
    %v259 = vpack.c.bf16 %v214, %v214
    %v260 = vpack.c.bf16 %v221, %v221
    %v261 = vpack.c.bf16 %v223, %v223
    %v262 = vpack.c.bf16 %v227, %v227
    %v263 = vpack.c.bf16 %v229, %v229
    %v264 = vpack.c.bf16 %v233, %v233
    %v265 = vpack.c.bf16 %v235, %v235
    %267 = vrot.lane.b32.xlu0 %v258, 64
    %v268 = vpop.permute.xlu0 %267
    %v270 = vsel %vm171, %v258, 0
    %v273 = vsel %vm171, %v268, 0
    %275 = vmatprep.subr.bf16.mxu0 0
    %276 = vmatpush1.bf16.xpose.msra.mxu0 %v273
    %277 = vmatprep.subr.bf16.mxu0 0
    %278 = vmatpush1.bf16.xpose.msra.mxu0 0
    %279 = vmatprep.subr.bf16.mxu0 0
    %280 = vmatpush1.bf16.xpose.msra.mxu0 0
    %281 = vmatprep.subr.bf16.mxu0 0
    %282 = vmatpush1.bf16.xpose.msra.mxu0 0
    %283 = vmatprep.subr.bf16.mxu0 0
    %284 = vmatpush1.bf16.xpose.msra.mxu0 0
    %285 = vmatprep.subr.bf16.mxu0 0
    %286 = vmatpush1.bf16.xpose.msra.mxu0 0
    %287 = vmatprep.subr.bf16.mxu0 0
    %288 = vmatpush1.bf16.xpose.msra.mxu0 0
    %289 = vmatprep.subr.bf16.mxu0 0
    %290 = vmatpush1.bf16.xpose.msra.mxu0 0
    %291 = vmatprep.subr.bf16.mxu0 0
    %292 = vmatpush1.bf16.xpose.msra.mxu0 0
    %293 = vmatprep.subr.bf16.mxu0 0
    %294 = vmatpush1.bf16.xpose.msra.mxu0 0
    %295 = vmatprep.subr.bf16.mxu0 0
    %296 = vmatpush1.bf16.xpose.msra.mxu0 0
    %297 = vmatprep.subr.bf16.mxu0 0
    %298 = vmatpush1.bf16.xpose.msra.mxu0 0
    %299 = vmatprep.subr.bf16.mxu0 0
    %300 = vmatpush1.bf16.xpose.msra.mxu0 0
    %301 = vmatprep.subr.bf16.mxu0 0
    %302 = vmatpush1.bf16.xpose.msra.mxu0 0
    %303 = vmatprep.subr.bf16.mxu0 0
    %304 = vmatpush1.bf16.xpose.msra.mxu0 0
    %305 = vmatprep.subr.bf16.mxu0 0
    %306 = vmatpush1.bf16.xpose.msra.mxu0 0
    %307 = vmatprep.mubr.bf16.mxu0 0
    %308 = vmatmul.mubr.bf16.gmra.mrb[0].mxu0 %v270
    %v309 = vpop.f32.mrb[0].mxu0
    %v310 = vadd.f32 0.0, %v309
    %v311 = vpop.f32.mrb[0].mxu0
    %v312 = vpop.f32.mrb[0].mxu0
    %v313 = vpop.f32.mrb[0].mxu0
    %314 = vdwg.mxu0
    %316 = vrot.lane.b32.xlu0 %v259, 64
    %v317 = vpop.permute.xlu0 %316
    %v319 = vsel %vm171, %v259, 0
    %v322 = vsel %vm171, %v317, 0
    %324 = vmatprep.subr.bf16.mxu0 0
    %325 = vmatpush1.bf16.xpose.msra.mxu0 %v322
    %326 = vmatprep.subr.bf16.mxu0 0
    %327 = vmatpush1.bf16.xpose.msra.mxu0 0
    %328 = vmatprep.subr.bf16.mxu0 0
    %329 = vmatpush1.bf16.xpose.msra.mxu0 0
    %330 = vmatprep.subr.bf16.mxu0 0
    %331 = vmatpush1.bf16.xpose.msra.mxu0 0
    %332 = vmatprep.subr.bf16.mxu0 0
    %333 = vmatpush1.bf16.xpose.msra.mxu0 0
    %334 = vmatprep.subr.bf16.mxu0 0
    %335 = vmatpush1.bf16.xpose.msra.mxu0 0
    %336 = vmatprep.subr.bf16.mxu0 0
    %337 = vmatpush1.bf16.xpose.msra.mxu0 0
    %338 = vmatprep.subr.bf16.mxu0 0
    %339 = vmatpush1.bf16.xpose.msra.mxu0 0
    %340 = vmatprep.subr.bf16.mxu0 0
    %341 = vmatpush1.bf16.xpose.msra.mxu0 0
    %342 = vmatprep.subr.bf16.mxu0 0
    %343 = vmatpush1.bf16.xpose.msra.mxu0 0
    %344 = vmatprep.subr.bf16.mxu0 0
    %345 = vmatpush1.bf16.xpose.msra.mxu0 0
    %346 = vmatprep.subr.bf16.mxu0 0
    %347 = vmatpush1.bf16.xpose.msra.mxu0 0
    %348 = vmatprep.subr.bf16.mxu0 0
    %349 = vmatpush1.bf16.xpose.msra.mxu0 0
    %350 = vmatprep.subr.bf16.mxu0 0
    %351 = vmatpush1.bf16.xpose.msra.mxu0 0
    %352 = vmatprep.subr.bf16.mxu0 0
    %353 = vmatpush1.bf16.xpose.msra.mxu0 0
    %354 = vmatprep.subr.bf16.mxu0 0
    %355 = vmatpush1.bf16.xpose.msra.mxu0 0
    %356 = vmatprep.mubr.bf16.mxu0 0
    %357 = vmatmul.mubr.bf16.gmra.mrb[0].mxu0 %v319
    %v358 = vpop.f32.mrb[0].mxu0
    %v359 = vadd.f32 0.0, %v358
    %v360 = vpop.f32.mrb[0].mxu0
    %v361 = vpop.f32.mrb[0].mxu0
    %v362 = vpop.f32.mrb[0].mxu0
    %363 = vdwg.mxu0
    %365 = vrot.lane.b32.xlu0 %v260, 64
    %v366 = vpop.permute.xlu0 %365
    %v368 = vsel %vm171, %v260, 0
    %v371 = vsel %vm171, %v366, 0
    %373 = vmatprep.subr.bf16.mxu0 0
    %374 = vmatpush1.bf16.xpose.msra.mxu0 %v371
    %375 = vmatprep.subr.bf16.mxu0 0
    %376 = vmatpush1.bf16.xpose.msra.mxu0 0
    %377 = vmatprep.subr.bf16.mxu0 0
    %378 = vmatpush1.bf16.xpose.msra.mxu0 0
    %379 = vmatprep.subr.bf16.mxu0 0
    %380 = vmatpush1.bf16.xpose.msra.mxu0 0
    %381 = vmatprep.subr.bf16.mxu0 0
    %382 = vmatpush1.bf16.xpose.msra.mxu0 0
    %383 = vmatprep.subr.bf16.mxu0 0
    %384 = vmatpush1.bf16.xpose.msra.mxu0 0
    %385 = vmatprep.subr.bf16.mxu0 0
    %386 = vmatpush1.bf16.xpose.msra.mxu0 0
    %387 = vmatprep.subr.bf16.mxu0 0
    %388 = vmatpush1.bf16.xpose.msra.mxu0 0
    %389 = vmatprep.subr.bf16.mxu0 0
    %390 = vmatpush1.bf16.xpose.msra.mxu0 0
    %391 = vmatprep.subr.bf16.mxu0 0
    %392 = vmatpush1.bf16.xpose.msra.mxu0 0
    %393 = vmatprep.subr.bf16.mxu0 0
    %394 = vmatpush1.bf16.xpose.msra.mxu0 0
    %395 = vmatprep.subr.bf16.mxu0 0
    %396 = vmatpush1.bf16.xpose.msra.mxu0 0
    %397 = vmatprep.subr.bf16.mxu0 0
    %398 = vmatpush1.bf16.xpose.msra.mxu0 0
    %399 = vmatprep.subr.bf16.mxu0 0
    %400 = vmatpush1.bf16.xpose.msra.mxu0 0
    %401 = vmatprep.subr.bf16.mxu0 0
    %402 = vmatpush1.bf16.xpose.msra.mxu0 0
    %403 = vmatprep.subr.bf16.mxu0 0
    %404 = vmatpush1.bf16.xpose.msra.mxu0 0
    %405 = vmatprep.mubr.bf16.mxu0 0
    %406 = vmatmul.mubr.bf16.gmra.mrb[0].mxu0 %v368
    %v407 = vpop.f32.mrb[0].mxu0
    %v408 = vadd.f32 0.0, %v407
    %v409 = vpop.f32.mrb[0].mxu0
    %v410 = vpop.f32.mrb[0].mxu0
    %v411 = vpop.f32.mrb[0].mxu0
    %412 = vdwg.mxu0
    %414 = vrot.lane.b32.xlu0 %v261, 64
    %v415 = vpop.permute.xlu0 %414
    %v417 = vsel %vm171, %v261, 0
    %v420 = vsel %vm171, %v415, 0
    %422 = vmatprep.subr.bf16.mxu0 0
    %423 = vmatpush1.bf16.xpose.msra.mxu0 %v420
    %424 = vmatprep.subr.bf16.mxu0 0
    %425 = vmatpush1.bf16.xpose.msra.mxu0 0
    %426 = vmatprep.subr.bf16.mxu0 0
    %427 = vmatpush1.bf16.xpose.msra.mxu0 0
    %428 = vmatprep.subr.bf16.mxu0 0
    %429 = vmatpush1.bf16.xpose.msra.mxu0 0
    %430 = vmatprep.subr.bf16.mxu0 0
    %431 = vmatpush1.bf16.xpose.msra.mxu0 0
    %432 = vmatprep.subr.bf16.mxu0 0
    %433 = vmatpush1.bf16.xpose.msra.mxu0 0
    %434 = vmatprep.subr.bf16.mxu0 0
    %435 = vmatpush1.bf16.xpose.msra.mxu0 0
    %436 = vmatprep.subr.bf16.mxu0 0
    %437 = vmatpush1.bf16.xpose.msra.mxu0 0
    %438 = vmatprep.subr.bf16.mxu0 0
    %439 = vmatpush1.bf16.xpose.msra.mxu0 0
    %440 = vmatprep.subr.bf16.mxu0 0
    %441 = vmatpush1.bf16.xpose.msra.mxu0 0
    %442 = vmatprep.subr.bf16.mxu0 0
    %443 = vmatpush1.bf16.xpose.msra.mxu0 0
    %444 = vmatprep.subr.bf16.mxu0 0
    %445 = vmatpush1.bf16.xpose.msra.mxu0 0
    %446 = vmatprep.subr.bf16.mxu0 0
    %447 = vmatpush1.bf16.xpose.msra.mxu0 0
    %448 = vmatprep.subr.bf16.mxu0 0
    %449 = vmatpush1.bf16.xpose.msra.mxu0 0
    %450 = vmatprep.subr.bf16.mxu0 0
    %451 = vmatpush1.bf16.xpose.msra.mxu0 0
    %452 = vmatprep.subr.bf16.mxu0 0
    %453 = vmatpush1.bf16.xpose.msra.mxu0 0
    %454 = vmatprep.mubr.bf16.mxu0 0
    %455 = vmatmul.mubr.bf16.gmra.mrb[0].mxu0 %v417
    %v456 = vpop.f32.mrb[0].mxu0
    %v457 = vadd.f32 0.0, %v456
    %v458 = vpop.f32.mrb[0].mxu0
    %v459 = vpop.f32.mrb[0].mxu0
    %v460 = vpop.f32.mrb[0].mxu0
    %461 = vdwg.mxu0
    %463 = vrot.lane.b32.xlu0 %v262, 64
    %v464 = vpop.permute.xlu0 %463
    %v466 = vsel %vm171, %v262, 0
    %v469 = vsel %vm171, %v464, 0
    %471 = vmatprep.subr.bf16.mxu0 0
    %472 = vmatpush1.bf16.xpose.msra.mxu0 %v469
    %473 = vmatprep.subr.bf16.mxu0 0
    %474 = vmatpush1.bf16.xpose.msra.mxu0 0
    %475 = vmatprep.subr.bf16.mxu0 0
    %476 = vmatpush1.bf16.xpose.msra.mxu0 0
    %477 = vmatprep.subr.bf16.mxu0 0
    %478 = vmatpush1.bf16.xpose.msra.mxu0 0
    %479 = vmatprep.subr.bf16.mxu0 0
    %480 = vmatpush1.bf16.xpose.msra.mxu0 0
    %481 = vmatprep.subr.bf16.mxu0 0
    %482 = vmatpush1.bf16.xpose.msra.mxu0 0
    %483 = vmatprep.subr.bf16.mxu0 0
    %484 = vmatpush1.bf16.xpose.msra.mxu0 0
    %485 = vmatprep.subr.bf16.mxu0 0
    %486 = vmatpush1.bf16.xpose.msra.mxu0 0
    %487 = vmatprep.subr.bf16.mxu0 0
    %488 = vmatpush1.bf16.xpose.msra.mxu0 0
    %489 = vmatprep.subr.bf16.mxu0 0
    %490 = vmatpush1.bf16.xpose.msra.mxu0 0
    %491 = vmatprep.subr.bf16.mxu0 0
    %492 = vmatpush1.bf16.xpose.msra.mxu0 0
    %493 = vmatprep.subr.bf16.mxu0 0
    %494 = vmatpush1.bf16.xpose.msra.mxu0 0
    %495 = vmatprep.subr.bf16.mxu0 0
    %496 = vmatpush1.bf16.xpose.msra.mxu0 0
    %497 = vmatprep.subr.bf16.mxu0 0
    %498 = vmatpush1.bf16.xpose.msra.mxu0 0
    %499 = vmatprep.subr.bf16.mxu0 0
    %500 = vmatpush1.bf16.xpose.msra.mxu0 0
    %501 = vmatprep.subr.bf16.mxu0 0
    %502 = vmatpush1.bf16.xpose.msra.mxu0 0
    %503 = vmatprep.mubr.bf16.mxu0 0
    %504 = vmatmul.mubr.bf16.gmra.mrb[0].mxu0 %v466
    %v505 = vpop.f32.mrb[0].mxu0
    %v506 = vadd.f32 0.0, %v505
    %v507 = vpop.f32.mrb[0].mxu0
    %v508 = vpop.f32.mrb[0].mxu0
    %v509 = vpop.f32.mrb[0].mxu0
    %510 = vdwg.mxu0
    %512 = vrot.lane.b32.xlu0 %v263, 64
    %v513 = vpop.permute.xlu0 %512
    %v515 = vsel %vm171, %v263, 0
    %v518 = vsel %vm171, %v513, 0
    %520 = vmatprep.subr.bf16.mxu0 0
    %521 = vmatpush1.bf16.xpose.msra.mxu0 %v518
    %522 = vmatprep.subr.bf16.mxu0 0
    %523 = vmatpush1.bf16.xpose.msra.mxu0 0
    %524 = vmatprep.subr.bf16.mxu0 0
    %525 = vmatpush1.bf16.xpose.msra.mxu0 0
    %526 = vmatprep.subr.bf16.mxu0 0
    %527 = vmatpush1.bf16.xpose.msra.mxu0 0
    %528 = vmatprep.subr.bf16.mxu0 0
    %529 = vmatpush1.bf16.xpose.msra.mxu0 0
    %530 = vmatprep.subr.bf16.mxu0 0
    %531 = vmatpush1.bf16.xpose.msra.mxu0 0
    %532 = vmatprep.subr.bf16.mxu0 0
    %533 = vmatpush1.bf16.xpose.msra.mxu0 0
    %534 = vmatprep.subr.bf16.mxu0 0
    %535 = vmatpush1.bf16.xpose.msra.mxu0 0
    %536 = vmatprep.subr.bf16.mxu0 0
    %537 = vmatpush1.bf16.xpose.msra.mxu0 0
    %538 = vmatprep.subr.bf16.mxu0 0
    %539 = vmatpush1.bf16.xpose.msra.mxu0 0
    %540 = vmatprep.subr.bf16.mxu0 0
    %541 = vmatpush1.bf16.xpose.msra.mxu0 0
    %542 = vmatprep.subr.bf16.mxu0 0
    %543 = vmatpush1.bf16.xpose.msra.mxu0 0
    %544 = vmatprep.subr.bf16.mxu0 0
    %545 = vmatpush1.bf16.xpose.msra.mxu0 0
    %546 = vmatprep.subr.bf16.mxu0 0
    %547 = vmatpush1.bf16.xpose.msra.mxu0 0
    %548 = vmatprep.subr.bf16.mxu0 0
    %549 = vmatpush1.bf16.xpose.msra.mxu0 0
    %550 = vmatprep.subr.bf16.mxu0 0
    %551 = vmatpush1.bf16.xpose.msra.mxu0 0
    %552 = vmatprep.mubr.bf16.mxu0 0
    %553 = vmatmul.mubr.bf16.gmra.mrb[0].mxu0 %v515
    %v554 = vpop.f32.mrb[0].mxu0
    %v555 = vadd.f32 0.0, %v554
    %v556 = vpop.f32.mrb[0].mxu0
    %v557 = vpop.f32.mrb[0].mxu0
    %v558 = vpop.f32.mrb[0].mxu0
    %559 = vdwg.mxu0
    %561 = vrot.lane.b32.xlu0 %v264, 64
    %v562 = vpop.permute.xlu0 %561
    %v564 = vsel %vm171, %v264, 0
    %v567 = vsel %vm171, %v562, 0
    %569 = vmatprep.subr.bf16.mxu0 0
    %570 = vmatpush1.bf16.xpose.msra.mxu0 %v567
    %571 = vmatprep.subr.bf16.mxu0 0
    %572 = vmatpush1.bf16.xpose.msra.mxu0 0
    %573 = vmatprep.subr.bf16.mxu0 0
    %574 = vmatpush1.bf16.xpose.msra.mxu0 0
    %575 = vmatprep.subr.bf16.mxu0 0
    %576 = vmatpush1.bf16.xpose.msra.mxu0 0
    %577 = vmatprep.subr.bf16.mxu0 0
    %578 = vmatpush1.bf16.xpose.msra.mxu0 0
    %579 = vmatprep.subr.bf16.mxu0 0
    %580 = vmatpush1.bf16.xpose.msra.mxu0 0
    %581 = vmatprep.subr.bf16.mxu0 0
    %582 = vmatpush1.bf16.xpose.msra.mxu0 0
    %583 = vmatprep.subr.bf16.mxu0 0
    %584 = vmatpush1.bf16.xpose.msra.mxu0 0
    %585 = vmatprep.subr.bf16.mxu0 0
    %586 = vmatpush1.bf16.xpose.msra.mxu0 0
    %587 = vmatprep.subr.bf16.mxu0 0
    %588 = vmatpush1.bf16.xpose.msra.mxu0 0
    %589 = vmatprep.subr.bf16.mxu0 0
    %590 = vmatpush1.bf16.xpose.msra.mxu0 0
    %591 = vmatprep.subr.bf16.mxu0 0
    %592 = vmatpush1.bf16.xpose.msra.mxu0 0
    %593 = vmatprep.subr.bf16.mxu0 0
    %594 = vmatpush1.bf16.xpose.msra.mxu0 0
    %595 = vmatprep.subr.bf16.mxu0 0
    %596 = vmatpush1.bf16.xpose.msra.mxu0 0
    %597 = vmatprep.subr.bf16.mxu0 0
    %598 = vmatpush1.bf16.xpose.msra.mxu0 0
    %599 = vmatprep.subr.bf16.mxu0 0
    %600 = vmatpush1.bf16.xpose.msra.mxu0 0
    %601 = vmatprep.mubr.bf16.mxu0 0
    %602 = vmatmul.mubr.bf16.gmra.mrb[0].mxu0 %v564
    %v603 = vpop.f32.mrb[0].mxu0
    %v604 = vadd.f32 0.0, %v603
    %v605 = vpop.f32.mrb[0].mxu0
    %v606 = vpop.f32.mrb[0].mxu0
    %v607 = vpop.f32.mrb[0].mxu0
    %608 = vdwg.mxu0
    %610 = vrot.lane.b32.xlu0 %v265, 64
    %v611 = vpop.permute.xlu0 %610
    %v613 = vsel %vm171, %v265, 0
    %v616 = vsel %vm171, %v611, 0
    %618 = vmatprep.subr.bf16.mxu0 0
    %619 = vmatpush1.bf16.xpose.msra.mxu0 %v616
    %620 = vmatprep.subr.bf16.mxu0 0
    %621 = vmatpush1.bf16.xpose.msra.mxu0 0
    %622 = vmatprep.subr.bf16.mxu0 0
    %623 = vmatpush1.bf16.xpose.msra.mxu0 0
    %624 = vmatprep.subr.bf16.mxu0 0
    %625 = vmatpush1.bf16.xpose.msra.mxu0 0
    %626 = vmatprep.subr.bf16.mxu0 0
    %627 = vmatpush1.bf16.xpose.msra.mxu0 0
    %628 = vmatprep.subr.bf16.mxu0 0
    %629 = vmatpush1.bf16.xpose.msra.mxu0 0
    %630 = vmatprep.subr.bf16.mxu0 0
    %631 = vmatpush1.bf16.xpose.msra.mxu0 0
    %632 = vmatprep.subr.bf16.mxu0 0
    %633 = vmatpush1.bf16.xpose.msra.mxu0 0
    %634 = vmatprep.subr.bf16.mxu0 0
    %635 = vmatpush1.bf16.xpose.msra.mxu0 0
    %636 = vmatprep.subr.bf16.mxu0 0
    %637 = vmatpush1.bf16.xpose.msra.mxu0 0
    %638 = vmatprep.subr.bf16.mxu0 0
    %639 = vmatpush1.bf16.xpose.msra.mxu0 0
    %640 = vmatprep.subr.bf16.mxu0 0
    %641 = vmatpush1.bf16.xpose.msra.mxu0 0
    %642 = vmatprep.subr.bf16.mxu0 0
    %643 = vmatpush1.bf16.xpose.msra.mxu0 0
    %644 = vmatprep.subr.bf16.mxu0 0
    %645 = vmatpush1.bf16.xpose.msra.mxu0 0
    %646 = vmatprep.subr.bf16.mxu0 0
    %647 = vmatpush1.bf16.xpose.msra.mxu0 0
    %648 = vmatprep.subr.bf16.mxu0 0
    %649 = vmatpush1.bf16.xpose.msra.mxu0 0
    %650 = vmatprep.mubr.bf16.mxu0 0
    %651 = vmatmul.mubr.bf16.gmra.mrb[0].mxu0 %v613
    %v652 = vpop.f32.mrb[0].mxu0
    %v653 = vadd.f32 0.0, %v652
    %v654 = vpop.f32.mrb[0].mxu0
    %v655 = vpop.f32.mrb[0].mxu0
    %v656 = vpop.f32.mrb[0].mxu0
    %657 = vdwg.mxu0
    %v658 = vmul.f32 %v310, 0.25
    %v659 = vmul.f32 %v359, 0.25
    %v660 = vmul.f32 %v408, 0.25
    %v661 = vmul.f32 %v457, 0.25
    %v662 = vmul.f32 %v506, 0.25
    %v663 = vmul.f32 %v555, 0.25
    %v664 = vmul.f32 %v604, 0.25
    %v665 = vmul.f32 %v653, 0.25
    %v666 = vsel %vm51, %v658, -inf
    %667 = vmax.xlane.f32.xlu0 %v666
    %v668 = vpop.xlane.xlu0 %667
    %v669 = vsel %vm51, %v659, -inf
    %670 = vmax.xlane.f32.xlu0 %v669
    %v671 = vpop.xlane.xlu0 %670
    %v672 = vsel %vm51, %v660, -inf
    %673 = vmax.xlane.f32.xlu0 %v672
    %v674 = vpop.xlane.xlu0 %673
    %v675 = vsel %vm51, %v661, -inf
    %676 = vmax.xlane.f32.xlu0 %v675
    %v677 = vpop.xlane.xlu0 %676
    %v678 = vsel %vm51, %v662, -inf
    %679 = vmax.xlane.f32.xlu0 %v678
    %v680 = vpop.xlane.xlu0 %679
    %v681 = vsel %vm51, %v663, -inf
    %682 = vmax.xlane.f32.xlu0 %v681
    %v683 = vpop.xlane.xlu0 %682
    %v684 = vsel %vm51, %v664, -inf
    %685 = vmax.xlane.f32.xlu0 %v684
    %v686 = vpop.xlane.xlu0 %685
    %v687 = vsel %vm51, %v665, -inf
    %688 = vmax.xlane.f32.xlu0 %v687
    %v689 = vpop.xlane.xlu0 %688
    %v690 = vsub.f32 %v658, %v668
    %v691 = vsub.f32 %v659, %v671
    %v692 = vsub.f32 %v660, %v674
    %v693 = vsub.f32 %v661, %v677
    %v694 = vsub.f32 %v662, %v680
    %v695 = vsub.f32 %v663, %v683
    %v696 = vsub.f32 %v664, %v686
    %v697 = vsub.f32 %v665, %v689
    %v698 = vmul.f32 %v690, 1.442695
    %v699 = vpow.pop %v698
    %v700 = vmul.f32 %v691, 1.442695
    %v701 = vpow.pop %v700
    %v702 = vmul.f32 %v692, 1.442695
    %v703 = vpow.pop %v702
    %v704 = vmul.f32 %v693, 1.442695
    %v705 = vpow.pop %v704
    %v706 = vmul.f32 %v694, 1.442695
    %v707 = vpow.pop %v706
    %v708 = vmul.f32 %v695, 1.442695
    %v709 = vpow.pop %v708
    %v710 = vmul.f32 %v696, 1.442695
    %v711 = vpow.pop %v710
    %v712 = vmul.f32 %v697, 1.442695
    %v713 = vpow.pop %v712
    %v714 = vsel %vm51, %v699, 0.0
    %715 = vadd.xlane.f32.xlu0 %v714
    %v716 = vpop.xlane.xlu0 %715
    %v717 = vsel %vm51, %v701, 0.0
    %718 = vadd.xlane.f32.xlu0 %v717
    %v719 = vpop.xlane.xlu0 %718
    %v720 = vsel %vm51, %v703, 0.0
    %721 = vadd.xlane.f32.xlu0 %v720
    %v722 = vpop.xlane.xlu0 %721
    %v723 = vsel %vm51, %v705, 0.0
    %724 = vadd.xlane.f32.xlu0 %v723
    %v725 = vpop.xlane.xlu0 %724
    %v726 = vsel %vm51, %v707, 0.0
    %727 = vadd.xlane.f32.xlu0 %v726
    %v728 = vpop.xlane.xlu0 %727
    %v729 = vsel %vm51, %v709, 0.0
    %730 = vadd.xlane.f32.xlu0 %v729
    %v731 = vpop.xlane.xlu0 %730
    %v732 = vsel %vm51, %v711, 0.0
    %733 = vadd.xlane.f32.xlu0 %v732
    %v734 = vpop.xlane.xlu0 %733
    %v735 = vsel %vm51, %v713, 0.0
    %736 = vadd.xlane.f32.xlu0 %v735
    %v737 = vpop.xlane.xlu0 %736
    %v738 = vrcp.pop %v716
    %v739 = vrcp.pop %v719
    %v740 = vrcp.pop %v722
    %v741 = vrcp.pop %v725
    %v742 = vrcp.pop %v728
    %v743 = vrcp.pop %v731
    %v744 = vrcp.pop %v734
    %v745 = vrcp.pop %v737
    %v746 = vmul.f32 %v699, %v738
    %v747 = vmul.f32 %v701, %v739
    %v748 = vmul.f32 %v703, %v740
    %v749 = vmul.f32 %v705, %v741
    %v750 = vmul.f32 %v707, %v742
    %v751 = vmul.f32 %v709, %v743
    %v752 = vmul.f32 %v711, %v744
    %v753 = vmul.f32 %v713, %v745
    %v754 = vpack.c.bf16 %v746, %v746
    %v755 = vpack.c.bf16 %v747, %v747
    %v756 = vpack.c.bf16 %v748, %v748
    %v757 = vpack.c.bf16 %v749, %v749
    %v758 = vpack.c.bf16 %v750, %v750
    %v759 = vpack.c.bf16 %v751, %v751
    %v760 = vpack.c.bf16 %v752, %v752
    %v761 = vpack.c.bf16 %v753, %v753
    %v762 = vpack.c.bf16 %v212, %v212
    %v763 = vpack.c.bf16 %v216, %v216
    %v764 = vpack.c.bf16 %v241, %v241
    %v765 = vpack.c.bf16 %v243, %v243
    %v766 = vpack.c.bf16 %v247, %v247
    %v767 = vpack.c.bf16 %v249, %v249
    %v768 = vpack.c.bf16 %v253, %v253
    %v769 = vpack.c.bf16 %v255, %v255
    %v771 = vsel %vm51, %v754, 0
    %v774 = vsel %vm55, %v762, 0
    %776 = vmatprep.subr.bf16.mxu0 0
    %777 = vmatpush1.bf16.msra.mxu0 %v774
    %778 = vmatprep.subr.bf16.mxu0 0
    %779 = vmatpush1.bf16.msra.mxu0 0
    %780 = vmatprep.subr.bf16.mxu0 0
    %781 = vmatpush1.bf16.msra.mxu0 0
    %782 = vmatprep.subr.bf16.mxu0 0
    %783 = vmatpush1.bf16.msra.mxu0 0
    %784 = vmatprep.subr.bf16.mxu0 0
    %785 = vmatpush1.bf16.msra.mxu0 0
    %786 = vmatprep.subr.bf16.mxu0 0
    %787 = vmatpush1.bf16.msra.mxu0 0
    %788 = vmatprep.subr.bf16.mxu0 0
    %789 = vmatpush1.bf16.msra.mxu0 0
    %790 = vmatprep.subr.bf16.mxu0 0
    %791 = vmatpush1.bf16.msra.mxu0 0
    %792 = vmatprep.subr.bf16.mxu0 0
    %793 = vmatpush1.bf16.msra.mxu0 0
    %794 = vmatprep.subr.bf16.mxu0 0
    %795 = vmatpush1.bf16.msra.mxu0 0
    %796 = vmatprep.subr.bf16.mxu0 0
    %797 = vmatpush1.bf16.msra.mxu0 0
    %798 = vmatprep.subr.bf16.mxu0 0
    %799 = vmatpush1.bf16.msra.mxu0 0
    %800 = vmatprep.subr.bf16.mxu0 0
    %801 = vmatpush1.bf16.msra.mxu0 0
    %802 = vmatprep.subr.bf16.mxu0 0
    %803 = vmatpush1.bf16.msra.mxu0 0
    %804 = vmatprep.subr.bf16.mxu0 0
    %805 = vmatpush1.bf16.msra.mxu0 0
    %806 = vmatprep.subr.bf16.mxu0 0
    %807 = vmatpush1.bf16.msra.mxu0 0
    %808 = vmatprep.mubr.bf16.mxu0 0
    %809 = vmatmul.mubr.bf16.gmra.mrb[0].mxu0 %v771
    %v810 = vpop.f32.mrb[0].mxu0
    %v811 = vadd.f32 0.0, %v810
    %v812 = vpop.f32.mrb[0].mxu0
    %v813 = vpop.f32.mrb[0].mxu0
    %v814 = vpop.f32.mrb[0].mxu0
    %815 = vdwg.mxu0
    %v817 = vsel %vm51, %v755, 0
    %v820 = vsel %vm55, %v763, 0
    %822 = vmatprep.subr.bf16.mxu0 0
    %823 = vmatpush1.bf16.msra.mxu0 %v820
    %824 = vmatprep.subr.bf16.mxu0 0
    %825 = vmatpush1.bf16.msra.mxu0 0
    %826 = vmatprep.subr.bf16.mxu0 0
    %827 = vmatpush1.bf16.msra.mxu0 0
    %828 = vmatprep.subr.bf16.mxu0 0
    %829 = vmatpush1.bf16.msra.mxu0 0
    %830 = vmatprep.subr.bf16.mxu0 0
    %831 = vmatpush1.bf16.msra.mxu0 0
    %832 = vmatprep.subr.bf16.mxu0 0
    %833 = vmatpush1.bf16.msra.mxu0 0
    %834 = vmatprep.subr.bf16.mxu0 0
    %835 = vmatpush1.bf16.msra.mxu0 0
    %836 = vmatprep.subr.bf16.mxu0 0
    %837 = vmatpush1.bf16.msra.mxu0 0
    %838 = vmatprep.subr.bf16.mxu0 0
    %839 = vmatpush1.bf16.msra.mxu0 0
    %840 = vmatprep.subr.bf16.mxu0 0
    %841 = vmatpush1.bf16.msra.mxu0 0
    %842 = vmatprep.subr.bf16.mxu0 0
    %843 = vmatpush1.bf16.msra.mxu0 0
    %844 = vmatprep.subr.bf16.mxu0 0
    %845 = vmatpush1.bf16.msra.mxu0 0
    %846 = vmatprep.subr.bf16.mxu0 0
    %847 = vmatpush1.bf16.msra.mxu0 0
    %848 = vmatprep.subr.bf16.mxu0 0
    %849 = vmatpush1.bf16.msra.mxu0 0
    %850 = vmatprep.subr.bf16.mxu0 0
    %851 = vmatpush1.bf16.msra.mxu0 0
    %852 = vmatprep.subr.bf16.mxu0 0
    %853 = vmatpush1.bf16.msra.mxu0 0
    %854 = vmatprep.mubr.bf16.mxu0 0
    %855 = vmatmul.mubr.bf16.gmra.mrb[0].mxu0 %v817
    %v856 = vpop.f32.mrb[0].mxu0
    %v857 = vadd.f32 0.0, %v856
    %v858 = vpop.f32.mrb[0].mxu0
    %v859 = vpop.f32.mrb[0].mxu0
    %v860 = vpop.f32.mrb[0].mxu0
    %861 = vdwg.mxu0
    %v863 = vsel %vm51, %v756, 0
    %v866 = vsel %vm55, %v764, 0
    %868 = vmatprep.subr.bf16.mxu0 0
    %869 = vmatpush1.bf16.msra.mxu0 %v866
    %870 = vmatprep.subr.bf16.mxu0 0
    %871 = vmatpush1.bf16.msra.mxu0 0
    %872 = vmatprep.subr.bf16.mxu0 0
    %873 = vmatpush1.bf16.msra.mxu0 0
    %874 = vmatprep.subr.bf16.mxu0 0
    %875 = vmatpush1.bf16.msra.mxu0 0
    %876 = vmatprep.subr.bf16.mxu0 0
    %877 = vmatpush1.bf16.msra.mxu0 0
    %878 = vmatprep.subr.bf16.mxu0 0
    %879 = vmatpush1.bf16.msra.mxu0 0
    %880 = vmatprep.subr.bf16.mxu0 0
    %881 = vmatpush1.bf16.msra.mxu0 0
    %882 = vmatprep.subr.bf16.mxu0 0
    %883 = vmatpush1.bf16.msra.mxu0 0
    %884 = vmatprep.subr.bf16.mxu0 0
    %885 = vmatpush1.bf16.msra.mxu0 0
    %886 = vmatprep.subr.bf16.mxu0 0
    %887 = vmatpush1.bf16.msra.mxu0 0
    %888 = vmatprep.subr.bf16.mxu0 0
    %889 = vmatpush1.bf16.msra.mxu0 0
    %890 = vmatprep.subr.bf16.mxu0 0
    %891 = vmatpush1.bf16.msra.mxu0 0
    %892 = vmatprep.subr.bf16.mxu0 0
    %893 = vmatpush1.bf16.msra.mxu0 0
    %894 = vmatprep.subr.bf16.mxu0 0
    %895 = vmatpush1.bf16.msra.mxu0 0
    %896 = vmatprep.subr.bf16.mxu0 0
    %897 = vmatpush1.bf16.msra.mxu0 0
    %898 = vmatprep.subr.bf16.mxu0 0
    %899 = vmatpush1.bf16.msra.mxu0 0
    %900 = vmatprep.mubr.bf16.mxu0 0
    %901 = vmatmul.mubr.bf16.gmra.mrb[0].mxu0 %v863
    %v902 = vpop.f32.mrb[0].mxu0
    %v903 = vadd.f32 0.0, %v902
    %v904 = vpop.f32.mrb[0].mxu0
    %v905 = vpop.f32.mrb[0].mxu0
    %v906 = vpop.f32.mrb[0].mxu0
    %907 = vdwg.mxu0
    %v909 = vsel %vm51, %v757, 0
    %v912 = vsel %vm55, %v765, 0
    %914 = vmatprep.subr.bf16.mxu0 0
    %915 = vmatpush1.bf16.msra.mxu0 %v912
    %916 = vmatprep.subr.bf16.mxu0 0
    %917 = vmatpush1.bf16.msra.mxu0 0
    %918 = vmatprep.subr.bf16.mxu0 0
    %919 = vmatpush1.bf16.msra.mxu0 0
    %920 = vmatprep.subr.bf16.mxu0 0
    %921 = vmatpush1.bf16.msra.mxu0 0
    %922 = vmatprep.subr.bf16.mxu0 0
    %923 = vmatpush1.bf16.msra.mxu0 0
    %924 = vmatprep.subr.bf16.mxu0 0
    %925 = vmatpush1.bf16.msra.mxu0 0
    %926 = vmatprep.subr.bf16.mxu0 0
    %927 = vmatpush1.bf16.msra.mxu0 0
    %928 = vmatprep.subr.bf16.mxu0 0
    %929 = vmatpush1.bf16.msra.mxu0 0
    %930 = vmatprep.subr.bf16.mxu0 0
    %931 = vmatpush1.bf16.msra.mxu0 0
    %932 = vmatprep.subr.bf16.mxu0 0
    %933 = vmatpush1.bf16.msra.mxu0 0
    %934 = vmatprep.subr.bf16.mxu0 0
    %935 = vmatpush1.bf16.msra.mxu0 0
    %936 = vmatprep.subr.bf16.mxu0 0
    %937 = vmatpush1.bf16.msra.mxu0 0
    %938 = vmatprep.subr.bf16.mxu0 0
    %939 = vmatpush1.bf16.msra.mxu0 0
    %940 = vmatprep.subr.bf16.mxu0 0
    %941 = vmatpush1.bf16.msra.mxu0 0
    %942 = vmatprep.subr.bf16.mxu0 0
    %943 = vmatpush1.bf16.msra.mxu0 0
    %944 = vmatprep.subr.bf16.mxu0 0
    %945 = vmatpush1.bf16.msra.mxu0 0
    %946 = vmatprep.mubr.bf16.mxu0 0
    %947 = vmatmul.mubr.bf16.gmra.mrb[0].mxu0 %v909
    %v948 = vpop.f32.mrb[0].mxu0
    %v949 = vadd.f32 0.0, %v948
    %v950 = vpop.f32.mrb[0].mxu0
    %v951 = vpop.f32.mrb[0].mxu0
    %v952 = vpop.f32.mrb[0].mxu0
    %953 = vdwg.mxu0
    %v955 = vsel %vm51, %v758, 0
    %v958 = vsel %vm55, %v766, 0
    %960 = vmatprep.subr.bf16.mxu0 0
    %961 = vmatpush1.bf16.msra.mxu0 %v958
    %962 = vmatprep.subr.bf16.mxu0 0
    %963 = vmatpush1.bf16.msra.mxu0 0
    %964 = vmatprep.subr.bf16.mxu0 0
    %965 = vmatpush1.bf16.msra.mxu0 0
    %966 = vmatprep.subr.bf16.mxu0 0
    %967 = vmatpush1.bf16.msra.mxu0 0
    %968 = vmatprep.subr.bf16.mxu0 0
    %969 = vmatpush1.bf16.msra.mxu0 0
    %970 = vmatprep.subr.bf16.mxu0 0
    %971 = vmatpush1.bf16.msra.mxu0 0
    %972 = vmatprep.subr.bf16.mxu0 0
    %973 = vmatpush1.bf16.msra.mxu0 0
    %974 = vmatprep.subr.bf16.mxu0 0
    %975 = vmatpush1.bf16.msra.mxu0 0
    %976 = vmatprep.subr.bf16.mxu0 0
    %977 = vmatpush1.bf16.msra.mxu0 0
    %978 = vmatprep.subr.bf16.mxu0 0
    %979 = vmatpush1.bf16.msra.mxu0 0
    %980 = vmatprep.subr.bf16.mxu0 0
    %981 = vmatpush1.bf16.msra.mxu0 0
    %982 = vmatprep.subr.bf16.mxu0 0
    %983 = vmatpush1.bf16.msra.mxu0 0
    %984 = vmatprep.subr.bf16.mxu0 0
    %985 = vmatpush1.bf16.msra.mxu0 0
    %986 = vmatprep.subr.bf16.mxu0 0
    %987 = vmatpush1.bf16.msra.mxu0 0
    %988 = vmatprep.subr.bf16.mxu0 0
    %989 = vmatpush1.bf16.msra.mxu0 0
    %990 = vmatprep.subr.bf16.mxu0 0
    %991 = vmatpush1.bf16.msra.mxu0 0
    %992 = vmatprep.mubr.bf16.mxu0 0
    %993 = vmatmul.mubr.bf16.gmra.mrb[0].mxu0 %v955
    %v994 = vpop.f32.mrb[0].mxu0
    %v995 = vadd.f32 0.0, %v994
    %v996 = vpop.f32.mrb[0].mxu0
    %v997 = vpop.f32.mrb[0].mxu0
    %v998 = vpop.f32.mrb[0].mxu0
    %999 = vdwg.mxu0
    %v1001 = vsel %vm51, %v759, 0
    %v1004 = vsel %vm55, %v767, 0
    %1006 = vmatprep.subr.bf16.mxu0 0
    %1007 = vmatpush1.bf16.msra.mxu0 %v1004
    %1008 = vmatprep.subr.bf16.mxu0 0
    %1009 = vmatpush1.bf16.msra.mxu0 0
    %1010 = vmatprep.subr.bf16.mxu0 0
    %1011 = vmatpush1.bf16.msra.mxu0 0
    %1012 = vmatprep.subr.bf16.mxu0 0
    %1013 = vmatpush1.bf16.msra.mxu0 0
    %1014 = vmatprep.subr.bf16.mxu0 0
    %1015 = vmatpush1.bf16.msra.mxu0 0
    %1016 = vmatprep.subr.bf16.mxu0 0
    %1017 = vmatpush1.bf16.msra.mxu0 0
    %1018 = vmatprep.subr.bf16.mxu0 0
    %1019 = vmatpush1.bf16.msra.mxu0 0
    %1020 = vmatprep.subr.bf16.mxu0 0
    %1021 = vmatpush1.bf16.msra.mxu0 0
    %1022 = vmatprep.subr.bf16.mxu0 0
    %1023 = vmatpush1.bf16.msra.mxu0 0
    %1024 = vmatprep.subr.bf16.mxu0 0
    %1025 = vmatpush1.bf16.msra.mxu0 0
    %1026 = vmatprep.subr.bf16.mxu0 0
    %1027 = vmatpush1.bf16.msra.mxu0 0
    %1028 = vmatprep.subr.bf16.mxu0 0
    %1029 = vmatpush1.bf16.msra.mxu0 0
    %1030 = vmatprep.subr.bf16.mxu0 0
    %1031 = vmatpush1.bf16.msra.mxu0 0
    %1032 = vmatprep.subr.bf16.mxu0 0
    %1033 = vmatpush1.bf16.msra.mxu0 0
    %1034 = vmatprep.subr.bf16.mxu0 0
    %1035 = vmatpush1.bf16.msra.mxu0 0
    %1036 = vmatprep.subr.bf16.mxu0 0
    %1037 = vmatpush1.bf16.msra.mxu0 0
    %1038 = vmatprep.mubr.bf16.mxu0 0
    %1039 = vmatmul.mubr.bf16.gmra.mrb[0].mxu0 %v1001
    %v1040 = vpop.f32.mrb[0].mxu0
    %v1041 = vadd.f32 0.0, %v1040
    %v1042 = vpop.f32.mrb[0].mxu0
    %v1043 = vpop.f32.mrb[0].mxu0
    %v1044 = vpop.f32.mrb[0].mxu0
    %1045 = vdwg.mxu0
    %v1047 = vsel %vm51, %v760, 0
    %v1050 = vsel %vm55, %v768, 0
    %1052 = vmatprep.subr.bf16.mxu0 0
    %1053 = vmatpush1.bf16.msra.mxu0 %v1050
    %1054 = vmatprep.subr.bf16.mxu0 0
    %1055 = vmatpush1.bf16.msra.mxu0 0
    %1056 = vmatprep.subr.bf16.mxu0 0
    %1057 = vmatpush1.bf16.msra.mxu0 0
    %1058 = vmatprep.subr.bf16.mxu0 0
    %1059 = vmatpush1.bf16.msra.mxu0 0
    %1060 = vmatprep.subr.bf16.mxu0 0
    %1061 = vmatpush1.bf16.msra.mxu0 0
    %1062 = vmatprep.subr.bf16.mxu0 0
    %1063 = vmatpush1.bf16.msra.mxu0 0
    %1064 = vmatprep.subr.bf16.mxu0 0
    %1065 = vmatpush1.bf16.msra.mxu0 0
    %1066 = vmatprep.subr.bf16.mxu0 0
    %1067 = vmatpush1.bf16.msra.mxu0 0
    %1068 = vmatprep.subr.bf16.mxu0 0
    %1069 = vmatpush1.bf16.msra.mxu0 0
    %1070 = vmatprep.subr.bf16.mxu0 0
    %1071 = vmatpush1.bf16.msra.mxu0 0
    %1072 = vmatprep.subr.bf16.mxu0 0
    %1073 = vmatpush1.bf16.msra.mxu0 0
    %1074 = vmatprep.subr.bf16.mxu0 0
    %1075 = vmatpush1.bf16.msra.mxu0 0
    %1076 = vmatprep.subr.bf16.mxu0 0
    %1077 = vmatpush1.bf16.msra.mxu0 0
    %1078 = vmatprep.subr.bf16.mxu0 0
    %1079 = vmatpush1.bf16.msra.mxu0 0
    %1080 = vmatprep.subr.bf16.mxu0 0
    %1081 = vmatpush1.bf16.msra.mxu0 0
    %1082 = vmatprep.subr.bf16.mxu0 0
    %1083 = vmatpush1.bf16.msra.mxu0 0
    %1084 = vmatprep.mubr.bf16.mxu0 0
    %1085 = vmatmul.mubr.bf16.gmra.mrb[0].mxu0 %v1047
    %v1086 = vpop.f32.mrb[0].mxu0
    %v1087 = vadd.f32 0.0, %v1086
    %v1088 = vpop.f32.mrb[0].mxu0
    %v1089 = vpop.f32.mrb[0].mxu0
    %v1090 = vpop.f32.mrb[0].mxu0
    %1091 = vdwg.mxu0
    %v1093 = vsel %vm51, %v761, 0
    %v1096 = vsel %vm55, %v769, 0
    %1098 = vmatprep.subr.bf16.mxu0 0
    %1099 = vmatpush1.bf16.msra.mxu0 %v1096
    %1100 = vmatprep.subr.bf16.mxu0 0
    %1101 = vmatpush1.bf16.msra.mxu0 0
    %1102 = vmatprep.subr.bf16.mxu0 0
    %1103 = vmatpush1.bf16.msra.mxu0 0
    %1104 = vmatprep.subr.bf16.mxu0 0
    %1105 = vmatpush1.bf16.msra.mxu0 0
    %1106 = vmatprep.subr.bf16.mxu0 0
    %1107 = vmatpush1.bf16.msra.mxu0 0
    %1108 = vmatprep.subr.bf16.mxu0 0
    %1109 = vmatpush1.bf16.msra.mxu0 0
    %1110 = vmatprep.subr.bf16.mxu0 0
    %1111 = vmatpush1.bf16.msra.mxu0 0
    %1112 = vmatprep.subr.bf16.mxu0 0
    %1113 = vmatpush1.bf16.msra.mxu0 0
    %1114 = vmatprep.subr.bf16.mxu0 0
    %1115 = vmatpush1.bf16.msra.mxu0 0
    %1116 = vmatprep.subr.bf16.mxu0 0
    %1117 = vmatpush1.bf16.msra.mxu0 0
    %1118 = vmatprep.subr.bf16.mxu0 0
    %1119 = vmatpush1.bf16.msra.mxu0 0
    %1120 = vmatprep.subr.bf16.mxu0 0
    %1121 = vmatpush1.bf16.msra.mxu0 0
    %1122 = vmatprep.subr.bf16.mxu0 0
    %1123 = vmatpush1.bf16.msra.mxu0 0
    %1124 = vmatprep.subr.bf16.mxu0 0
    %1125 = vmatpush1.bf16.msra.mxu0 0
    %1126 = vmatprep.subr.bf16.mxu0 0
    %1127 = vmatpush1.bf16.msra.mxu0 0
    %1128 = vmatprep.subr.bf16.mxu0 0
    %1129 = vmatpush1.bf16.msra.mxu0 0
    %1130 = vmatprep.mubr.bf16.mxu0 0
    %1131 = vmatmul.mubr.bf16.gmra.mrb[0].mxu0 %v1093
    %v1132 = vpop.f32.mrb[0].mxu0
    %v1133 = vadd.f32 0.0, %v1132
    %v1134 = vpop.f32.mrb[0].mxu0
    %v1135 = vpop.f32.mrb[0].mxu0
    %v1136 = vpop.f32.mrb[0].mxu0
    %1137 = vdwg.mxu0
    %1140 = vrot.lane.b32.xlu0 %v903, 16
    %v1141 = vpop.permute.xlu0 %1140
    %1142 = vrot.lane.b32.xlu0 %v949, 16
    %v1143 = vpop.permute.xlu0 %1142
    %1148 = vrot.lane.b32.xlu0 %v995, 32
    %v1149 = vpop.permute.xlu0 %1148
    %1150 = vrot.lane.b32.xlu0 %v1041, 32
    %v1151 = vpop.permute.xlu0 %1150
    %1156 = vrot.lane.b32.xlu0 %v1087, 48
    %v1157 = vpop.permute.xlu0 %1156
    %1158 = vrot.lane.b32.xlu0 %v1133, 48
    %v1159 = vpop.permute.xlu0 %1158
    %v1162 = vsel %vm171, %v811, %v1141
    %v1163 = vsel %vm171, %v857, %v1143
    %vm1164 = vcmask 261120
    %v1165 = vsel %vm1164, %v1162, %v1149
    %v1166 = vsel %vm1164, %v1163, %v1151
    %vm1167 = vcmask 392192
    %v1168 = vsel %vm1167, %v1165, %v1157
    %v1169 = vsel %vm1167, %v1166, %v1159
    %v1170 = vpack.c.bf16 %v1169, %v1168
    %v1171 = vld [vmem:[%s5] sm:$0xf]
    %v1172 = vld [vmem:[%s5 + $0x4] sm:$0xf]
    %v1173 = vld [vmem:[%s5 + $0x8] sm:$0xf]
    %v1174 = vld [vmem:[%s5 + $0xc] sm:$0xf]
    %v1175 = vld [vmem:[%s5 + $0x10] sm:$0xf]
    %v1176 = vld [vmem:[%s5 + $0x14] sm:$0xf]
    %v1177 = vld [vmem:[%s5 + $0x18] sm:$0xf]
    %v1178 = vld [vmem:[%s5 + $0x1c] sm:$0xf]
    %v1180 = vlaneseq
    %v1181 = vshrl.u32 %v1180, 7
    %v1182 = vsub.s32 0, %v1181
    %v1183 = vrot.slane %v145, %v1182
    %v1193 = vunpack.c.l.b16 %v1171
    %v1194 = vunpack.c.l.b16 %v1172
    %v1195 = vunpack.c.l.b16 %v1173
    %v1196 = vunpack.c.l.b16 %v1174
    %v1197 = vunpack.c.l.b16 %v1175
    %v1198 = vunpack.c.l.b16 %v1176
    %v1199 = vunpack.c.l.b16 %v1177
    %v1200 = vunpack.c.l.b16 %v1178
    %v1201 = vpack.c.b16 %v1194, %v1193
    %v1202 = vpack.c.b16 %v1196, %v1195
    %v1203 = vpack.c.b16 %v1198, %v1197
    %v1204 = vpack.c.b16 %v1200, %v1199
    %vm1209 = vcmask 523264
    %v1211 = vsel %vm1209, %v1170, 0
    %1213 = vmatprep.subr.bf16.mxu0 0
    %1214 = vmatpush1.bf16.msra.mxu0 %v1201
    %1215 = vmatprep.subr.bf16.mxu0 0
    %1216 = vmatpush1.bf16.msra.mxu0 %v1202
    %1217 = vmatprep.subr.bf16.mxu0 0
    %1218 = vmatpush1.bf16.msra.mxu0 %v1203
    %1219 = vmatprep.subr.bf16.mxu0 0
    %1220 = vmatpush1.bf16.msra.mxu0 %v1204
    %1221 = vmatprep.subr.bf16.mxu0 0
    %1222 = vmatpush1.bf16.msra.mxu0 0
    %1223 = vmatprep.subr.bf16.mxu0 0
    %1224 = vmatpush1.bf16.msra.mxu0 0
    %1225 = vmatprep.subr.bf16.mxu0 0
    %1226 = vmatpush1.bf16.msra.mxu0 0
    %1227 = vmatprep.subr.bf16.mxu0 0
    %1228 = vmatpush1.bf16.msra.mxu0 0
    %1229 = vmatprep.subr.bf16.mxu0 0
    %1230 = vmatpush1.bf16.msra.mxu0 0
    %1231 = vmatprep.subr.bf16.mxu0 0
    %1232 = vmatpush1.bf16.msra.mxu0 0
    %1233 = vmatprep.subr.bf16.mxu0 0
    %1234 = vmatpush1.bf16.msra.mxu0 0
    %1235 = vmatprep.subr.bf16.mxu0 0
    %1236 = vmatpush1.bf16.msra.mxu0 0
    %1237 = vmatprep.subr.bf16.mxu0 0
    %1238 = vmatpush1.bf16.msra.mxu0 0
    %1239 = vmatprep.subr.bf16.mxu0 0
    %1240 = vmatpush1.bf16.msra.mxu0 0
    %1241 = vmatprep.subr.bf16.mxu0 0
    %1242 = vmatpush1.bf16.msra.mxu0 0
    %1243 = vmatprep.subr.bf16.mxu0 0
    %1244 = vmatpush1.bf16.msra.mxu0 0
    %1245 = vmatprep.mubr.bf16.mxu0 0
    %1246 = vmatmul.mubr.bf16.gmra.mrb[0].mxu0 %v1211
    %v1247 = vpop.f32.mrb[0].mxu0
    %v1248 = vadd.f32 %v1183, %v1247
    %v1249 = vpop.f32.mrb[0].mxu0
    %v1250 = vpop.f32.mrb[0].mxu0
    %v1251 = vadd.f32 %v1183, %v1250
    %v1252 = vpop.f32.mrb[0].mxu0
    %1253 = vdwg.mxu0
    %v1254 = vadd.f32 %v1248, %v94
    %v1255 = vadd.f32 %v1251, %v140
    %v1256 = vsel %vm171, %v1254, 0.0
    %1257 = vadd.xlane.f32.xlu0 %v1256
    %v1258 = vpop.xlane.xlu0 %1257
    %v1259 = vsel %vm171, %v1255, 0.0
    %1260 = vadd.xlane.f32.xlu0 %v1259
    %v1261 = vpop.xlane.xlu0 %1260
    %v1262 = vrcp.pop 16.0
    %v1263 = vmul.f32 %v1258, %v1262
    %v1264 = vmul.f32 %v1261, %v1262
    %v1265 = vsub.f32 %v1254, %v1263
    %v1266 = vsub.f32 %v1255, %v1264
    %v1267 = vmul.f32 %v1265, %v1265
    %v1268 = vmul.f32 %v1266, %v1266
    %v1269 = vsel %vm171, %v1267, 0.0
    %1270 = vadd.xlane.f32.xlu0 %v1269
    %v1271 = vpop.xlane.xlu0 %1270
    %v1272 = vsel %vm171, %v1268, 0.0
    %1273 = vadd.xlane.f32.xlu0 %v1272
    %v1274 = vpop.xlane.xlu0 %1273
    %v1275 = vmul.f32 %v1271, %v1262
    %v1276 = vmul.f32 %v1274, %v1262
    %v1277 = vadd.f32 %v1275, 1e-05
    %v1278 = vadd.f32 %v1276, 1e-05
    %v1279 = vrsqrt.pop %v1277
    %v1280 = vrsqrt.pop %v1278
    %v1281 = vmul.f32 %v1265, %v1279
    %v1282 = vmul.f32 %v1266, %v1280
    %1283 = vrot.lane.b32.xlu0 %v1183, 112
    %v1284 = vpop.permute.xlu0 %1283
    %v1286 = vmul.f32 %v1281, %v1284
    %v1287 = vmul.f32 %v1282, %v1284
    %1288 = vrot.lane.b32.xlu0 %v1183, 96
    %v1289 = vpop.permute.xlu0 %1288
    %v1291 = vadd.f32 %v1286, %v1289
    %v1292 = vadd.f32 %v1287, %v1289
    %v1293 = vpack.c.bf16 %v1292, %v1291
    %v1294 = vld [vmem:[%s6] sm:$0xf]
    %v1295 = vld [vmem:[%s6 + $0x4] sm:$0xf]
    %v1298 = vunpack.c.l.b16 %v1294
    %v1299 = vunpack.c.l.b16 %v1295
    %v1300 = vpack.c.b16 %v1299, %v1298
    %1302 = vrot.lane.b32.xlu0 %v1183, 80
    %v1303 = vpop.permute.xlu0 %1302
    %v1306 = vsel %vm171, %v1293, 0
    %1308 = vmatprep.subr.bf16.mxu0 0
    %1309 = vmatpush1.bf16.msra.mxu0 %v1300
    %1310 = vmatprep.subr.bf16.mxu0 0
    %1311 = vmatpush1.bf16.msra.mxu0 0
    %1312 = vmatprep.subr.bf16.mxu0 0
    %1313 = vmatpush1.bf16.msra.mxu0 0
    %1314 = vmatprep.subr.bf16.mxu0 0
    %1315 = vmatpush1.bf16.msra.mxu0 0
    %1316 = vmatprep.subr.bf16.mxu0 0
    %1317 = vmatpush1.bf16.msra.mxu0 0
    %1318 = vmatprep.subr.bf16.mxu0 0
    %1319 = vmatpush1.bf16.msra.mxu0 0
    %1320 = vmatprep.subr.bf16.mxu0 0
    %1321 = vmatpush1.bf16.msra.mxu0 0
    %1322 = vmatprep.subr.bf16.mxu0 0
    %1323 = vmatpush1.bf16.msra.mxu0 0
    %1324 = vmatprep.subr.bf16.mxu0 0
    %1325 = vmatpush1.bf16.msra.mxu0 0
    %1326 = vmatprep.subr.bf16.mxu0 0
    %1327 = vmatpush1.bf16.msra.mxu0 0
    %1328 = vmatprep.subr.bf16.mxu0 0
    %1329 = vmatpush1.bf16.msra.mxu0 0
    %1330 = vmatprep.subr.bf16.mxu0 0
    %1331 = vmatpush1.bf16.msra.mxu0 0
    %1332 = vmatprep.subr.bf16.mxu0 0
    %1333 = vmatpush1.bf16.msra.mxu0 0
    %1334 = vmatprep.subr.bf16.mxu0 0
    %1335 = vmatpush1.bf16.msra.mxu0 0
    %1336 = vmatprep.subr.bf16.mxu0 0
    %1337 = vmatpush1.bf16.msra.mxu0 0
    %1338 = vmatprep.subr.bf16.mxu0 0
    %1339 = vmatpush1.bf16.msra.mxu0 0
    %1340 = vmatprep.mubr.bf16.mxu0 0
    %1341 = vmatmul.mubr.bf16.gmra.mrb[0].mxu0 %v1306
    %v1342 = vpop.f32.mrb[0].mxu0
    %v1343 = vadd.f32 %v1303, %v1342
    %v1344 = vpop.f32.mrb[0].mxu0
    %v1345 = vpop.f32.mrb[0].mxu0
    %v1346 = vadd.f32 %v1303, %v1345
    %v1347 = vpop.f32.mrb[0].mxu0
    %1348 = vdwg.mxu0
    %v1349 = vmax.f32 %v1343, 0.0
    %v1350 = vmax.f32 %v1346, 0.0
    %v1351 = vpack.c.bf16 %v1350, %v1349
    %v1352 = vld [vmem:[%s7] sm:$0xf]
    %v1353 = vld [vmem:[%s7 + $0x4] sm:$0xf]
    %v1354 = vld [vmem:[%s7 + $0x8] sm:$0xf]
    %v1355 = vld [vmem:[%s7 + $0xc] sm:$0xf]
    %v1360 = vunpack.c.l.b16 %v1352
    %v1361 = vunpack.c.l.b16 %v1353
    %v1362 = vunpack.c.l.b16 %v1354
    %v1363 = vunpack.c.l.b16 %v1355
    %v1364 = vpack.c.b16 %v1361, %v1360
    %v1365 = vpack.c.b16 %v1363, %v1362
    %1368 = vrot.lane.b32.xlu0 %v1183, 48
    %v1369 = vpop.permute.xlu0 %1368
    %v1372 = vsel %vm1164, %v1351, 0
    %1374 = vmatprep.subr.bf16.mxu0 0
    %1375 = vmatpush1.bf16.msra.mxu0 %v1364
    %1376 = vmatprep.subr.bf16.mxu0 0
    %1377 = vmatpush1.bf16.msra.mxu0 %v1365
    %1378 = vmatprep.subr.bf16.mxu0 0
    %1379 = vmatpush1.bf16.msra.mxu0 0
    %1380 = vmatprep.subr.bf16.mxu0 0
    %1381 = vmatpush1.bf16.msra.mxu0 0
    %1382 = vmatprep.subr.bf16.mxu0 0
    %1383 = vmatpush1.bf16.msra.mxu0 0
    %1384 = vmatprep.subr.bf16.mxu0 0
    %1385 = vmatpush1.bf16.msra.mxu0 0
    %1386 = vmatprep.subr.bf16.mxu0 0
    %1387 = vmatpush1.bf16.msra.mxu0 0
    %1388 = vmatprep.subr.bf16.mxu0 0
    %1389 = vmatpush1.bf16.msra.mxu0 0
    %1390 = vmatprep.subr.bf16.mxu0 0
    %1391 = vmatpush1.bf16.msra.mxu0 0
    %1392 = vmatprep.subr.bf16.mxu0 0
    %1393 = vmatpush1.bf16.msra.mxu0 0
    %1394 = vmatprep.subr.bf16.mxu0 0
    %1395 = vmatpush1.bf16.msra.mxu0 0
    %1396 = vmatprep.subr.bf16.mxu0 0
    %1397 = vmatpush1.bf16.msra.mxu0 0
    %1398 = vmatprep.subr.bf16.mxu0 0
    %1399 = vmatpush1.bf16.msra.mxu0 0
    %1400 = vmatprep.subr.bf16.mxu0 0
    %1401 = vmatpush1.bf16.msra.mxu0 0
    %1402 = vmatprep.subr.bf16.mxu0 0
    %1403 = vmatpush1.bf16.msra.mxu0 0
    %1404 = vmatprep.subr.bf16.mxu0 0
    %1405 = vmatpush1.bf16.msra.mxu0 0
    %1406 = vmatprep.mubr.bf16.mxu0 0
    %1407 = vmatmul.mubr.bf16.gmra.mrb[0].mxu0 %v1372
    %v1408 = vpop.f32.mrb[0].mxu0
    %v1409 = vadd.f32 %v1369, %v1408
    %v1410 = vpop.f32.mrb[0].mxu0
    %v1411 = vpop.f32.mrb[0].mxu0
    %v1412 = vadd.f32 %v1369, %v1411
    %v1413 = vpop.f32.mrb[0].mxu0
    %1414 = vdwg.mxu0
    %v1415 = vadd.f32 %v1409, %v1291
    %v1416 = vadd.f32 %v1412, %v1292
    %v1417 = vsel %vm171, %v1415, 0.0
    %1418 = vadd.xlane.f32.xlu0 %v1417
    %v1419 = vpop.xlane.xlu0 %1418
    %v1420 = vsel %vm171, %v1416, 0.0
    %1421 = vadd.xlane.f32.xlu0 %v1420
    %v1422 = vpop.xlane.xlu0 %1421
    %v1423 = vmul.f32 %v1419, %v1262
    %v1424 = vmul.f32 %v1422, %v1262
    %v1425 = vsub.f32 %v1415, %v1423
    %v1426 = vsub.f32 %v1416, %v1424
    %v1427 = vmul.f32 %v1425, %v1425
    %v1428 = vmul.f32 %v1426, %v1426
    %v1429 = vsel %vm171, %v1427, 0.0
    %1430 = vadd.xlane.f32.xlu0 %v1429
    %v1431 = vpop.xlane.xlu0 %1430
    %v1432 = vsel %vm171, %v1428, 0.0
    %1433 = vadd.xlane.f32.xlu0 %v1432
    %v1434 = vpop.xlane.xlu0 %1433
    %v1435 = vmul.f32 %v1431, %v1262
    %v1436 = vmul.f32 %v1434, %v1262
    %v1437 = vadd.f32 %v1435, 1e-05
    %v1438 = vadd.f32 %v1436, 1e-05
    %v1439 = vrsqrt.pop %v1437
    %v1440 = vrsqrt.pop %v1438
    %v1441 = vmul.f32 %v1425, %v1439
    %v1442 = vmul.f32 %v1426, %v1440
    %1443 = vrot.lane.b32.xlu0 %v1183, 32
    %v1444 = vpop.permute.xlu0 %1443
    %v1446 = vmul.f32 %v1441, %v1444
    %v1447 = vmul.f32 %v1442, %v1444
    %1448 = vrot.lane.b32.xlu0 %v1183, 16
    %v1449 = vpop.permute.xlu0 %1448
    %v1451 = vadd.f32 %v1446, %v1449
    %v1452 = vadd.f32 %v1447, %v1449
    %s1453 = scalar_lea.vmem %s8, 1
    %v1454 = vld [vmem:[%s1453] sm:$0x1]
    %v1455 = vpack.c.bf16 %v1452, %v1451
    %s1456 = scalar_lea.vmem %s3, 16
    %v1457 = vld [vmem:[%s1456] sm:$0xff]
    %v1458 = vld [vmem:[%s1456 + $0x8] sm:$0xff]
    %s1459 = scalar_lea.vmem %s4, 2
    %v1460 = vld [vmem:[%s1459] sm:$0x3]
    %v1462 = vlaneseq
    %v1463 = vshrl.u32 %v1462, 7
    %v1464 = vsub.s32 0, %v1463
    %v1465 = vrot.slane %v1460, %v1464
    %v1466 = vlaneseq
    %v1467 = vshrl.u32 %v1466, 7
    %v1468 = vsub.s32 1, %v1467
    %v1469 = vrot.slane %v1460, %v1468
    %v1474 = vunpack.c.l.b16 %v1457
    %v1475 = vunpack.c.h.b16 %v1457
    %v1476 = vunpack.c.l.b16 %v1458
    %v1477 = vunpack.c.h.b16 %v1458
    %v1478 = vpack.c.b16 %v1476, %v1474
    %v1479 = vpack.c.b16 %v1477, %v1475
    %v1483 = vsel %vm171, %v1455, 0
    %1485 = vmatprep.subr.bf16.mxu0 %v1479
    %1486 = vmatpush1.bf16.msra.mxu0 %v1478
    %1487 = vmatprep.subr.bf16.mxu0 0
    %1488 = vmatpush1.bf16.msra.mxu0 0
    %1489 = vmatprep.subr.bf16.mxu0 0
    %1490 = vmatpush1.bf16.msra.mxu0 0
    %1491 = vmatprep.subr.bf16.mxu0 0
    %1492 = vmatpush1.bf16.msra.mxu0 0
    %1493 = vmatprep.subr.bf16.mxu0 0
    %1494 = vmatpush1.bf16.msra.mxu0 0
    %1495 = vmatprep.subr.bf16.mxu0 0
    %1496 = vmatpush1.bf16.msra.mxu0 0
    %1497 = vmatprep.subr.bf16.mxu0 0
    %1498 = vmatpush1.bf16.msra.mxu0 0
    %1499 = vmatprep.subr.bf16.mxu0 0
    %1500 = vmatpush1.bf16.msra.mxu0 0
    %1501 = vmatprep.subr.bf16.mxu0 0
    %1502 = vmatpush1.bf16.msra.mxu0 0
    %1503 = vmatprep.subr.bf16.mxu0 0
    %1504 = vmatpush1.bf16.msra.mxu0 0
    %1505 = vmatprep.subr.bf16.mxu0 0
    %1506 = vmatpush1.bf16.msra.mxu0 0
    %1507 = vmatprep.subr.bf16.mxu0 0
    %1508 = vmatpush1.bf16.msra.mxu0 0
    %1509 = vmatprep.subr.bf16.mxu0 0
    %1510 = vmatpush1.bf16.msra.mxu0 0
    %1511 = vmatprep.subr.bf16.mxu0 0
    %1512 = vmatpush1.bf16.msra.mxu0 0
    %1513 = vmatprep.subr.bf16.mxu0 0
    %1514 = vmatpush1.bf16.msra.mxu0 0
    %1515 = vmatprep.subr.bf16.mxu0 0
    %1516 = vmatpush1.bf16.msra.mxu0 0
    %1517 = vmatprep.mubr.bf16.mxu0 0
    %1518 = vmatmul.mubr.bf16.gmra.mrb[0].mxu0 %v1483
    %v1519 = vpop.f32.mrb[0].mxu0
    %v1520 = vadd.f32 %v1465, %v1519
    %v1521 = vpop.f32.mrb[0].mxu0
    %v1522 = vadd.f32 %v1469, %v1521
    %v1523 = vpop.f32.mrb[0].mxu0
    %v1524 = vadd.f32 %v1465, %v1523
    %v1525 = vpop.f32.mrb[0].mxu0
    %v1526 = vadd.f32 %v1469, %v1525
    %1527 = vdwg.mxu0
    %1530 = vrot.lane.b32.xlu0 %v1520, 112
    %v1531 = vpop.permute.xlu0 %1530
    %1532 = vrot.lane.b32.xlu0 %v1524, 112
    %v1533 = vpop.permute.xlu0 %1532
    %1536 = vrot.lane.b32.xlu0 %v1520, 96
    %v1537 = vpop.permute.xlu0 %1536
    %1538 = vrot.lane.b32.xlu0 %v1524, 96
    %v1539 = vpop.permute.xlu0 %1538
    %1542 = vrot.lane.b32.xlu0 %v1520, 80
    %v1543 = vpop.permute.xlu0 %1542
    %1544 = vrot.lane.b32.xlu0 %v1524, 80
    %v1545 = vpop.permute.xlu0 %1544
    %1550 = vrot.lane.b32.xlu0 %v1522, 112
    %v1551 = vpop.permute.xlu0 %1550
    %1552 = vrot.lane.b32.xlu0 %v1526, 112
    %v1553 = vpop.permute.xlu0 %1552
    %1556 = vrot.lane.b32.xlu0 %v1522, 96
    %v1557 = vpop.permute.xlu0 %1556
    %1558 = vrot.lane.b32.xlu0 %v1526, 96
    %v1559 = vpop.permute.xlu0 %1558
    %1562 = vrot.lane.b32.xlu0 %v1522, 80
    %v1563 = vpop.permute.xlu0 %1562
    %1564 = vrot.lane.b32.xlu0 %v1526, 80
    %v1565 = vpop.permute.xlu0 %1564
    %v1568 = vpack.c.bf16 %v1520, %v1520
    %v1569 = vpack.c.bf16 %v1524, %v1524
    %v1570 = vpack.c.bf16 %v1531, %v1531
    %v1571 = vpack.c.bf16 %v1533, %v1533
    %v1572 = vpack.c.bf16 %v1537, %v1537
    %v1573 = vpack.c.bf16 %v1539, %v1539
    %v1574 = vpack.c.bf16 %v1543, %v1543
    %v1575 = vpack.c.bf16 %v1545, %v1545
    %1577 = vrot.lane.b32.xlu0 %v1568, 64
    %v1578 = vpop.permute.xlu0 %1577
    %v1580 = vsel %vm171, %v1568, 0
    %v1583 = vsel %vm171, %v1578, 0
    %1585 = vmatprep.subr.bf16.mxu0 0
    %1586 = vmatpush1.bf16.xpose.msra.mxu0 %v1583
    %1587 = vmatprep.subr.bf16.mxu0 0
    %1588 = vmatpush1.bf16.xpose.msra.mxu0 0
    %1589 = vmatprep.subr.bf16.mxu0 0
    %1590 = vmatpush1.bf16.xpose.msra.mxu0 0
    %1591 = vmatprep.subr.bf16.mxu0 0
    %1592 = vmatpush1.bf16.xpose.msra.mxu0 0
    %1593 = vmatprep.subr.bf16.mxu0 0
    %1594 = vmatpush1.bf16.xpose.msra.mxu0 0
    %1595 = vmatprep.subr.bf16.mxu0 0
    %1596 = vmatpush1.bf16.xpose.msra.mxu0 0
    %1597 = vmatprep.subr.bf16.mxu0 0
    %1598 = vmatpush1.bf16.xpose.msra.mxu0 0
    %1599 = vmatprep.subr.bf16.mxu0 0
    %1600 = vmatpush1.bf16.xpose.msra.mxu0 0
    %1601 = vmatprep.subr.bf16.mxu0 0
    %1602 = vmatpush1.bf16.xpose.msra.mxu0 0
    %1603 = vmatprep.subr.bf16.mxu0 0
    %1604 = vmatpush1.bf16.xpose.msra.mxu0 0
    %1605 = vmatprep.subr.bf16.mxu0 0
    %1606 = vmatpush1.bf16.xpose.msra.mxu0 0
    %1607 = vmatprep.subr.bf16.mxu0 0
    %1608 = vmatpush1.bf16.xpose.msra.mxu0 0
    %1609 = vmatprep.subr.bf16.mxu0 0
    %1610 = vmatpush1.bf16.xpose.msra.mxu0 0
    %1611 = vmatprep.subr.bf16.mxu0 0
    %1612 = vmatpush1.bf16.xpose.msra.mxu0 0
    %1613 = vmatprep.subr.bf16.mxu0 0
    %1614 = vmatpush1.bf16.xpose.msra.mxu0 0
    %1615 = vmatprep.subr.bf16.mxu0 0
    %1616 = vmatpush1.bf16.xpose.msra.mxu0 0
    %1617 = vmatprep.mubr.bf16.mxu0 0
    %1618 = vmatmul.mubr.bf16.gmra.mrb[0].mxu0 %v1580
    %v1619 = vpop.f32.mrb[0].mxu0
    %v1620 = vadd.f32 0.0, %v1619
    %v1621 = vpop.f32.mrb[0].mxu0
    %v1622 = vpop.f32.mrb[0].mxu0
    %v1623 = vpop.f32.mrb[0].mxu0
    %1624 = vdwg.mxu0
    %1626 = vrot.lane.b32.xlu0 %v1569, 64
    %v1627 = vpop.permute.xlu0 %1626
    %v1629 = vsel %vm171, %v1569, 0
    %v1632 = vsel %vm171, %v1627, 0
    %1634 = vmatprep.subr.bf16.mxu0 0
    %1635 = vmatpush1.bf16.xpose.msra.mxu0 %v1632
    %1636 = vmatprep.subr.bf16.mxu0 0
    %1637 = vmatpush1.bf16.xpose.msra.mxu0 0
    %1638 = vmatprep.subr.bf16.mxu0 0
    %1639 = vmatpush1.bf16.xpose.msra.mxu0 0
    %1640 = vmatprep.subr.bf16.mxu0 0
    %1641 = vmatpush1.bf16.xpose.msra.mxu0 0
    %1642 = vmatprep.subr.bf16.mxu0 0
    %1643 = vmatpush1.bf16.xpose.msra.mxu0 0
    %1644 = vmatprep.subr.bf16.mxu0 0
    %1645 = vmatpush1.bf16.xpose.msra.mxu0 0
    %1646 = vmatprep.subr.bf16.mxu0 0
    %1647 = vmatpush1.bf16.xpose.msra.mxu0 0
    %1648 = vmatprep.subr.bf16.mxu0 0
    %1649 = vmatpush1.bf16.xpose.msra.mxu0 0
    %1650 = vmatprep.subr.bf16.mxu0 0
    %1651 = vmatpush1.bf16.xpose.msra.mxu0 0
    %1652 = vmatprep.subr.bf16.mxu0 0
    %1653 = vmatpush1.bf16.xpose.msra.mxu0 0
    %1654 = vmatprep.subr.bf16.mxu0 0
    %1655 = vmatpush1.bf16.xpose.msra.mxu0 0
    %1656 = vmatprep.subr.bf16.mxu0 0
    %1657 = vmatpush1.bf16.xpose.msra.mxu0 0
    %1658 = vmatprep.subr.bf16.mxu0 0
    %1659 = vmatpush1.bf16.xpose.msra.mxu0 0
    %1660 = vmatprep.subr.bf16.mxu0 0
    %1661 = vmatpush1.bf16.xpose.msra.mxu0 0
    %1662 = vmatprep.subr.bf16.mxu0 0
    %1663 = vmatpush1.bf16.xpose.msra.mxu0 0
    %1664 = vmatprep.subr.bf16.mxu0 0
    %1665 = vmatpush1.bf16.xpose.msra.mxu0 0
    %1666 = vmatprep.mubr.bf16.mxu0 0
    %1667 = vmatmul.mubr.bf16.gmra.mrb[0].mxu0 %v1629
    %v1668 = vpop.f32.mrb[0].mxu0
    %v1669 = vadd.f32 0.0, %v1668
    %v1670 = vpop.f32.mrb[0].mxu0
    %v1671 = vpop.f32.mrb[0].mxu0
    %v1672 = vpop.f32.mrb[0].mxu0
    %1673 = vdwg.mxu0
    %1675 = vrot.lane.b32.xlu0 %v1570, 64
    %v1676 = vpop.permute.xlu0 %1675
    %v1678 = vsel %vm171, %v1570, 0
    %v1681 = vsel %vm171, %v1676, 0
    %1683 = vmatprep.subr.bf16.mxu0 0
    %1684 = vmatpush1.bf16.xpose.msra.mxu0 %v1681
    %1685 = vmatprep.subr.bf16.mxu0 0
    %1686 = vmatpush1.bf16.xpose.msra.mxu0 0
    %1687 = vmatprep.subr.bf16.mxu0 0
    %1688 = vmatpush1.bf16.xpose.msra.mxu0 0
    %1689 = vmatprep.subr.bf16.mxu0 0
    %1690 = vmatpush1.bf16.xpose.msra.mxu0 0
    %1691 = vmatprep.subr.bf16.mxu0 0
    %1692 = vmatpush1.bf16.xpose.msra.mxu0 0
    %1693 = vmatprep.subr.bf16.mxu0 0
    %1694 = vmatpush1.bf16.xpose.msra.mxu0 0
    %1695 = vmatprep.subr.bf16.mxu0 0
    %1696 = vmatpush1.bf16.xpose.msra.mxu0 0
    %1697 = vmatprep.subr.bf16.mxu0 0
    %1698 = vmatpush1.bf16.xpose.msra.mxu0 0
    %1699 = vmatprep.subr.bf16.mxu0 0
    %1700 = vmatpush1.bf16.xpose.msra.mxu0 0
    %1701 = vmatprep.subr.bf16.mxu0 0
    %1702 = vmatpush1.bf16.xpose.msra.mxu0 0
    %1703 = vmatprep.subr.bf16.mxu0 0
    %1704 = vmatpush1.bf16.xpose.msra.mxu0 0
    %1705 = vmatprep.subr.bf16.mxu0 0
    %1706 = vmatpush1.bf16.xpose.msra.mxu0 0
    %1707 = vmatprep.subr.bf16.mxu0 0
    %1708 = vmatpush1.bf16.xpose.msra.mxu0 0
    %1709 = vmatprep.subr.bf16.mxu0 0
    %1710 = vmatpush1.bf16.xpose.msra.mxu0 0
    %1711 = vmatprep.subr.bf16.mxu0 0
    %1712 = vmatpush1.bf16.xpose.msra.mxu0 0
    %1713 = vmatprep.subr.bf16.mxu0 0
    %1714 = vmatpush1.bf16.xpose.msra.mxu0 0
    %1715 = vmatprep.mubr.bf16.mxu0 0
    %1716 = vmatmul.mubr.bf16.gmra.mrb[0].mxu0 %v1678
    %v1717 = vpop.f32.mrb[0].mxu0
    %v1718 = vadd.f32 0.0, %v1717
    %v1719 = vpop.f32.mrb[0].mxu0
    %v1720 = vpop.f32.mrb[0].mxu0
    %v1721 = vpop.f32.mrb[0].mxu0
    %1722 = vdwg.mxu0
    %1724 = vrot.lane.b32.xlu0 %v1571, 64
    %v1725 = vpop.permute.xlu0 %1724
    %v1727 = vsel %vm171, %v1571, 0
    %v1730 = vsel %vm171, %v1725, 0
    %1732 = vmatprep.subr.bf16.mxu0 0
    %1733 = vmatpush1.bf16.xpose.msra.mxu0 %v1730
    %1734 = vmatprep.subr.bf16.mxu0 0
    %1735 = vmatpush1.bf16.xpose.msra.mxu0 0
    %1736 = vmatprep.subr.bf16.mxu0 0
    %1737 = vmatpush1.bf16.xpose.msra.mxu0 0
    %1738 = vmatprep.subr.bf16.mxu0 0
    %1739 = vmatpush1.bf16.xpose.msra.mxu0 0
    %1740 = vmatprep.subr.bf16.mxu0 0
    %1741 = vmatpush1.bf16.xpose.msra.mxu0 0
    %1742 = vmatprep.subr.bf16.mxu0 0
    %1743 = vmatpush1.bf16.xpose.msra.mxu0 0
    %1744 = vmatprep.subr.bf16.mxu0 0
    %1745 = vmatpush1.bf16.xpose.msra.mxu0 0
    %1746 = vmatprep.subr.bf16.mxu0 0
    %1747 = vmatpush1.bf16.xpose.msra.mxu0 0
    %1748 = vmatprep.subr.bf16.mxu0 0
    %1749 = vmatpush1.bf16.xpose.msra.mxu0 0
    %1750 = vmatprep.subr.bf16.mxu0 0
    %1751 = vmatpush1.bf16.xpose.msra.mxu0 0
    %1752 = vmatprep.subr.bf16.mxu0 0
    %1753 = vmatpush1.bf16.xpose.msra.mxu0 0
    %1754 = vmatprep.subr.bf16.mxu0 0
    %1755 = vmatpush1.bf16.xpose.msra.mxu0 0
    %1756 = vmatprep.subr.bf16.mxu0 0
    %1757 = vmatpush1.bf16.xpose.msra.mxu0 0
    %1758 = vmatprep.subr.bf16.mxu0 0
    %1759 = vmatpush1.bf16.xpose.msra.mxu0 0
    %1760 = vmatprep.subr.bf16.mxu0 0
    %1761 = vmatpush1.bf16.xpose.msra.mxu0 0
    %1762 = vmatprep.subr.bf16.mxu0 0
    %1763 = vmatpush1.bf16.xpose.msra.mxu0 0
    %1764 = vmatprep.mubr.bf16.mxu0 0
    %1765 = vmatmul.mubr.bf16.gmra.mrb[0].mxu0 %v1727
    %v1766 = vpop.f32.mrb[0].mxu0
    %v1767 = vadd.f32 0.0, %v1766
    %v1768 = vpop.f32.mrb[0].mxu0
    %v1769 = vpop.f32.mrb[0].mxu0
    %v1770 = vpop.f32.mrb[0].mxu0
    %1771 = vdwg.mxu0
    %1773 = vrot.lane.b32.xlu0 %v1572, 64
    %v1774 = vpop.permute.xlu0 %1773
    %v1776 = vsel %vm171, %v1572, 0
    %v1779 = vsel %vm171, %v1774, 0
    %1781 = vmatprep.subr.bf16.mxu0 0
    %1782 = vmatpush1.bf16.xpose.msra.mxu0 %v1779
    %1783 = vmatprep.subr.bf16.mxu0 0
    %1784 = vmatpush1.bf16.xpose.msra.mxu0 0
    %1785 = vmatprep.subr.bf16.mxu0 0
    %1786 = vmatpush1.bf16.xpose.msra.mxu0 0
    %1787 = vmatprep.subr.bf16.mxu0 0
    %1788 = vmatpush1.bf16.xpose.msra.mxu0 0
    %1789 = vmatprep.subr.bf16.mxu0 0
    %1790 = vmatpush1.bf16.xpose.msra.mxu0 0
    %1791 = vmatprep.subr.bf16.mxu0 0
    %1792 = vmatpush1.bf16.xpose.msra.mxu0 0
    %1793 = vmatprep.subr.bf16.mxu0 0
    %1794 = vmatpush1.bf16.xpose.msra.mxu0 0
    %1795 = vmatprep.subr.bf16.mxu0 0
    %1796 = vmatpush1.bf16.xpose.msra.mxu0 0
    %1797 = vmatprep.subr.bf16.mxu0 0
    %1798 = vmatpush1.bf16.xpose.msra.mxu0 0
    %1799 = vmatprep.subr.bf16.mxu0 0
    %1800 = vmatpush1.bf16.xpose.msra.mxu0 0
    %1801 = vmatprep.subr.bf16.mxu0 0
    %1802 = vmatpush1.bf16.xpose.msra.mxu0 0
    %1803 = vmatprep.subr.bf16.mxu0 0
    %1804 = vmatpush1.bf16.xpose.msra.mxu0 0
    %1805 = vmatprep.subr.bf16.mxu0 0
    %1806 = vmatpush1.bf16.xpose.msra.mxu0 0
    %1807 = vmatprep.subr.bf16.mxu0 0
    %1808 = vmatpush1.bf16.xpose.msra.mxu0 0
    %1809 = vmatprep.subr.bf16.mxu0 0
    %1810 = vmatpush1.bf16.xpose.msra.mxu0 0
    %1811 = vmatprep.subr.bf16.mxu0 0
    %1812 = vmatpush1.bf16.xpose.msra.mxu0 0
    %1813 = vmatprep.mubr.bf16.mxu0 0
    %1814 = vmatmul.mubr.bf16.gmra.mrb[0].mxu0 %v1776
    %v1815 = vpop.f32.mrb[0].mxu0
    %v1816 = vadd.f32 0.0, %v1815
    %v1817 = vpop.f32.mrb[0].mxu0
    %v1818 = vpop.f32.mrb[0].mxu0
    %v1819 = vpop.f32.mrb[0].mxu0
    %1820 = vdwg.mxu0
    %1822 = vrot.lane.b32.xlu0 %v1573, 64
    %v1823 = vpop.permute.xlu0 %1822
    %v1825 = vsel %vm171, %v1573, 0
    %v1828 = vsel %vm171, %v1823, 0
    %1830 = vmatprep.subr.bf16.mxu0 0
    %1831 = vmatpush1.bf16.xpose.msra.mxu0 %v1828
    %1832 = vmatprep.subr.bf16.mxu0 0
    %1833 = vmatpush1.bf16.xpose.msra.mxu0 0
    %1834 = vmatprep.subr.bf16.mxu0 0
    %1835 = vmatpush1.bf16.xpose.msra.mxu0 0
    %1836 = vmatprep.subr.bf16.mxu0 0
    %1837 = vmatpush1.bf16.xpose.msra.mxu0 0
    %1838 = vmatprep.subr.bf16.mxu0 0
    %1839 = vmatpush1.bf16.xpose.msra.mxu0 0
    %1840 = vmatprep.subr.bf16.mxu0 0
    %1841 = vmatpush1.bf16.xpose.msra.mxu0 0
    %1842 = vmatprep.subr.bf16.mxu0 0
    %1843 = vmatpush1.bf16.xpose.msra.mxu0 0
    %1844 = vmatprep.subr.bf16.mxu0 0
    %1845 = vmatpush1.bf16.xpose.msra.mxu0 0
    %1846 = vmatprep.subr.bf16.mxu0 0
    %1847 = vmatpush1.bf16.xpose.msra.mxu0 0
    %1848 = vmatprep.subr.bf16.mxu0 0
    %1849 = vmatpush1.bf16.xpose.msra.mxu0 0
    %1850 = vmatprep.subr.bf16.mxu0 0
    %1851 = vmatpush1.bf16.xpose.msra.mxu0 0
    %1852 = vmatprep.subr.bf16.mxu0 0
    %1853 = vmatpush1.bf16.xpose.msra.mxu0 0
    %1854 = vmatprep.subr.bf16.mxu0 0
    %1855 = vmatpush1.bf16.xpose.msra.mxu0 0
    %1856 = vmatprep.subr.bf16.mxu0 0
    %1857 = vmatpush1.bf16.xpose.msra.mxu0 0
    %1858 = vmatprep.subr.bf16.mxu0 0
    %1859 = vmatpush1.bf16.xpose.msra.mxu0 0
    %1860 = vmatprep.subr.bf16.mxu0 0
    %1861 = vmatpush1.bf16.xpose.msra.mxu0 0
    %1862 = vmatprep.mubr.bf16.mxu0 0
    %1863 = vmatmul.mubr.bf16.gmra.mrb[0].mxu0 %v1825
    %v1864 = vpop.f32.mrb[0].mxu0
    %v1865 = vadd.f32 0.0, %v1864
    %v1866 = vpop.f32.mrb[0].mxu0
    %v1867 = vpop.f32.mrb[0].mxu0
    %v1868 = vpop.f32.mrb[0].mxu0
    %1869 = vdwg.mxu0
    %1871 = vrot.lane.b32.xlu0 %v1574, 64
    %v1872 = vpop.permute.xlu0 %1871
    %v1874 = vsel %vm171, %v1574, 0
    %v1877 = vsel %vm171, %v1872, 0
    %1879 = vmatprep.subr.bf16.mxu0 0
    %1880 = vmatpush1.bf16.xpose.msra.mxu0 %v1877
    %1881 = vmatprep.subr.bf16.mxu0 0
    %1882 = vmatpush1.bf16.xpose.msra.mxu0 0
    %1883 = vmatprep.subr.bf16.mxu0 0
    %1884 = vmatpush1.bf16.xpose.msra.mxu0 0
    %1885 = vmatprep.subr.bf16.mxu0 0
    %1886 = vmatpush1.bf16.xpose.msra.mxu0 0
    %1887 = vmatprep.subr.bf16.mxu0 0
    %1888 = vmatpush1.bf16.xpose.msra.mxu0 0
    %1889 = vmatprep.subr.bf16.mxu0 0
    %1890 = vmatpush1.bf16.xpose.msra.mxu0 0
    %1891 = vmatprep.subr.bf16.mxu0 0
    %1892 = vmatpush1.bf16.xpose.msra.mxu0 0
    %1893 = vmatprep.subr.bf16.mxu0 0
    %1894 = vmatpush1.bf16.xpose.msra.mxu0 0
    %1895 = vmatprep.subr.bf16.mxu0 0
    %1896 = vmatpush1.bf16.xpose.msra.mxu0 0
    %1897 = vmatprep.subr.bf16.mxu0 0
    %1898 = vmatpush1.bf16.xpose.msra.mxu0 0
    %1899 = vmatprep.subr.bf16.mxu0 0
    %1900 = vmatpush1.bf16.xpose.msra.mxu0 0
    %1901 = vmatprep.subr.bf16.mxu0 0
    %1902 = vmatpush1.bf16.xpose.msra.mxu0 0
    %1903 = vmatprep.subr.bf16.mxu0 0
    %1904 = vmatpush1.bf16.xpose.msra.mxu0 0
    %1905 = vmatprep.subr.bf16.mxu0 0
    %1906 = vmatpush1.bf16.xpose.msra.mxu0 0
    %1907 = vmatprep.subr.bf16.mxu0 0
    %1908 = vmatpush1.bf16.xpose.msra.mxu0 0
    %1909 = vmatprep.subr.bf16.mxu0 0
    %1910 = vmatpush1.bf16.xpose.msra.mxu0 0
    %1911 = vmatprep.mubr.bf16.mxu0 0
    %1912 = vmatmul.mubr.bf16.gmra.mrb[0].mxu0 %v1874
    %v1913 = vpop.f32.mrb[0].mxu0
    %v1914 = vadd.f32 0.0, %v1913
    %v1915 = vpop.f32.mrb[0].mxu0
    %v1916 = vpop.f32.mrb[0].mxu0
    %v1917 = vpop.f32.mrb[0].mxu0
    %1918 = vdwg.mxu0
    %1920 = vrot.lane.b32.xlu0 %v1575, 64
    %v1921 = vpop.permute.xlu0 %1920
    %v1923 = vsel %vm171, %v1575, 0
    %v1926 = vsel %vm171, %v1921, 0
    %1928 = vmatprep.subr.bf16.mxu0 0
    %1929 = vmatpush1.bf16.xpose.msra.mxu0 %v1926
    %1930 = vmatprep.subr.bf16.mxu0 0
    %1931 = vmatpush1.bf16.xpose.msra.mxu0 0
    %1932 = vmatprep.subr.bf16.mxu0 0
    %1933 = vmatpush1.bf16.xpose.msra.mxu0 0
    %1934 = vmatprep.subr.bf16.mxu0 0
    %1935 = vmatpush1.bf16.xpose.msra.mxu0 0
    %1936 = vmatprep.subr.bf16.mxu0 0
    %1937 = vmatpush1.bf16.xpose.msra.mxu0 0
    %1938 = vmatprep.subr.bf16.mxu0 0
    %1939 = vmatpush1.bf16.xpose.msra.mxu0 0
    %1940 = vmatprep.subr.bf16.mxu0 0
    %1941 = vmatpush1.bf16.xpose.msra.mxu0 0
    %1942 = vmatprep.subr.bf16.mxu0 0
    %1943 = vmatpush1.bf16.xpose.msra.mxu0 0
    %1944 = vmatprep.subr.bf16.mxu0 0
    %1945 = vmatpush1.bf16.xpose.msra.mxu0 0
    %1946 = vmatprep.subr.bf16.mxu0 0
    %1947 = vmatpush1.bf16.xpose.msra.mxu0 0
    %1948 = vmatprep.subr.bf16.mxu0 0
    %1949 = vmatpush1.bf16.xpose.msra.mxu0 0
    %1950 = vmatprep.subr.bf16.mxu0 0
    %1951 = vmatpush1.bf16.xpose.msra.mxu0 0
    %1952 = vmatprep.subr.bf16.mxu0 0
    %1953 = vmatpush1.bf16.xpose.msra.mxu0 0
    %1954 = vmatprep.subr.bf16.mxu0 0
    %1955 = vmatpush1.bf16.xpose.msra.mxu0 0
    %1956 = vmatprep.subr.bf16.mxu0 0
    %1957 = vmatpush1.bf16.xpose.msra.mxu0 0
    %1958 = vmatprep.subr.bf16.mxu0 0
    %1959 = vmatpush1.bf16.xpose.msra.mxu0 0
    %1960 = vmatprep.mubr.bf16.mxu0 0
    %1961 = vmatmul.mubr.bf16.gmra.mrb[0].mxu0 %v1923
    %v1962 = vpop.f32.mrb[0].mxu0
    %v1963 = vadd.f32 0.0, %v1962
    %v1964 = vpop.f32.mrb[0].mxu0
    %v1965 = vpop.f32.mrb[0].mxu0
    %v1966 = vpop.f32.mrb[0].mxu0
    %1967 = vdwg.mxu0
    %v1968 = vmul.f32 %v1620, 0.25
    %v1969 = vmul.f32 %v1669, 0.25
    %v1970 = vmul.f32 %v1718, 0.25
    %v1971 = vmul.f32 %v1767, 0.25
    %v1972 = vmul.f32 %v1816, 0.25
    %v1973 = vmul.f32 %v1865, 0.25
    %v1974 = vmul.f32 %v1914, 0.25
    %v1975 = vmul.f32 %v1963, 0.25
    %v1976 = vsel %vm51, %v1968, -inf
    %1977 = vmax.xlane.f32.xlu0 %v1976
    %v1978 = vpop.xlane.xlu0 %1977
    %v1979 = vsel %vm51, %v1969, -inf
    %1980 = vmax.xlane.f32.xlu0 %v1979
    %v1981 = vpop.xlane.xlu0 %1980
    %v1982 = vsel %vm51, %v1970, -inf
    %1983 = vmax.xlane.f32.xlu0 %v1982
    %v1984 = vpop.xlane.xlu0 %1983
    %v1985 = vsel %vm51, %v1971, -inf
    %1986 = vmax.xlane.f32.xlu0 %v1985
    %v1987 = vpop.xlane.xlu0 %1986
    %v1988 = vsel %vm51, %v1972, -inf
    %1989 = vmax.xlane.f32.xlu0 %v1988
    %v1990 = vpop.xlane.xlu0 %1989
    %v1991 = vsel %vm51, %v1973, -inf
    %1992 = vmax.xlane.f32.xlu0 %v1991
    %v1993 = vpop.xlane.xlu0 %1992
    %v1994 = vsel %vm51, %v1974, -inf
    %1995 = vmax.xlane.f32.xlu0 %v1994
    %v1996 = vpop.xlane.xlu0 %1995
    %v1997 = vsel %vm51, %v1975, -inf
    %1998 = vmax.xlane.f32.xlu0 %v1997
    %v1999 = vpop.xlane.xlu0 %1998
    %v2000 = vsub.f32 %v1968, %v1978
    %v2001 = vsub.f32 %v1969, %v1981
    %v2002 = vsub.f32 %v1970, %v1984
    %v2003 = vsub.f32 %v1971, %v1987
    %v2004 = vsub.f32 %v1972, %v1990
    %v2005 = vsub.f32 %v1973, %v1993
    %v2006 = vsub.f32 %v1974, %v1996
    %v2007 = vsub.f32 %v1975, %v1999
    %v2008 = vmul.f32 %v2000, 1.442695
    %v2009 = vpow.pop %v2008
    %v2010 = vmul.f32 %v2001, 1.442695
    %v2011 = vpow.pop %v2010
    %v2012 = vmul.f32 %v2002, 1.442695
    %v2013 = vpow.pop %v2012
    %v2014 = vmul.f32 %v2003, 1.442695
    %v2015 = vpow.pop %v2014
    %v2016 = vmul.f32 %v2004, 1.442695
    %v2017 = vpow.pop %v2016
    %v2018 = vmul.f32 %v2005, 1.442695
    %v2019 = vpow.pop %v2018
    %v2020 = vmul.f32 %v2006, 1.442695
    %v2021 = vpow.pop %v2020
    %v2022 = vmul.f32 %v2007, 1.442695
    %v2023 = vpow.pop %v2022
    %v2024 = vsel %vm51, %v2009, 0.0
    %2025 = vadd.xlane.f32.xlu0 %v2024
    %v2026 = vpop.xlane.xlu0 %2025
    %v2027 = vsel %vm51, %v2011, 0.0
    %2028 = vadd.xlane.f32.xlu0 %v2027
    %v2029 = vpop.xlane.xlu0 %2028
    %v2030 = vsel %vm51, %v2013, 0.0
    %2031 = vadd.xlane.f32.xlu0 %v2030
    %v2032 = vpop.xlane.xlu0 %2031
    %v2033 = vsel %vm51, %v2015, 0.0
    %2034 = vadd.xlane.f32.xlu0 %v2033
    %v2035 = vpop.xlane.xlu0 %2034
    %v2036 = vsel %vm51, %v2017, 0.0
    %2037 = vadd.xlane.f32.xlu0 %v2036
    %v2038 = vpop.xlane.xlu0 %2037
    %v2039 = vsel %vm51, %v2019, 0.0
    %2040 = vadd.xlane.f32.xlu0 %v2039
    %v2041 = vpop.xlane.xlu0 %2040
    %v2042 = vsel %vm51, %v2021, 0.0
    %2043 = vadd.xlane.f32.xlu0 %v2042
    %v2044 = vpop.xlane.xlu0 %2043
    %v2045 = vsel %vm51, %v2023, 0.0
    %2046 = vadd.xlane.f32.xlu0 %v2045
    %v2047 = vpop.xlane.xlu0 %2046
    %v2048 = vrcp.pop %v2026
    %v2049 = vrcp.pop %v2029
    %v2050 = vrcp.pop %v2032
    %v2051 = vrcp.pop %v2035
    %v2052 = vrcp.pop %v2038
    %v2053 = vrcp.pop %v2041
    %v2054 = vrcp.pop %v2044
    %v2055 = vrcp.pop %v2047
    %v2056 = vmul.f32 %v2009, %v2048
    %v2057 = vmul.f32 %v2011, %v2049
    %v2058 = vmul.f32 %v2013, %v2050
    %v2059 = vmul.f32 %v2015, %v2051
    %v2060 = vmul.f32 %v2017, %v2052
    %v2061 = vmul.f32 %v2019, %v2053
    %v2062 = vmul.f32 %v2021, %v2054
    %v2063 = vmul.f32 %v2023, %v2055
    %v2064 = vpack.c.bf16 %v2056, %v2056
    %v2065 = vpack.c.bf16 %v2057, %v2057
    %v2066 = vpack.c.bf16 %v2058, %v2058
    %v2067 = vpack.c.bf16 %v2059, %v2059
    %v2068 = vpack.c.bf16 %v2060, %v2060
    %v2069 = vpack.c.bf16 %v2061, %v2061
    %v2070 = vpack.c.bf16 %v2062, %v2062
    %v2071 = vpack.c.bf16 %v2063, %v2063
    %v2072 = vpack.c.bf16 %v1522, %v1522
    %v2073 = vpack.c.bf16 %v1526, %v1526
    %v2074 = vpack.c.bf16 %v1551, %v1551
    %v2075 = vpack.c.bf16 %v1553, %v1553
    %v2076 = vpack.c.bf16 %v1557, %v1557
    %v2077 = vpack.c.bf16 %v1559, %v1559
    %v2078 = vpack.c.bf16 %v1563, %v1563
    %v2079 = vpack.c.bf16 %v1565, %v1565
    %v2081 = vsel %vm51, %v2064, 0
    %v2084 = vsel %vm55, %v2072, 0
    %2086 = vmatprep.subr.bf16.mxu0 0
    %2087 = vmatpush1.bf16.msra.mxu0 %v2084
    %2088 = vmatprep.subr.bf16.mxu0 0
    %2089 = vmatpush1.bf16.msra.mxu0 0
    %2090 = vmatprep.subr.bf16.mxu0 0
    %2091 = vmatpush1.bf16.msra.mxu0 0
    %2092 = vmatprep.subr.bf16.mxu0 0
    %2093 = vmatpush1.bf16.msra.mxu0 0
    %2094 = vmatprep.subr.bf16.mxu0 0
    %2095 = vmatpush1.bf16.msra.mxu0 0
    %2096 = vmatprep.subr.bf16.mxu0 0
    %2097 = vmatpush1.bf16.msra.mxu0 0
    %2098 = vmatprep.subr.bf16.mxu0 0
    %2099 = vmatpush1.bf16.msra.mxu0 0
    %2100 = vmatprep.subr.bf16.mxu0 0
    %2101 = vmatpush1.bf16.msra.mxu0 0
    %2102 = vmatprep.subr.bf16.mxu0 0
    %2103 = vmatpush1.bf16.msra.mxu0 0
    %2104 = vmatprep.subr.bf16.mxu0 0
    %2105 = vmatpush1.bf16.msra.mxu0 0
    %2106 = vmatprep.subr.bf16.mxu0 0
    %2107 = vmatpush1.bf16.msra.mxu0 0
    %2108 = vmatprep.subr.bf16.mxu0 0
    %2109 = vmatpush1.bf16.msra.mxu0 0
    %2110 = vmatprep.subr.bf16.mxu0 0
    %2111 = vmatpush1.bf16.msra.mxu0 0
    %2112 = vmatprep.subr.bf16.mxu0 0
    %2113 = vmatpush1.bf16.msra.mxu0 0
    %2114 = vmatprep.subr.bf16.mxu0 0
    %2115 = vmatpush1.bf16.msra.mxu0 0
    %2116 = vmatprep.subr.bf16.mxu0 0
    %2117 = vmatpush1.bf16.msra.mxu0 0
    %2118 = vmatprep.mubr.bf16.mxu0 0
    %2119 = vmatmul.mubr.bf16.gmra.mrb[0].mxu0 %v2081
    %v2120 = vpop.f32.mrb[0].mxu0
    %v2121 = vadd.f32 0.0, %v2120
    %v2122 = vpop.f32.mrb[0].mxu0
    %v2123 = vpop.f32.mrb[0].mxu0
    %v2124 = vpop.f32.mrb[0].mxu0
    %2125 = vdwg.mxu0
    %v2127 = vsel %vm51, %v2065, 0
    %v2130 = vsel %vm55, %v2073, 0
    %2132 = vmatprep.subr.bf16.mxu0 0
    %2133 = vmatpush1.bf16.msra.mxu0 %v2130
    %2134 = vmatprep.subr.bf16.mxu0 0
    %2135 = vmatpush1.bf16.msra.mxu0 0
    %2136 = vmatprep.subr.bf16.mxu0 0
    %2137 = vmatpush1.bf16.msra.mxu0 0
    %2138 = vmatprep.subr.bf16.mxu0 0
    %2139 = vmatpush1.bf16.msra.mxu0 0
    %2140 = vmatprep.subr.bf16.mxu0 0
    %2141 = vmatpush1.bf16.msra.mxu0 0
    %2142 = vmatprep.subr.bf16.mxu0 0
    %2143 = vmatpush1.bf16.msra.mxu0 0
    %2144 = vmatprep.subr.bf16.mxu0 0
    %2145 = vmatpush1.bf16.msra.mxu0 0
    %2146 = vmatprep.subr.bf16.mxu0 0
    %2147 = vmatpush1.bf16.msra.mxu0 0
    %2148 = vmatprep.subr.bf16.mxu0 0
    %2149 = vmatpush1.bf16.msra.mxu0 0
    %2150 = vmatprep.subr.bf16.mxu0 0
    %2151 = vmatpush1.bf16.msra.mxu0 0
    %2152 = vmatprep.subr.bf16.mxu0 0
    %2153 = vmatpush1.bf16.msra.mxu0 0
    %2154 = vmatprep.subr.bf16.mxu0 0
    %2155 = vmatpush1.bf16.msra.mxu0 0
    %2156 = vmatprep.subr.bf16.mxu0 0
    %2157 = vmatpush1.bf16.msra.mxu0 0
    %2158 = vmatprep.subr.bf16.mxu0 0
    %2159 = vmatpush1.bf16.msra.mxu0 0
    %2160 = vmatprep.subr.bf16.mxu0 0
    %2161 = vmatpush1.bf16.msra.mxu0 0
    %2162 = vmatprep.subr.bf16.mxu0 0
    %2163 = vmatpush1.bf16.msra.mxu0 0
    %2164 = vmatprep.mubr.bf16.mxu0 0
    %2165 = vmatmul.mubr.bf16.gmra.mrb[0].mxu0 %v2127
    %v2166 = vpop.f32.mrb[0].mxu0
    %v2167 = vadd.f32 0.0, %v2166
    %v2168 = vpop.f32.mrb[0].mxu0
    %v2169 = vpop.f32.mrb[0].mxu0
    %v2170 = vpop.f32.mrb[0].mxu0
    %2171 = vdwg.mxu0
    %v2173 = vsel %vm51, %v2066, 0
    %v2176 = vsel %vm55, %v2074, 0
    %2178 = vmatprep.subr.bf16.mxu0 0
    %2179 = vmatpush1.bf16.msra.mxu0 %v2176
    %2180 = vmatprep.subr.bf16.mxu0 0
    %2181 = vmatpush1.bf16.msra.mxu0 0
    %2182 = vmatprep.subr.bf16.mxu0 0
    %2183 = vmatpush1.bf16.msra.mxu0 0
    %2184 = vmatprep.subr.bf16.mxu0 0
    %2185 = vmatpush1.bf16.msra.mxu0 0
    %2186 = vmatprep.subr.bf16.mxu0 0
    %2187 = vmatpush1.bf16.msra.mxu0 0
    %2188 = vmatprep.subr.bf16.mxu0 0
    %2189 = vmatpush1.bf16.msra.mxu0 0
    %2190 = vmatprep.subr.bf16.mxu0 0
    %2191 = vmatpush1.bf16.msra.mxu0 0
    %2192 = vmatprep.subr.bf16.mxu0 0
    %2193 = vmatpush1.bf16.msra.mxu0 0
    %2194 = vmatprep.subr.bf16.mxu0 0
    %2195 = vmatpush1.bf16.msra.mxu0 0
    %2196 = vmatprep.subr.bf16.mxu0 0
    %2197 = vmatpush1.bf16.msra.mxu0 0
    %2198 = vmatprep.subr.bf16.mxu0 0
    %2199 = vmatpush1.bf16.msra.mxu0 0
    %2200 = vmatprep.subr.bf16.mxu0 0
    %2201 = vmatpush1.bf16.msra.mxu0 0
    %2202 = vmatprep.subr.bf16.mxu0 0
    %2203 = vmatpush1.bf16.msra.mxu0 0
    %2204 = vmatprep.subr.bf16.mxu0 0
    %2205 = vmatpush1.bf16.msra.mxu0 0
    %2206 = vmatprep.subr.bf16.mxu0 0
    %2207 = vmatpush1.bf16.msra.mxu0 0
    %2208 = vmatprep.subr.bf16.mxu0 0
    %2209 = vmatpush1.bf16.msra.mxu0 0
    %2210 = vmatprep.mubr.bf16.mxu0 0
    %2211 = vmatmul.mubr.bf16.gmra.mrb[0].mxu0 %v2173
    %v2212 = vpop.f32.mrb[0].mxu0
    %v2213 = vadd.f32 0.0, %v2212
    %v2214 = vpop.f32.mrb[0].mxu0
    %v2215 = vpop.f32.mrb[0].mxu0
    %v2216 = vpop.f32.mrb[0].mxu0
    %2217 = vdwg.mxu0
    %v2219 = vsel %vm51, %v2067, 0
    %v2222 = vsel %vm55, %v2075, 0
    %2224 = vmatprep.subr.bf16.mxu0 0
    %2225 = vmatpush1.bf16.msra.mxu0 %v2222
    %2226 = vmatprep.subr.bf16.mxu0 0
    %2227 = vmatpush1.bf16.msra.mxu0 0
    %2228 = vmatprep.subr.bf16.mxu0 0
    %2229 = vmatpush1.bf16.msra.mxu0 0
    %2230 = vmatprep.subr.bf16.mxu0 0
    %2231 = vmatpush1.bf16.msra.mxu0 0
    %2232 = vmatprep.subr.bf16.mxu0 0
    %2233 = vmatpush1.bf16.msra.mxu0 0
    %2234 = vmatprep.subr.bf16.mxu0 0
    %2235 = vmatpush1.bf16.msra.mxu0 0
    %2236 = vmatprep.subr.bf16.mxu0 0
    %2237 = vmatpush1.bf16.msra.mxu0 0
    %2238 = vmatprep.subr.bf16.mxu0 0
    %2239 = vmatpush1.bf16.msra.mxu0 0
    %2240 = vmatprep.subr.bf16.mxu0 0
    %2241 = vmatpush1.bf16.msra.mxu0 0
    %2242 = vmatprep.subr.bf16.mxu0 0
    %2243 = vmatpush1.bf16.msra.mxu0 0
    %2244 = vmatprep.subr.bf16.mxu0 0
    %2245 = vmatpush1.bf16.msra.mxu0 0
    %2246 = vmatprep.subr.bf16.mxu0 0
    %2247 = vmatpush1.bf16.msra.mxu0 0
    %2248 = vmatprep.subr.bf16.mxu0 0
    %2249 = vmatpush1.bf16.msra.mxu0 0
    %2250 = vmatprep.subr.bf16.mxu0 0
    %2251 = vmatpush1.bf16.msra.mxu0 0
    %2252 = vmatprep.subr.bf16.mxu0 0
    %2253 = vmatpush1.bf16.msra.mxu0 0
    %2254 = vmatprep.subr.bf16.mxu0 0
    %2255 = vmatpush1.bf16.msra.mxu0 0
    %2256 = vmatprep.mubr.bf16.mxu0 0
    %2257 = vmatmul.mubr.bf16.gmra.mrb[0].mxu0 %v2219
    %v2258 = vpop.f32.mrb[0].mxu0
    %v2259 = vadd.f32 0.0, %v2258
    %v2260 = vpop.f32.mrb[0].mxu0
    %v2261 = vpop.f32.mrb[0].mxu0
    %v2262 = vpop.f32.mrb[0].mxu0
    %2263 = vdwg.mxu0
    %v2265 = vsel %vm51, %v2068, 0
    %v2268 = vsel %vm55, %v2076, 0
    %2270 = vmatprep.subr.bf16.mxu0 0
    %2271 = vmatpush1.bf16.msra.mxu0 %v2268
    %2272 = vmatprep.subr.bf16.mxu0 0
    %2273 = vmatpush1.bf16.msra.mxu0 0
    %2274 = vmatprep.subr.bf16.mxu0 0
    %2275 = vmatpush1.bf16.msra.mxu0 0
    %2276 = vmatprep.subr.bf16.mxu0 0
    %2277 = vmatpush1.bf16.msra.mxu0 0
    %2278 = vmatprep.subr.bf16.mxu0 0
    %2279 = vmatpush1.bf16.msra.mxu0 0
    %2280 = vmatprep.subr.bf16.mxu0 0
    %2281 = vmatpush1.bf16.msra.mxu0 0
    %2282 = vmatprep.subr.bf16.mxu0 0
    %2283 = vmatpush1.bf16.msra.mxu0 0
    %2284 = vmatprep.subr.bf16.mxu0 0
    %2285 = vmatpush1.bf16.msra.mxu0 0
    %2286 = vmatprep.subr.bf16.mxu0 0
    %2287 = vmatpush1.bf16.msra.mxu0 0
    %2288 = vmatprep.subr.bf16.mxu0 0
    %2289 = vmatpush1.bf16.msra.mxu0 0
    %2290 = vmatprep.subr.bf16.mxu0 0
    %2291 = vmatpush1.bf16.msra.mxu0 0
    %2292 = vmatprep.subr.bf16.mxu0 0
    %2293 = vmatpush1.bf16.msra.mxu0 0
    %2294 = vmatprep.subr.bf16.mxu0 0
    %2295 = vmatpush1.bf16.msra.mxu0 0
    %2296 = vmatprep.subr.bf16.mxu0 0
    %2297 = vmatpush1.bf16.msra.mxu0 0
    %2298 = vmatprep.subr.bf16.mxu0 0
    %2299 = vmatpush1.bf16.msra.mxu0 0
    %2300 = vmatprep.subr.bf16.mxu0 0
    %2301 = vmatpush1.bf16.msra.mxu0 0
    %2302 = vmatprep.mubr.bf16.mxu0 0
    %2303 = vmatmul.mubr.bf16.gmra.mrb[0].mxu0 %v2265
    %v2304 = vpop.f32.mrb[0].mxu0
    %v2305 = vadd.f32 0.0, %v2304
    %v2306 = vpop.f32.mrb[0].mxu0
    %v2307 = vpop.f32.mrb[0].mxu0
    %v2308 = vpop.f32.mrb[0].mxu0
    %2309 = vdwg.mxu0
    %v2311 = vsel %vm51, %v2069, 0
    %v2314 = vsel %vm55, %v2077, 0
    %2316 = vmatprep.subr.bf16.mxu0 0
    %2317 = vmatpush1.bf16.msra.mxu0 %v2314
    %2318 = vmatprep.subr.bf16.mxu0 0
    %2319 = vmatpush1.bf16.msra.mxu0 0
    %2320 = vmatprep.subr.bf16.mxu0 0
    %2321 = vmatpush1.bf16.msra.mxu0 0
    %2322 = vmatprep.subr.bf16.mxu0 0
    %2323 = vmatpush1.bf16.msra.mxu0 0
    %2324 = vmatprep.subr.bf16.mxu0 0
    %2325 = vmatpush1.bf16.msra.mxu0 0
    %2326 = vmatprep.subr.bf16.mxu0 0
    %2327 = vmatpush1.bf16.msra.mxu0 0
    %2328 = vmatprep.subr.bf16.mxu0 0
    %2329 = vmatpush1.bf16.msra.mxu0 0
    %2330 = vmatprep.subr.bf16.mxu0 0
    %2331 = vmatpush1.bf16.msra.mxu0 0
    %2332 = vmatprep.subr.bf16.mxu0 0
    %2333 = vmatpush1.bf16.msra.mxu0 0
    %2334 = vmatprep.subr.bf16.mxu0 0
    %2335 = vmatpush1.bf16.msra.mxu0 0
    %2336 = vmatprep.subr.bf16.mxu0 0
    %2337 = vmatpush1.bf16.msra.mxu0 0
    %2338 = vmatprep.subr.bf16.mxu0 0
    %2339 = vmatpush1.bf16.msra.mxu0 0
    %2340 = vmatprep.subr.bf16.mxu0 0
    %2341 = vmatpush1.bf16.msra.mxu0 0
    %2342 = vmatprep.subr.bf16.mxu0 0
    %2343 = vmatpush1.bf16.msra.mxu0 0
    %2344 = vmatprep.subr.bf16.mxu0 0
    %2345 = vmatpush1.bf16.msra.mxu0 0
    %2346 = vmatprep.subr.bf16.mxu0 0
    %2347 = vmatpush1.bf16.msra.mxu0 0
    %2348 = vmatprep.mubr.bf16.mxu0 0
    %2349 = vmatmul.mubr.bf16.gmra.mrb[0].mxu0 %v2311
    %v2350 = vpop.f32.mrb[0].mxu0
    %v2351 = vadd.f32 0.0, %v2350
    %v2352 = vpop.f32.mrb[0].mxu0
    %v2353 = vpop.f32.mrb[0].mxu0
    %v2354 = vpop.f32.mrb[0].mxu0
    %2355 = vdwg.mxu0
    %v2357 = vsel %vm51, %v2070, 0
    %v2360 = vsel %vm55, %v2078, 0
    %2362 = vmatprep.subr.bf16.mxu0 0
    %2363 = vmatpush1.bf16.msra.mxu0 %v2360
    %2364 = vmatprep.subr.bf16.mxu0 0
    %2365 = vmatpush1.bf16.msra.mxu0 0
    %2366 = vmatprep.subr.bf16.mxu0 0
    %2367 = vmatpush1.bf16.msra.mxu0 0
    %2368 = vmatprep.subr.bf16.mxu0 0
    %2369 = vmatpush1.bf16.msra.mxu0 0
    %2370 = vmatprep.subr.bf16.mxu0 0
    %2371 = vmatpush1.bf16.msra.mxu0 0
    %2372 = vmatprep.subr.bf16.mxu0 0
    %2373 = vmatpush1.bf16.msra.mxu0 0
    %2374 = vmatprep.subr.bf16.mxu0 0
    %2375 = vmatpush1.bf16.msra.mxu0 0
    %2376 = vmatprep.subr.bf16.mxu0 0
    %2377 = vmatpush1.bf16.msra.mxu0 0
    %2378 = vmatprep.subr.bf16.mxu0 0
    %2379 = vmatpush1.bf16.msra.mxu0 0
    %2380 = vmatprep.subr.bf16.mxu0 0
    %2381 = vmatpush1.bf16.msra.mxu0 0
    %2382 = vmatprep.subr.bf16.mxu0 0
    %2383 = vmatpush1.bf16.msra.mxu0 0
    %2384 = vmatprep.subr.bf16.mxu0 0
    %2385 = vmatpush1.bf16.msra.mxu0 0
    %2386 = vmatprep.subr.bf16.mxu0 0
    %2387 = vmatpush1.bf16.msra.mxu0 0
    %2388 = vmatprep.subr.bf16.mxu0 0
    %2389 = vmatpush1.bf16.msra.mxu0 0
    %2390 = vmatprep.subr.bf16.mxu0 0
    %2391 = vmatpush1.bf16.msra.mxu0 0
    %2392 = vmatprep.subr.bf16.mxu0 0
    %2393 = vmatpush1.bf16.msra.mxu0 0
    %2394 = vmatprep.mubr.bf16.mxu0 0
    %2395 = vmatmul.mubr.bf16.gmra.mrb[0].mxu0 %v2357
    %v2396 = vpop.f32.mrb[0].mxu0
    %v2397 = vadd.f32 0.0, %v2396
    %v2398 = vpop.f32.mrb[0].mxu0
    %v2399 = vpop.f32.mrb[0].mxu0
    %v2400 = vpop.f32.mrb[0].mxu0
    %2401 = vdwg.mxu0
    %v2403 = vsel %vm51, %v2071, 0
    %v2406 = vsel %vm55, %v2079, 0
    %2408 = vmatprep.subr.bf16.mxu0 0
    %2409 = vmatpush1.bf16.msra.mxu0 %v2406
    %2410 = vmatprep.subr.bf16.mxu0 0
    %2411 = vmatpush1.bf16.msra.mxu0 0
    %2412 = vmatprep.subr.bf16.mxu0 0
    %2413 = vmatpush1.bf16.msra.mxu0 0
    %2414 = vmatprep.subr.bf16.mxu0 0
    %2415 = vmatpush1.bf16.msra.mxu0 0
    %2416 = vmatprep.subr.bf16.mxu0 0
    %2417 = vmatpush1.bf16.msra.mxu0 0
    %2418 = vmatprep.subr.bf16.mxu0 0
    %2419 = vmatpush1.bf16.msra.mxu0 0
    %2420 = vmatprep.subr.bf16.mxu0 0
    %2421 = vmatpush1.bf16.msra.mxu0 0
    %2422 = vmatprep.subr.bf16.mxu0 0
    %2423 = vmatpush1.bf16.msra.mxu0 0
    %2424 = vmatprep.subr.bf16.mxu0 0
    %2425 = vmatpush1.bf16.msra.mxu0 0
    %2426 = vmatprep.subr.bf16.mxu0 0
    %2427 = vmatpush1.bf16.msra.mxu0 0
    %2428 = vmatprep.subr.bf16.mxu0 0
    %2429 = vmatpush1.bf16.msra.mxu0 0
    %2430 = vmatprep.subr.bf16.mxu0 0
    %2431 = vmatpush1.bf16.msra.mxu0 0
    %2432 = vmatprep.subr.bf16.mxu0 0
    %2433 = vmatpush1.bf16.msra.mxu0 0
    %2434 = vmatprep.subr.bf16.mxu0 0
    %2435 = vmatpush1.bf16.msra.mxu0 0
    %2436 = vmatprep.subr.bf16.mxu0 0
    %2437 = vmatpush1.bf16.msra.mxu0 0
    %2438 = vmatprep.subr.bf16.mxu0 0
    %2439 = vmatpush1.bf16.msra.mxu0 0
    %2440 = vmatprep.mubr.bf16.mxu0 0
    %2441 = vmatmul.mubr.bf16.gmra.mrb[0].mxu0 %v2403
    %v2442 = vpop.f32.mrb[0].mxu0
    %v2443 = vadd.f32 0.0, %v2442
    %v2444 = vpop.f32.mrb[0].mxu0
    %v2445 = vpop.f32.mrb[0].mxu0
    %v2446 = vpop.f32.mrb[0].mxu0
    %2447 = vdwg.mxu0
    %2450 = vrot.lane.b32.xlu0 %v2213, 16
    %v2451 = vpop.permute.xlu0 %2450
    %2452 = vrot.lane.b32.xlu0 %v2259, 16
    %v2453 = vpop.permute.xlu0 %2452
    %2458 = vrot.lane.b32.xlu0 %v2305, 32
    %v2459 = vpop.permute.xlu0 %2458
    %2460 = vrot.lane.b32.xlu0 %v2351, 32
    %v2461 = vpop.permute.xlu0 %2460
    %2466 = vrot.lane.b32.xlu0 %v2397, 48
    %v2467 = vpop.permute.xlu0 %2466
    %2468 = vrot.lane.b32.xlu0 %v2443, 48
    %v2469 = vpop.permute.xlu0 %2468
    %v2472 = vsel %vm171, %v2121, %v2451
    %v2473 = vsel %vm171, %v2167, %v2453
    %v2474 = vsel %vm1164, %v2472, %v2459
    %v2475 = vsel %vm1164, %v2473, %v2461
    %v2476 = vsel %vm1167, %v2474, %v2467
    %v2477 = vsel %vm1167, %v2475, %v2469
    %v2478 = vpack.c.bf16 %v2477, %v2476
    %s2479 = scalar_lea.vmem %s5, 32
    %v2480 = vld [vmem:[%s2479] sm:$0xf]
    %v2481 = vld [vmem:[%s2479 + $0x4] sm:$0xf]
    %v2482 = vld [vmem:[%s2479 + $0x8] sm:$0xf]
    %v2483 = vld [vmem:[%s2479 + $0xc] sm:$0xf]
    %v2484 = vld [vmem:[%s2479 + $0x10] sm:$0xf]
    %v2485 = vld [vmem:[%s2479 + $0x14] sm:$0xf]
    %v2486 = vld [vmem:[%s2479 + $0x18] sm:$0xf]
    %v2487 = vld [vmem:[%s2479 + $0x1c] sm:$0xf]
    %v2489 = vlaneseq
    %v2490 = vshrl.u32 %v2489, 7
    %v2491 = vsub.s32 0, %v2490
    %v2492 = vrot.slane %v1454, %v2491
    %v2502 = vunpack.c.l.b16 %v2480
    %v2503 = vunpack.c.l.b16 %v2481
    %v2504 = vunpack.c.l.b16 %v2482
    %v2505 = vunpack.c.l.b16 %v2483
    %v2506 = vunpack.c.l.b16 %v2484
    %v2507 = vunpack.c.l.b16 %v2485
    %v2508 = vunpack.c.l.b16 %v2486
    %v2509 = vunpack.c.l.b16 %v2487
    %v2510 = vpack.c.b16 %v2503, %v2502
    %v2511 = vpack.c.b16 %v2505, %v2504
    %v2512 = vpack.c.b16 %v2507, %v2506
    %v2513 = vpack.c.b16 %v2509, %v2508
    %v2519 = vsel %vm1209, %v2478, 0
    %2521 = vmatprep.subr.bf16.mxu0 0
    %2522 = vmatpush1.bf16.msra.mxu0 %v2510
    %2523 = vmatprep.subr.bf16.mxu0 0
    %2524 = vmatpush1.bf16.msra.mxu0 %v2511
    %2525 = vmatprep.subr.bf16.mxu0 0
    %2526 = vmatpush1.bf16.msra.mxu0 %v2512
    %2527 = vmatprep.subr.bf16.mxu0 0
    %2528 = vmatpush1.bf16.msra.mxu0 %v2513
    %2529 = vmatprep.subr.bf16.mxu0 0
    %2530 = vmatpush1.bf16.msra.mxu0 0
    %2531 = vmatprep.subr.bf16.mxu0 0
    %2532 = vmatpush1.bf16.msra.mxu0 0
    %2533 = vmatprep.subr.bf16.mxu0 0
    %2534 = vmatpush1.bf16.msra.mxu0 0
    %2535 = vmatprep.subr.bf16.mxu0 0
    %2536 = vmatpush1.bf16.msra.mxu0 0
    %2537 = vmatprep.subr.bf16.mxu0 0
    %2538 = vmatpush1.bf16.msra.mxu0 0
    %2539 = vmatprep.subr.bf16.mxu0 0
    %2540 = vmatpush1.bf16.msra.mxu0 0
    %2541 = vmatprep.subr.bf16.mxu0 0
    %2542 = vmatpush1.bf16.msra.mxu0 0
    %2543 = vmatprep.subr.bf16.mxu0 0
    %2544 = vmatpush1.bf16.msra.mxu0 0
    %2545 = vmatprep.subr.bf16.mxu0 0
    %2546 = vmatpush1.bf16.msra.mxu0 0
    %2547 = vmatprep.subr.bf16.mxu0 0
    %2548 = vmatpush1.bf16.msra.mxu0 0
    %2549 = vmatprep.subr.bf16.mxu0 0
    %2550 = vmatpush1.bf16.msra.mxu0 0
    %2551 = vmatprep.subr.bf16.mxu0 0
    %2552 = vmatpush1.bf16.msra.mxu0 0
    %2553 = vmatprep.mubr.bf16.mxu0 0
    %2554 = vmatmul.mubr.bf16.gmra.mrb[0].mxu0 %v2519
    %v2555 = vpop.f32.mrb[0].mxu0
    %v2556 = vadd.f32 %v2492, %v2555
    %v2557 = vpop.f32.mrb[0].mxu0
    %v2558 = vpop.f32.mrb[0].mxu0
    %v2559 = vadd.f32 %v2492, %v2558
    %v2560 = vpop.f32.mrb[0].mxu0
    %2561 = vdwg.mxu0
    %v2562 = vadd.f32 %v2556, %v1451
    %v2563 = vadd.f32 %v2559, %v1452
    %v2564 = vsel %vm171, %v2562, 0.0
    %2565 = vadd.xlane.f32.xlu0 %v2564
    %v2566 = vpop.xlane.xlu0 %2565
    %v2567 = vsel %vm171, %v2563, 0.0
    %2568 = vadd.xlane.f32.xlu0 %v2567
    %v2569 = vpop.xlane.xlu0 %2568
    %v2570 = vmul.f32 %v2566, %v1262
    %v2571 = vmul.f32 %v2569, %v1262
    %v2572 = vsub.f32 %v2562, %v2570
    %v2573 = vsub.f32 %v2563, %v2571
    %v2574 = vmul.f32 %v2572, %v2572
    %v2575 = vmul.f32 %v2573, %v2573
    %v2576 = vsel %vm171, %v2574, 0.0
    %2577 = vadd.xlane.f32.xlu0 %v2576
    %v2578 = vpop.xlane.xlu0 %2577
    %v2579 = vsel %vm171, %v2575, 0.0
    %2580 = vadd.xlane.f32.xlu0 %v2579
    %v2581 = vpop.xlane.xlu0 %2580
    %v2582 = vmul.f32 %v2578, %v1262
    %v2583 = vmul.f32 %v2581, %v1262
    %v2584 = vadd.f32 %v2582, 1e-05
    %v2585 = vadd.f32 %v2583, 1e-05
    %v2586 = vrsqrt.pop %v2584
    %v2587 = vrsqrt.pop %v2585
    %v2588 = vmul.f32 %v2572, %v2586
    %v2589 = vmul.f32 %v2573, %v2587
    %2590 = vrot.lane.b32.xlu0 %v2492, 112
    %v2591 = vpop.permute.xlu0 %2590
    %v2593 = vmul.f32 %v2588, %v2591
    %v2594 = vmul.f32 %v2589, %v2591
    %2595 = vrot.lane.b32.xlu0 %v2492, 96
    %v2596 = vpop.permute.xlu0 %2595
    %v2598 = vadd.f32 %v2593, %v2596
    %v2599 = vadd.f32 %v2594, %v2596
    %v2600 = vpack.c.bf16 %v2599, %v2598
    %s2601 = scalar_lea.vmem %s6, 8
    %v2602 = vld [vmem:[%s2601] sm:$0xf]
    %v2603 = vld [vmem:[%s2601 + $0x4] sm:$0xf]
    %v2606 = vunpack.c.l.b16 %v2602
    %v2607 = vunpack.c.l.b16 %v2603
    %v2608 = vpack.c.b16 %v2607, %v2606
    %2610 = vrot.lane.b32.xlu0 %v2492, 80
    %v2611 = vpop.permute.xlu0 %2610
    %v2614 = vsel %vm171, %v2600, 0
    %2616 = vmatprep.subr.bf16.mxu0 0
    %2617 = vmatpush1.bf16.msra.mxu0 %v2608
    %2618 = vmatprep.subr.bf16.mxu0 0
    %2619 = vmatpush1.bf16.msra.mxu0 0
    %2620 = vmatprep.subr.bf16.mxu0 0
    %2621 = vmatpush1.bf16.msra.mxu0 0
    %2622 = vmatprep.subr.bf16.mxu0 0
    %2623 = vmatpush1.bf16.msra.mxu0 0
    %2624 = vmatprep.subr.bf16.mxu0 0
    %2625 = vmatpush1.bf16.msra.mxu0 0
    %2626 = vmatprep.subr.bf16.mxu0 0
    %2627 = vmatpush1.bf16.msra.mxu0 0
    %2628 = vmatprep.subr.bf16.mxu0 0
    %2629 = vmatpush1.bf16.msra.mxu0 0
    %2630 = vmatprep.subr.bf16.mxu0 0
    %2631 = vmatpush1.bf16.msra.mxu0 0
    %2632 = vmatprep.subr.bf16.mxu0 0
    %2633 = vmatpush1.bf16.msra.mxu0 0
    %2634 = vmatprep.subr.bf16.mxu0 0
    %2635 = vmatpush1.bf16.msra.mxu0 0
    %2636 = vmatprep.subr.bf16.mxu0 0
    %2637 = vmatpush1.bf16.msra.mxu0 0
    %2638 = vmatprep.subr.bf16.mxu0 0
    %2639 = vmatpush1.bf16.msra.mxu0 0
    %2640 = vmatprep.subr.bf16.mxu0 0
    %2641 = vmatpush1.bf16.msra.mxu0 0
    %2642 = vmatprep.subr.bf16.mxu0 0
    %2643 = vmatpush1.bf16.msra.mxu0 0
    %2644 = vmatprep.subr.bf16.mxu0 0
    %2645 = vmatpush1.bf16.msra.mxu0 0
    %2646 = vmatprep.subr.bf16.mxu0 0
    %2647 = vmatpush1.bf16.msra.mxu0 0
    %2648 = vmatprep.mubr.bf16.mxu0 0
    %2649 = vmatmul.mubr.bf16.gmra.mrb[0].mxu0 %v2614
    %v2650 = vpop.f32.mrb[0].mxu0
    %v2651 = vadd.f32 %v2611, %v2650
    %v2652 = vpop.f32.mrb[0].mxu0
    %v2653 = vpop.f32.mrb[0].mxu0
    %v2654 = vadd.f32 %v2611, %v2653
    %v2655 = vpop.f32.mrb[0].mxu0
    %2656 = vdwg.mxu0
    %v2657 = vmax.f32 %v2651, 0.0
    %v2658 = vmax.f32 %v2654, 0.0
    %v2659 = vpack.c.bf16 %v2658, %v2657
    %s2660 = scalar_lea.vmem %s7, 16
    %v2661 = vld [vmem:[%s2660] sm:$0xf]
    %v2662 = vld [vmem:[%s2660 + $0x4] sm:$0xf]
    %v2663 = vld [vmem:[%s2660 + $0x8] sm:$0xf]
    %v2664 = vld [vmem:[%s2660 + $0xc] sm:$0xf]
    %v2669 = vunpack.c.l.b16 %v2661
    %v2670 = vunpack.c.l.b16 %v2662
    %v2671 = vunpack.c.l.b16 %v2663
    %v2672 = vunpack.c.l.b16 %v2664
    %v2673 = vpack.c.b16 %v2670, %v2669
    %v2674 = vpack.c.b16 %v2672, %v2671
    %2677 = vrot.lane.b32.xlu0 %v2492, 48
    %v2678 = vpop.permute.xlu0 %2677
    %v2681 = vsel %vm1164, %v2659, 0
    %2683 = vmatprep.subr.bf16.mxu0 0
    %2684 = vmatpush1.bf16.msra.mxu0 %v2673
    %2685 = vmatprep.subr.bf16.mxu0 0
    %2686 = vmatpush1.bf16.msra.mxu0 %v2674
    %2687 = vmatprep.subr.bf16.mxu0 0
    %2688 = vmatpush1.bf16.msra.mxu0 0
    %2689 = vmatprep.subr.bf16.mxu0 0
    %2690 = vmatpush1.bf16.msra.mxu0 0
    %2691 = vmatprep.subr.bf16.mxu0 0
    %2692 = vmatpush1.bf16.msra.mxu0 0
    %2693 = vmatprep.subr.bf16.mxu0 0
    %2694 = vmatpush1.bf16.msra.mxu0 0
    %2695 = vmatprep.subr.bf16.mxu0 0
    %2696 = vmatpush1.bf16.msra.mxu0 0
    %2697 = vmatprep.subr.bf16.mxu0 0
    %2698 = vmatpush1.bf16.msra.mxu0 0
    %2699 = vmatprep.subr.bf16.mxu0 0
    %2700 = vmatpush1.bf16.msra.mxu0 0
    %2701 = vmatprep.subr.bf16.mxu0 0
    %2702 = vmatpush1.bf16.msra.mxu0 0
    %2703 = vmatprep.subr.bf16.mxu0 0
    %2704 = vmatpush1.bf16.msra.mxu0 0
    %2705 = vmatprep.subr.bf16.mxu0 0
    %2706 = vmatpush1.bf16.msra.mxu0 0
    %2707 = vmatprep.subr.bf16.mxu0 0
    %2708 = vmatpush1.bf16.msra.mxu0 0
    %2709 = vmatprep.subr.bf16.mxu0 0
    %2710 = vmatpush1.bf16.msra.mxu0 0
    %2711 = vmatprep.subr.bf16.mxu0 0
    %2712 = vmatpush1.bf16.msra.mxu0 0
    %2713 = vmatprep.subr.bf16.mxu0 0
    %2714 = vmatpush1.bf16.msra.mxu0 0
    %2715 = vmatprep.mubr.bf16.mxu0 0
    %2716 = vmatmul.mubr.bf16.gmra.mrb[0].mxu0 %v2681
    %v2717 = vpop.f32.mrb[0].mxu0
    %v2718 = vadd.f32 %v2678, %v2717
    %v2719 = vpop.f32.mrb[0].mxu0
    %v2720 = vpop.f32.mrb[0].mxu0
    %v2721 = vadd.f32 %v2678, %v2720
    %v2722 = vpop.f32.mrb[0].mxu0
    %2723 = vdwg.mxu0
    %v2724 = vadd.f32 %v2718, %v2598
    %v2725 = vadd.f32 %v2721, %v2599
    %v2726 = vsel %vm171, %v2724, 0.0
    %2727 = vadd.xlane.f32.xlu0 %v2726
    %v2728 = vpop.xlane.xlu0 %2727
    %v2729 = vsel %vm171, %v2725, 0.0
    %2730 = vadd.xlane.f32.xlu0 %v2729
    %v2731 = vpop.xlane.xlu0 %2730
    %v2732 = vmul.f32 %v2728, %v1262
    %v2733 = vmul.f32 %v2731, %v1262
    %v2734 = vsub.f32 %v2724, %v2732
    %v2735 = vsub.f32 %v2725, %v2733
    %v2736 = vmul.f32 %v2734, %v2734
    %v2737 = vmul.f32 %v2735, %v2735
    %v2738 = vsel %vm171, %v2736, 0.0
    %2739 = vadd.xlane.f32.xlu0 %v2738
    %v2740 = vpop.xlane.xlu0 %2739
    %v2741 = vsel %vm171, %v2737, 0.0
    %2742 = vadd.xlane.f32.xlu0 %v2741
    %v2743 = vpop.xlane.xlu0 %2742
    %v2744 = vmul.f32 %v2740, %v1262
    %v2745 = vmul.f32 %v2743, %v1262
    %v2746 = vadd.f32 %v2744, 1e-05
    %v2747 = vadd.f32 %v2745, 1e-05
    %v2748 = vrsqrt.pop %v2746
    %v2749 = vrsqrt.pop %v2747
    %v2750 = vmul.f32 %v2734, %v2748
    %v2751 = vmul.f32 %v2735, %v2749
    %2752 = vrot.lane.b32.xlu0 %v2492, 32
    %v2753 = vpop.permute.xlu0 %2752
    %v2755 = vmul.f32 %v2750, %v2753
    %v2756 = vmul.f32 %v2751, %v2753
    %2757 = vrot.lane.b32.xlu0 %v2492, 16
    %v2758 = vpop.permute.xlu0 %2757
    %v2760 = vadd.f32 %v2755, %v2758
    %v2761 = vadd.f32 %v2756, %v2758
    %v2764 = vrot.slane %v2761, 7
    %vm2765 = vcmask 1041409
    %v2766 = vsel %vm2765, %v2764, %v2760
    %v2768 = vrot.slane %v2760, 1
    %v2769 = vsel %vm2765, %v2761, %v2768
    %2770 = vrot.lane.b32.xlu0 %v2769, 16
    %v2771 = vpop.permute.xlu0 %2770
    %v2773 = vrot.slane %v2760, 2
    %v2774 = vrot.slane %v2761, 1
    %v2775 = vsel %vm2765, %v2774, %v2773
    %2776 = vrot.lane.b32.xlu0 %v2775, 32
    %v2777 = vpop.permute.xlu0 %2776
    %v2779 = vrot.slane %v2760, 3
    %v2780 = vrot.slane %v2761, 2
    %v2781 = vsel %vm2765, %v2780, %v2779
    %2782 = vrot.lane.b32.xlu0 %v2781, 48
    %v2783 = vpop.permute.xlu0 %2782
    %v2785 = vrot.slane %v2760, 4
    %v2786 = vrot.slane %v2761, 3
    %v2787 = vsel %vm2765, %v2786, %v2785
    %2788 = vrot.lane.b32.xlu0 %v2787, 64
    %v2789 = vpop.permute.xlu0 %2788
    %v2791 = vrot.slane %v2760, 5
    %v2792 = vrot.slane %v2761, 4
    %v2793 = vsel %vm2765, %v2792, %v2791
    %2794 = vrot.lane.b32.xlu0 %v2793, 80
    %v2795 = vpop.permute.xlu0 %2794
    %v2797 = vrot.slane %v2760, 6
    %v2798 = vrot.slane %v2761, 5
    %v2799 = vsel %vm2765, %v2798, %v2797
    %2800 = vrot.lane.b32.xlu0 %v2799, 96
    %v2801 = vpop.permute.xlu0 %2800
    %v2803 = vrot.slane %v2760, 7
    %v2804 = vrot.slane %v2761, 6
    %v2805 = vsel %vm2765, %v2804, %v2803
    %2806 = vrot.lane.b32.xlu0 %v2805, 112
    %v2807 = vpop.permute.xlu0 %2806
    %v2809 = vsel %vm171, %v2766, %v2771
    %v2810 = vsel %vm1164, %v2809, %v2777
    %v2811 = vsel %vm1167, %v2810, %v2783
    %v2812 = vsel %vm1209, %v2811, %v2789
    %vm2813 = vcmask 654336
    %v2814 = vsel %vm2813, %v2812, %v2795
    %vm2815 = vcmask 785408
    %v2816 = vsel %vm2815, %v2814, %v2801
    %vm2817 = vcmask 916480
    %v2818 = vsel %vm2817, %v2816, %v2807
    %v2819 = vpack.c.bf16 %v2818, %v2818
    %v2820 = vld [vmem:[%s9] sm:$0xf]
    %v2821 = vld [vmem:[%s9 + $0x4] sm:$0xf]
    %v2822 = vld [vmem:[%s9 + $0x8] sm:$0xf]
    %v2823 = vld [vmem:[%s9 + $0xc] sm:$0xf]
    %v2824 = vld [vmem:[%s9 + $0x10] sm:$0xf]
    %v2825 = vld [vmem:[%s9 + $0x14] sm:$0xf]
    %v2826 = vld [vmem:[%s9 + $0x18] sm:$0xf]
    %v2827 = vld [vmem:[%s9 + $0x1c] sm:$0xf]
    %v2828 = vld [vmem:[%s9 + $0x20] sm:$0xf]
    %v2829 = vld [vmem:[%s9 + $0x24] sm:$0xf]
    %v2830 = vld [vmem:[%s9 + $0x28] sm:$0xf]
    %v2831 = vld [vmem:[%s9 + $0x2c] sm:$0xf]
    %v2832 = vld [vmem:[%s9 + $0x30] sm:$0xf]
    %v2833 = vld [vmem:[%s9 + $0x34] sm:$0xf]
    %v2834 = vld [vmem:[%s9 + $0x38] sm:$0xf]
    %v2835 = vld [vmem:[%s9 + $0x3c] sm:$0xf]
    %v2852 = vunpack.c.l.b16 %v2820
    %v2853 = vunpack.c.l.b16 %v2821
    %v2854 = vunpack.c.l.b16 %v2822
    %v2855 = vunpack.c.l.b16 %v2823
    %v2856 = vunpack.c.l.b16 %v2824
    %v2857 = vunpack.c.l.b16 %v2825
    %v2858 = vunpack.c.l.b16 %v2826
    %v2859 = vunpack.c.l.b16 %v2827
    %v2860 = vunpack.c.l.b16 %v2828
    %v2861 = vunpack.c.l.b16 %v2829
    %v2862 = vunpack.c.l.b16 %v2830
    %v2863 = vunpack.c.l.b16 %v2831
    %v2864 = vunpack.c.l.b16 %v2832
    %v2865 = vunpack.c.l.b16 %v2833
    %v2866 = vunpack.c.l.b16 %v2834
    %v2867 = vunpack.c.l.b16 %v2835
    %v2868 = vpack.c.b16 %v2853, %v2852
    %v2869 = vpack.c.b16 %v2855, %v2854
    %v2870 = vpack.c.b16 %v2857, %v2856
    %v2871 = vpack.c.b16 %v2859, %v2858
    %v2872 = vpack.c.b16 %v2861, %v2860
    %v2873 = vpack.c.b16 %v2863, %v2862
    %v2874 = vpack.c.b16 %v2865, %v2864
    %v2875 = vpack.c.b16 %v2867, %v2866
    %2884 = vmatprep.subr.bf16.mxu0 0
    %2885 = vmatpush1.bf16.msra.mxu0 %v2868
    %2886 = vmatprep.subr.bf16.mxu0 0
    %2887 = vmatpush1.bf16.msra.mxu0 %v2869
    %2888 = vmatprep.subr.bf16.mxu0 0
    %2889 = vmatpush1.bf16.msra.mxu0 %v2870
    %2890 = vmatprep.subr.bf16.mxu0 0
    %2891 = vmatpush1.bf16.msra.mxu0 %v2871
    %2892 = vmatprep.subr.bf16.mxu0 0
    %2893 = vmatpush1.bf16.msra.mxu0 %v2872
    %2894 = vmatprep.subr.bf16.mxu0 0
    %2895 = vmatpush1.bf16.msra.mxu0 %v2873
    %2896 = vmatprep.subr.bf16.mxu0 0
    %2897 = vmatpush1.bf16.msra.mxu0 %v2874
    %2898 = vmatprep.subr.bf16.mxu0 0
    %2899 = vmatpush1.bf16.msra.mxu0 %v2875
    %2900 = vmatprep.subr.bf16.mxu0 0
    %2901 = vmatpush1.bf16.msra.mxu0 0
    %2902 = vmatprep.subr.bf16.mxu0 0
    %2903 = vmatpush1.bf16.msra.mxu0 0
    %2904 = vmatprep.subr.bf16.mxu0 0
    %2905 = vmatpush1.bf16.msra.mxu0 0
    %2906 = vmatprep.subr.bf16.mxu0 0
    %2907 = vmatpush1.bf16.msra.mxu0 0
    %2908 = vmatprep.subr.bf16.mxu0 0
    %2909 = vmatpush1.bf16.msra.mxu0 0
    %2910 = vmatprep.subr.bf16.mxu0 0
    %2911 = vmatpush1.bf16.msra.mxu0 0
    %2912 = vmatprep.subr.bf16.mxu0 0
    %2913 = vmatpush1.bf16.msra.mxu0 0
    %2914 = vmatprep.subr.bf16.mxu0 0
    %2915 = vmatpush1.bf16.msra.mxu0 0
    %2916 = vmatprep.mubr.bf16.mxu0 0
    %2917 = vmatmul.mubr.bf16.gmra.mrb[0].mxu0 %v2819
    %v2918 = vpop.f32.mrb[0].mxu0
    %v2919 = vadd.f32 0.0, %v2918
    %v2920 = vpop.f32.mrb[0].mxu0
    %v2921 = vpop.f32.mrb[0].mxu0
    %v2922 = vpop.f32.mrb[0].mxu0
    %2923 = vdwg.mxu0
    %v2924 = vmax.f32 %v2919, 0.0
    %v2925 = vpack.c.bf16 %v2924, %v2924
    %v2926 = vld [vmem:[%s10] sm:$0xf]
    %v2927 = vld [vmem:[%s10 + $0x4] sm:$0xf]
    %v2928 = vld [vmem:[%s10 + $0x8] sm:$0xf]
    %v2929 = vld [vmem:[%s10 + $0xc] sm:$0xf]
    %v2930 = vld [vmem:[%s11] sm:$0x1]
    %v2932 = vlaneseq
    %v2933 = vshrl.u32 %v2932, 7
    %v2934 = vsub.s32 0, %v2933
    %v2935 = vrot.slane %v2930, %v2934
    %v2941 = vunpack.c.l.b16 %v2926
    %v2942 = vunpack.c.l.b16 %v2927
    %v2943 = vunpack.c.l.b16 %v2928
    %v2944 = vunpack.c.l.b16 %v2929
    %v2945 = vpack.c.b16 %v2942, %v2941
    %v2946 = vpack.c.b16 %v2944, %v2943
    %v2950 = vsel %vm1164, %v2925, 0
    %2952 = vmatprep.subr.bf16.mxu0 0
    %2953 = vmatpush1.bf16.msra.mxu0 %v2945
    %2954 = vmatprep.subr.bf16.mxu0 0
    %2955 = vmatpush1.bf16.msra.mxu0 %v2946
    %2956 = vmatprep.subr.bf16.mxu0 0
    %2957 = vmatpush1.bf16.msra.mxu0 0
    %2958 = vmatprep.subr.bf16.mxu0 0
    %2959 = vmatpush1.bf16.msra.mxu0 0
    %2960 = vmatprep.subr.bf16.mxu0 0
    %2961 = vmatpush1.bf16.msra.mxu0 0
    %2962 = vmatprep.subr.bf16.mxu0 0
    %2963 = vmatpush1.bf16.msra.mxu0 0
    %2964 = vmatprep.subr.bf16.mxu0 0
    %2965 = vmatpush1.bf16.msra.mxu0 0
    %2966 = vmatprep.subr.bf16.mxu0 0
    %2967 = vmatpush1.bf16.msra.mxu0 0
    %2968 = vmatprep.subr.bf16.mxu0 0
    %2969 = vmatpush1.bf16.msra.mxu0 0
    %2970 = vmatprep.subr.bf16.mxu0 0
    %2971 = vmatpush1.bf16.msra.mxu0 0
    %2972 = vmatprep.subr.bf16.mxu0 0
    %2973 = vmatpush1.bf16.msra.mxu0 0
    %2974 = vmatprep.subr.bf16.mxu0 0
    %2975 = vmatpush1.bf16.msra.mxu0 0
    %2976 = vmatprep.subr.bf16.mxu0 0
    %2977 = vmatpush1.bf16.msra.mxu0 0
    %2978 = vmatprep.subr.bf16.mxu0 0
    %2979 = vmatpush1.bf16.msra.mxu0 0
    %2980 = vmatprep.subr.bf16.mxu0 0
    %2981 = vmatpush1.bf16.msra.mxu0 0
    %2982 = vmatprep.subr.bf16.mxu0 0
    %2983 = vmatpush1.bf16.msra.mxu0 0
    %2984 = vmatprep.mubr.bf16.mxu0 0
    %2985 = vmatmul.mubr.bf16.gmra.mrb[0].mxu0 %v2950
    %v2986 = vpop.f32.mrb[0].mxu0
    %v2987 = vadd.f32 %v2935, %v2986
    %v2988 = vpop.f32.mrb[0].mxu0
    %v2989 = vpop.f32.mrb[0].mxu0
    %v2990 = vpop.f32.mrb[0].mxu0
    %2991 = vdwg.mxu0
    %vm2992 = vcmask 9216
    %2993 = vst.msk [vmem:[#allocation2] sm:$0x3] %vm2992, %v2987
    // Predicated region
    $region50: #{tpu_custom_call.1} parent=1 // pred_check
      _
    $region51: #{tpu_custom_call.1} parent=1 // pred_check_branch
      %2995 = sbr.rel (0) target = $region53
    $region52: #{tpu_custom_call.1} parent=1 // pred_region
      %s2997 = ssub.s32 32, 32
      %2998 = vsyncadd [#allocation3], %s2997
      %s3000 = sshll.u32 [#allocation2], 4
      %s3001 = int_to_ptr.vmem [resolvable:$true] %s3000
      %3003 = dma.vmem_to_hbm [thread:$0]  %s3001, 32, %s12, [#allocation3]
    $region53: #{tpu_custom_call.1} parent=1 // pred_fallthru
      _
    // Predicated region
    $region54: #{tpu_custom_call.1} parent=1 // pred_check
      _
    $region55: #{tpu_custom_call.1} parent=1 // pred_check_branch
      %3005 = sbr.rel (0) target = $region57
    $region56: #{tpu_custom_call.1} parent=1 // pred_region
      %3006 = dma.done [#allocation3], 32
    $region57: #{tpu_custom_call.1} parent=1 // pred_fallthru
      _
    %3007 = vsyncpa [#allocation3], 1

</llo_original>
